<compile_context>
chip_gen: v5e
topology: v5e:2x2
jax: 0.10.0
libtpu: 0.0.40
codegen_flags: <defaults>
</compile_context>

<pallas_src>
import math
from functools import partial

import jax
import jax.numpy as jnp
from jax import lax
from jax.experimental import pallas as pl
from jax.experimental.pallas import tpu as pltpu


# ----------------------------------------------------------------------------
# helpers
# ----------------------------------------------------------------------------
def _round_up(x, m):
    return ((x + m - 1) // m) * m


def _pick_seq_tile(L, tmax):
    """Largest sequence tile that divides L (full L if it fits, else mult of 8)."""
    if L <= tmax:
        return L, False
    t = (tmax // 8) * 8
    while t >= 8:
        if L % t == 0:
            return t, False
        t -= 8
    return 0, True


def _pick_conv_rows(H, W, C, budget_bytes=4 * 1024 * 1024):
    """Row-tile for the depthwise conv: ~6 live f32 copies of (rows, W, C)."""
    rows = max(1, budget_bytes // (W * C * 4 * 6))
    rows = min(rows, H)
    while H % rows:
        rows -= 1
    return int(rows)


# ----------------------------------------------------------------------------
# Tiled matmul (+ optional bias) kernel
# ----------------------------------------------------------------------------
def _matmul_kernel(x_ref, w_ref, o_ref, acc_ref):
    k = pl.program_id(2)

    @pl.when(k == 0)
    def _():
        acc_ref[...] = jnp.zeros_like(acc_ref)

    acc_ref[...] += jnp.dot(x_ref[...], w_ref[...],
                            preferred_element_type=jnp.float32)

    @pl.when(k == pl.num_programs(2) - 1)
    def _():
        o_ref[...] = acc_ref[...].astype(o_ref.dtype)


def _matmul_bias_kernel(x_ref, w_ref, b_ref, o_ref, acc_ref):
    k = pl.program_id(2)

    @pl.when(k == 0)
    def _():
        acc_ref[...] = jnp.zeros_like(acc_ref)

    acc_ref[...] += jnp.dot(x_ref[...], w_ref[...],
                            preferred_element_type=jnp.float32)

    @pl.when(k == pl.num_programs(2) - 1)
    def _():
        o_ref[...] = (acc_ref[...] + b_ref[...]).astype(o_ref.dtype)


def pallas_linear(x, w, b=None, *, tm=512, tn=512, tk=512,
                  out_dtype=jnp.bfloat16):
    """y = x @ w (+ b).  x: (..., K) ; w: (K, N) ; b: (N,) or None."""
    *lead, K = x.shape
    N = w.shape[1]
    M = math.prod(lead) if lead else 1

    x2 = x.reshape(M, K).astype(jnp.bfloat16)
    w2 = w.astype(jnp.bfloat16)

    # M: multiple-of-8 tiles, padded rows are sliced off again.
    tm_eff = min(tm, _round_up(M, 8))
    Mp = _round_up(M, tm_eff)
    # K: full-dimension block when it fits -> no 128 alignment, no pad copy.
    if K <= tk:
        tk_eff, Kp = K, K
    else:
        tk_eff = tk
        Kp = _round_up(K, tk_eff)
    # N: single lane-dense block for modest N (activation slab streamed once).
    if N <= tn:
        tn_eff, Np = N, N
    else:
        tn_eff = tn
        Np = _round_up(N, tn_eff)

    if Mp != M or Kp != K:
        x2 = jnp.pad(x2, ((0, Mp - M), (0, Kp - K)))
    if Kp != K or Np != N:
        w2 = jnp.pad(w2, ((0, Kp - K), (0, Np - N)))

    grid = (Mp // tm_eff, Np // tn_eff, Kp // tk_eff)
    x_spec = pl.BlockSpec((tm_eff, tk_eff), lambda i, j, k: (i, k))
    w_spec = pl.BlockSpec((tk_eff, tn_eff), lambda i, j, k: (k, j))
    o_spec = pl.BlockSpec((tm_eff, tn_eff), lambda i, j, k: (i, j))
    cparams = pltpu.CompilerParams(
        dimension_semantics=("parallel", "parallel", "arbitrary"))
    scratch = [pltpu.VMEM((tm_eff, tn_eff), jnp.float32)]

    if b is None:
        out = pl.pallas_call(
            _matmul_kernel,
            out_shape=jax.ShapeDtypeStruct((Mp, Np), out_dtype),
            grid=grid,
            in_specs=[x_spec, w_spec],
            out_specs=o_spec,
            scratch_shapes=scratch,
            compiler_params=cparams,
        )(x2, w2)
    else:
        bp = b.astype(jnp.float32).reshape(1, N)
        if Np != N:
            bp = jnp.pad(bp, ((0, 0), (0, Np - N)))
        out = pl.pallas_call(
            _matmul_bias_kernel,
            out_shape=jax.ShapeDtypeStruct((Mp, Np), out_dtype),
            grid=grid,
            in_specs=[x_spec, w_spec,
                      pl.BlockSpec((1, tn_eff), lambda i, j, k: (0, j))],
            out_specs=o_spec,
            scratch_shapes=scratch,
            compiler_params=cparams,
        )(x2, w2, bp)

    if (Mp, Np) != (M, N):
        out = out[:M, :N]
    return out.reshape(tuple(lead) + (N,))


# ----------------------------------------------------------------------------
# Depthwise 3x3 conv (stride 1, zero padding 1), NHWC, channels on lanes.
# Row-tiled grid (B, H/th); halo rows supplied as two tiny side inputs;
# horizontal taps via pltpu.roll (XLU) + column masks (no unaligned slices).
# ----------------------------------------------------------------------------
def _dwconv3x3_kernel(x_ref, top_ref, bot_ref, w_ref, b_ref, o_ref,
                      *, W, apply_silu):
    th = o_ref.shape[0]
    cur = x_ref[...]                                    # (th, W, C) bf16
    top = top_ref[...]                                  # (1, W, C)
    bot = bot_ref[...]                                  # (1, W, C)
    if th > 1:
        prev = jnp.concatenate([top, cur[: th - 1]], axis=0)
        nxt = jnp.concatenate([cur[1:], bot], axis=0)
    else:
        prev, nxt = top, bot

    wf = w_ref[...].astype(jnp.float32)                 # (9, C)
    col = lax.broadcasted_iota(jnp.int32, o_ref.shape, 1)
    lmask = col > 0                                      # input col c-1 exists
    rmask = col < (W - 1)                                # input col c+1 exists

    acc = jnp.zeros(o_ref.shape, jnp.float32)
    for ky, rows in enumerate((prev, cur, nxt)):         # ky: 0,1,2 (row -1,0,+1)
        r = rows.astype(jnp.float32)
        # center tap (kx = 1)
        acc = acc + r * wf[3 * ky + 1: 3 * ky + 2, :]
        # left neighbour (kx = 0 -> input col c-1): roll towards higher cols.
        left = jnp.where(lmask, pltpu.roll(r, shift=1, axis=1), 0.0)
        acc = acc + left * wf[3 * ky: 3 * ky + 1, :]
        # right neighbour (kx = 2 -> input col c+1).
        right = jnp.where(rmask, pltpu.roll(r, shift=W - 1, axis=1), 0.0)
        acc = acc + right * wf[3 * ky + 2: 3 * ky + 3, :]

    acc = acc + b_ref[...].astype(jnp.float32)
    if apply_silu:
        acc = acc * jax.nn.sigmoid(acc)
    o_ref[...] = acc.astype(o_ref.dtype)


def pallas_dwconv3x3(x, w, b, apply_silu=True):
    """x: (B, H, W, C) NHWC ; w: (9, C) [ky*3+kx, ch] ; b: (C,).  bf16 NHWC out."""
    B, H, W, C = x.shape
    xb = x.astype(jnp.bfloat16)
    th = _pick_conv_rows(H, W, C)
    nH = H // th

    zero_row = jnp.zeros((B, 1, W, C), jnp.bfloat16)
    if nH > 1:
        # halo row above block i is image row i*th-1 (zeros for i=0);
        # halo row below block i is image row (i+1)*th (zeros for i=nH-1).
        top = jnp.concatenate([zero_row, xb[:, th - 1::th][:, :nH - 1]], axis=1)
        bot = jnp.concatenate([xb[:, th::th][:, :nH - 1], zero_row], axis=1)
    else:
        top = zero_row
        bot = zero_row

    return pl.pallas_call(
        partial(_dwconv3x3_kernel, W=W, apply_silu=apply_silu),
        out_shape=jax.ShapeDtypeStruct((B, H, W, C), jnp.bfloat16),
        grid=(B, nH),
        in_specs=[
            pl.BlockSpec((None, th, W, C), lambda b_, i: (b_, i, 0, 0)),
            pl.BlockSpec((None, 1, W, C), lambda b_, i: (b_, i, 0, 0)),
            pl.BlockSpec((None, 1, W, C), lambda b_, i: (b_, i, 0, 0)),
            pl.BlockSpec((9, C), lambda b_, i: (0, 0)),
            pl.BlockSpec((1, C), lambda b_, i: (0, 0)),
        ],
        out_specs=pl.BlockSpec((None, th, W, C), lambda b_, i: (b_, i, 0, 0)),
        compiler_params=pltpu.CompilerParams(
            dimension_semantics=("parallel", "parallel")),
    )(xb, top, bot, w.astype(jnp.float32), b.reshape(1, C).astype(jnp.float32))


# ----------------------------------------------------------------------------
# Fused non-causal linear attention (Mamba2 duality, ngroups == 1):
#   one pallas_call, grid (B, 2 phases, L tiles).
#   phase 0: KV[s, j] += sum_l B[l,s] * (V[l,j] * dA[l, head(j)])  (f32 scratch)
#   phase 1: y = C @ KV + V*D  -> LayerNorm -> *gamma+beta -> *z   (epilogue)
# ----------------------------------------------------------------------------
def _fused_attn_kernel(bm_ref, cm_ref, v_ref, dt_ref, z_ref, emat_ref,
                       d_ref, g_ref, be_ref, o_ref, kv_ref, *, eps):
    ph = pl.program_id(1)
    li = pl.program_id(2)

    @pl.when(jnp.logical_and(ph == 0, li == 0))
    def _():
        kv_ref[...] = jnp.zeros_like(kv_ref)

    @pl.when(ph == 0)
    def _():
        # expand per-head dA to d_inner lanes with a tiny (nh -> Di) matmul
        da = jnp.dot(dt_ref[...], emat_ref[...],
                     preferred_element_type=jnp.float32)         # (tl, Di) f32
        vs = v_ref[...].astype(jnp.float32) * da                 # V * dA (f32)
        kv_ref[...] += lax.dot_general(                          # B^T @ (V*dA)
            bm_ref[...].astype(jnp.float32), vs,
            (((0,), (0,)), ((), ())),
            preferred_element_type=jnp.float32)                  # (N, Di)

    @pl.when(ph == 1)
    def _():
        y = jnp.dot(cm_ref[...].astype(jnp.float32), kv_ref[...],
                    preferred_element_type=jnp.float32)          # C @ KV
        v = v_ref[...].astype(jnp.float32)
        y = y + v * d_ref[...]                                   # skip: V * D
        # LayerNorm over d_inner (f32 statistics)
        mu = jnp.mean(y, axis=-1, keepdims=True)
        yc = y - mu
        var = jnp.mean(yc * yc, axis=-1, keepdims=True)
        y = yc * lax.rsqrt(var + eps)
        y = y * g_ref[...] + be_ref[...]
        # z-gate (reference: y = y * z, no activation on z)
        y = y * z_ref[...].astype(jnp.float32)
        o_ref[...] = y.astype(o_ref.dtype)


def mamba_attn_norm_gate(x, dA_h, Bm, Cm, D_row, gamma_row, beta_row, z, emat,
                         *, eps=1e-5, tl_max=512):
    """x, z: (B, L, d_inner) ; dA_h: (B, L, nheads) f32 ; Bm, Cm: (B, L, N)."""
    Bb, L, Di = x.shape
    N = Bm.shape[-1]
    nh = dA_h.shape[-1]

    tl, need_pad = _pick_seq_tile(L, tl_max)
    if need_pad:
        tl = (tl_max // 8) * 8
        Lp = _round_up(L, tl)
    else:
        Lp = L
    nl = Lp // tl

    def prep(t, dtype):
        t = t.astype(dtype)
        if Lp != L:
            t = jnp.pad(t, ((0, 0), (0, Lp - L), (0, 0)))
        return t

    bmb = prep(Bm, jnp.bfloat16)
    cmb = prep(Cm, jnp.bfloat16)
    xb = prep(x, jnp.bfloat16)
    dab = prep(dA_h, jnp.float32)
    zb = prep(z, jnp.bfloat16)

    out = pl.pallas_call(
        partial(_fused_attn_kernel, eps=eps),
        out_shape=jax.ShapeDtypeStruct((Bb, Lp, Di), jnp.bfloat16),
        grid=(Bb, 2, nl),
        in_specs=[
            # B (K): streamed in phase 0, parked on its last tile in phase 1
            pl.BlockSpec((None, tl, N),
                         lambda b, p_, l: (b, l * (1 - p_) + (nl - 1) * p_, 0)),
            # C (Q): parked on tile 0 in phase 0, streamed in phase 1
            pl.BlockSpec((None, tl, N), lambda b, p_, l: (b, l * p_, 0)),
            # V: needed in both phases
            pl.BlockSpec((None, tl, Di), lambda b, p_, l: (b, l, 0)),
            # per-head dA (f32): phase 0 only
            pl.BlockSpec((None, tl, nh),
                         lambda b, p_, l: (b, l * (1 - p_) + (nl - 1) * p_, 0)),
            # z-gate: phase 1 only
            pl.BlockSpec((None, tl, Di), lambda b, p_, l: (b, l * p_, 0)),
            # head -> d_inner expansion matrix, D, gamma, beta (resident)
            pl.BlockSpec((nh, Di), lambda b, p_, l: (0, 0)),
            pl.BlockSpec((1, Di), lambda b, p_, l: (0, 0)),
            pl.BlockSpec((1, Di), lambda b, p_, l: (0, 0)),
            pl.BlockSpec((1, Di), lambda b, p_, l: (0, 0)),
        ],
        out_specs=pl.BlockSpec((None, tl, Di), lambda b, p_, l: (b, l * p_, 0)),
        scratch_shapes=[pltpu.VMEM((N, Di), jnp.float32)],
        compiler_params=pltpu.CompilerParams(
            dimension_semantics=("parallel", "arbitrary", "arbitrary")),
    )(bmb, cmb, xb, dab, zb,
      emat.astype(jnp.float32),
      D_row.astype(jnp.float32),
      gamma_row.astype(jnp.float32),
      beta_row.astype(jnp.float32))

    return out[:, :L, :] if Lp != L else out


# ----------------------------------------------------------------------------
# Mamba2 forward (stereo variant from vssd.py)
# ----------------------------------------------------------------------------
def mamba2_forward(p, u, H, W):
    """u: (B, L, d_model) with L == H*W and even B (stereo left/right)."""
    Bt, L, _ = u.shape
    assert Bt % 2 == 0
    d_inner = p['norm_g'].shape[0]
    nheads = p['A_log'].shape[0]
    headdim = d_inner // nheads
    conv_dim = p['conv_w'].shape[1]
    d_state = (conv_dim - d_inner) // 2
    Bh = Bt // 2

    # TODO(synk): for realistic configs, pad d_inner / d_state to multiples of
    # 128 at parameter-layout time so the z/x/B/C split points are lane-aligned.

    # head -> d_inner block-expansion matrix (nheads, d_inner)
    emat = jnp.repeat(jnp.eye(nheads, dtype=jnp.float32), headdim, axis=1)

    def split_zxbcdt(t):
        return (t[..., :d_inner],
                t[..., d_inner:d_inner + conv_dim],
                t[..., d_inner + conv_dim:])

    def split_xbc(t):
        return (t[..., :d_inner],
                t[..., d_inner:d_inner + d_state],
                t[..., d_inner + d_state:])

    def per_head_dA(dt_raw):
        # A = -exp(A_log); dA = -(dt * A) = dt * exp(A_log)   (ssd_positve_dA)
        dt = jax.nn.softplus(dt_raw.astype(jnp.float32) +
                             p['dt_bias'].astype(jnp.float32))
        return dt * jnp.exp(p['A_log'].astype(jnp.float32))      # (B, L, nheads)

    gam = p['norm_g'].astype(jnp.float32).reshape(1, d_inner)
    bet = p['norm_b'].astype(jnp.float32).reshape(1, d_inner)

    # ---- first pass: per-eye processing -------------------------------------
    zxbcdt = pallas_linear(u, p['in_proj_w'])                    # (B, L, d_in_proj)
    z, xBC, dt_raw = split_zxbcdt(zxbcdt)
    dA = per_head_dA(dt_raw)                                     # (B, L, nheads)

    xBC = xBC.reshape(Bt, H, W, conv_dim)
    xBC1 = pallas_dwconv3x3(xBC[:Bh], p['conv_l_w'], p['conv_l_b'],
                            apply_silu=True).reshape(Bh, L, conv_dim)
    xBC2 = pallas_dwconv3x3(xBC[Bh:], p['conv_r_w'], p['conv_r_b'],
                            apply_silu=True).reshape(Bh, L, conv_dim)

    x1, B1, C1 = split_xbc(xBC1)
    x2, B2, C2 = split_xbc(xBC2)

    D_l_row = jnp.repeat(p['D_l'].astype(jnp.float32), headdim).reshape(1, d_inner)
    D_r_row = jnp.repeat(p['D_r'].astype(jnp.float32), headdim).reshape(1, d_inner)
    y1 = mamba_attn_norm_gate(x1, dA[:Bh], B1, C1, D_l_row, gam, bet, z[:Bh], emat)
    y2 = mamba_attn_norm_gate(x2, dA[Bh:], B2, C2, D_r_row, gam, bet, z[Bh:], emat)
    y = jnp.concatenate([y1, y2], axis=0)                        # norm(y) * z

    # ---- stereo pass ---------------------------------------------------------
    zxbcdt_s = pallas_linear(y, p['proj_stereo_w'])
    z_s, xBC_s, dt_s_raw = split_zxbcdt(zxbcdt_s)
    dA_s = per_head_dA(dt_s_raw)

    xBC_s = pallas_dwconv3x3(xBC_s.reshape(Bt, H, W, conv_dim),
                             p['conv_w'], p['conv_b'],
                             apply_silu=True).reshape(Bt, L, conv_dim)
    xs, Bs, Cs = split_xbc(xBC_s)

    D_row = jnp.repeat(p['D'].astype(jnp.float32), headdim).reshape(1, d_inner)
    ys = mamba_attn_norm_gate(xs, dA_s, Bs, Cs, D_row, gam, bet, z_s, emat)

    out = pallas_linear(ys, p['out_proj_w'], out_dtype=jnp.float32)
    return out                                                   # (B, L, d_model)


# ----------------------------------------------------------------------------
# Deterministic synthetic parameter init (matches module's shape logic)
# ----------------------------------------------------------------------------
class KeyGen:
    def __init__(self, key):
        self.key = key

    def __call__(self):
        self.key, sub = jax.random.split(self.key)
        return sub


def init_mamba2(key, d_model, *, expand=2, headdim=16, d_state=16, ngroups=1,
                dt_min=0.001, dt_max=0.1, dt_floor=1e-4):
    kg = KeyGen(key)
    d_inner = expand * d_model
    assert d_inner % headdim == 0
    nheads = d_inner // headdim
    d_in_proj = 2 * d_inner + 2 * ngroups * d_state + nheads
    conv_dim = d_inner + 2 * ngroups * d_state

    dt = jnp.exp(jax.random.uniform(kg(), (nheads,)) *
                 (math.log(dt_max) - math.log(dt_min)) + math.log(dt_min))
    dt = jnp.maximum(dt, dt_floor)
    inv_dt = dt + jnp.log(-jnp.expm1(-dt))
    A = jax.random.uniform(kg(), (nheads,), minval=1.0, maxval=16.0)

    return dict(
        in_proj_w=0.02 * jax.random.normal(kg(), (d_model, d_in_proj)),
        proj_stereo_w=0.02 * jax.random.normal(kg(), (d_inner, d_in_proj)),
        out_proj_w=0.02 * jax.random.normal(kg(), (d_inner, d_model)),
        conv_l_w=0.02 * jax.random.normal(kg(), (9, conv_dim)),
        conv_l_b=jnp.zeros((conv_dim,)),
        conv_r_w=0.02 * jax.random.normal(kg(), (9, conv_dim)),
        conv_r_b=jnp.zeros((conv_dim,)),
        conv_w=0.02 * jax.random.normal(kg(), (9, conv_dim)),
        conv_b=jnp.zeros((conv_dim,)),
        dt_bias=inv_dt,
        A_log=jnp.log(A),
        D_l=jnp.ones((nheads,)),
        D_r=jnp.ones((nheads,)),
        D=jnp.ones((nheads,)),
        norm_g=jnp.ones((d_inner,)),
        norm_b=jnp.zeros((d_inner,)),
    )


# ----------------------------------------------------------------------------
if __name__ == "__main__":
    # small config: d_model=32, expand=2 -> d_inner=64, headdim=16 -> nheads=4,
    # d_state=16, ngroups=1 ; spatial 8x8 -> L=64 ; batch 2 (even: left/right).
    D_MODEL, HEADDIM, D_STATE = 32, 16, 16
    Bt, Hs, Ws = 2, 8, 8
    L = Hs * Ws

    key = jax.random.PRNGKey(0)
    pkey, xkey = jax.random.split(key)
    params = init_mamba2(pkey, D_MODEL, expand=2, headdim=HEADDIM,
                         d_state=D_STATE, ngroups=1)
    u = jax.random.normal(xkey, (Bt, L, D_MODEL), jnp.float32)

    fwd = jax.jit(mamba2_forward, static_argnums=(2, 3))
    out = jax.block_until_ready(fwd(params, u, Hs, Ws))

    assert out.shape == (Bt, L, D_MODEL), out.shape
    assert bool(jnp.all(jnp.isfinite(out)))
    print("KERNEL_OK")
</pallas_src>

<mosaic_0001>
module attributes {stable_mosaic.version = 11 : i64} {
  func.func @_matmul_kernel(%arg0: i32, %arg1: i32, %arg2: i32, %arg3: memref<128x32xbf16, #tpu.memory_space<vmem>>, %arg4: memref<32x164xbf16, #tpu.memory_space<vmem>>, %arg5: memref<128x164xbf16, #tpu.memory_space<vmem>>, %arg6: memref<128x164xf32, #tpu.memory_space<vmem>>) attributes {dimension_semantics = [#tpu.dimension_semantics<parallel>, #tpu.dimension_semantics<parallel>, #tpu.dimension_semantics<arbitrary>], iteration_bounds = array<i64: 1, 1, 1>, scalar_prefetch = 0 : i64, scratch_operands = 1 : i64, tpu.core_type = #tpu.core_type<tc>, window_params = [{transform_indices = @transform_0, window_bounds = array<i64: 128, 32>}, {transform_indices = @transform_1, window_bounds = array<i64: 32, 164>}, {transform_indices = @transform_2, window_bounds = array<i64: 128, 164>}]} {
    %c0_i32 = arith.constant 0 : i32
    %0 = arith.cmpi eq, %arg2, %c0_i32 : i32
    %1 = arith.extui %0 : i1 to i32
    %c0_i32_0 = arith.constant 0 : i32
    %2 = arith.cmpi ne, %1, %c0_i32_0 : i32
    scf.if %2 {
      %cst_10 = arith.constant 0.000000e+00 : f32
      %12 = vector.broadcast %cst_10 : f32 to vector<128x164xf32>
      %c0_11 = arith.constant 0 : index
      %c0_12 = arith.constant 0 : index
      %13 = vector.load %arg6[%c0_11, %c0_12] : memref<128x164xf32, #tpu.memory_space<vmem>>, vector<128x164xf32>
      tpu.vector_store %arg6[%c0_11, %c0_12], %12 {strides = array<i32>} : memref<128x164xf32, #tpu.memory_space<vmem>>, vector<128x164xf32>,
    } else {
    }
    %c0 = arith.constant 0 : index
    %c0_1 = arith.constant 0 : index
    %3 = vector.load %arg6[%c0, %c0_1] : memref<128x164xf32, #tpu.memory_space<vmem>>, vector<128x164xf32>
    %c0_2 = arith.constant 0 : index
    %c0_3 = arith.constant 0 : index
    %4 = vector.load %arg3[%c0_2, %c0_3] : memref<128x32xbf16, #tpu.memory_space<vmem>>, vector<128x32xbf16>
    %c0_4 = arith.constant 0 : index
    %c0_5 = arith.constant 0 : index
    %5 = vector.load %arg4[%c0_4, %c0_5] : memref<32x164xbf16, #tpu.memory_space<vmem>>, vector<32x164xbf16>
    %cst = arith.constant dense<0.000000e+00> : vector<128x164xf32>
    %6 = tpu.matmul %4, %5, %cst {dimension_numbers = #tpu.dot_dimension_numbers<[1], [0], [0], [1], [0, 0, 1, 1], [], []>} : vector<128x32xbf16>, vector<32x164xbf16>, vector<128x164xf32> -> vector<128x164xf32>
    %7 = arith.addf %3, %6 : vector<128x164xf32>
    %c0_6 = arith.constant 0 : index
    %c0_7 = arith.constant 0 : index
    %8 = vector.load %arg6[%c0_6, %c0_7] : memref<128x164xf32, #tpu.memory_space<vmem>>, vector<128x164xf32>
    tpu.vector_store %arg6[%c0_6, %c0_7], %7 {strides = array<i32>} : memref<128x164xf32, #tpu.memory_space<vmem>>, vector<128x164xf32>,
    %c0_i32_8 = arith.constant 0 : i32
    %9 = arith.cmpi eq, %arg2, %c0_i32_8 : i32
    %10 = arith.extui %9 : i1 to i32
    %c0_i32_9 = arith.constant 0 : i32
    %11 = arith.cmpi ne, %10, %c0_i32_9 : i32
    scf.if %11 {
      %c0_10 = arith.constant 0 : index
      %c0_11 = arith.constant 0 : index
      %12 = vector.load %arg6[%c0_10, %c0_11] : memref<128x164xf32, #tpu.memory_space<vmem>>, vector<128x164xf32>
      %13 = arith.truncf %12 : vector<128x164xf32> to vector<128x164xbf16>
      %c0_12 = arith.constant 0 : index
      %c0_13 = arith.constant 0 : index
      %14 = vector.load %arg5[%c0_12, %c0_13] : memref<128x164xbf16, #tpu.memory_space<vmem>>, vector<128x164xbf16>
      tpu.vector_store %arg5[%c0_12, %c0_13], %13 {strides = array<i32>} : memref<128x164xbf16, #tpu.memory_space<vmem>>, vector<128x164xbf16>,
    } else {
    }
    return
  }
  func.func @transform_0(%arg0: i32, %arg1: i32, %arg2: i32) -> (i32, i32) {
    %c0_i32 = arith.constant 0 : i32
    return %arg0, %arg2 : i32, i32
  }
  func.func @transform_1(%arg0: i32, %arg1: i32, %arg2: i32) -> (i32, i32) {
    %c0_i32 = arith.constant 0 : i32
    return %arg2, %arg1 : i32, i32
  }
  func.func @transform_2(%arg0: i32, %arg1: i32, %arg2: i32) -> (i32, i32) {
    %c0_i32 = arith.constant 0 : i32
    return %arg0, %arg1 : i32, i32
  }
}

module attributes {stable_mosaic.version = 11 : i64} {
  func.func @_dwconv3x3_kernel(%arg0: i32, %arg1: i32, %arg2: memref<1x8x8x96xbf16, #tpu.memory_space<vmem>>, %arg3: memref<1x1x8x96xbf16, #tpu.memory_space<vmem>>, %arg4: memref<1x1x8x96xbf16, #tpu.memory_space<vmem>>, %arg5: memref<9x96xf32, #tpu.memory_space<vmem>>, %arg6: memref<1x96xf32, #tpu.memory_space<vmem>>, %arg7: memref<1x8x8x96xbf16, #tpu.memory_space<vmem>>) attributes {dimension_semantics = [#tpu.dimension_semantics<parallel>, #tpu.dimension_semantics<parallel>], iteration_bounds = array<i64: 1, 1>, scalar_prefetch = 0 : i64, scratch_operands = 0 : i64, tpu.core_type = #tpu.core_type<tc>, window_params = [{transform_indices = @transform_0, window_bounds = array<i64: 1, 8, 8, 96>}, {transform_indices = @transform_1, window_bounds = array<i64: 1, 1, 8, 96>}, {transform_indices = @transform_2, window_bounds = array<i64: 1, 1, 8, 96>}, {pipeline_mode = #tpu.pipeline_mode<synchronous>, transform_indices = @transform_3, window_bounds = array<i64: 9, 96>}, {pipeline_mode = #tpu.pipeline_mode<synchronous>, transform_indices = @transform_4, window_bounds = array<i64: 1, 96>}, {transform_indices = @transform_5, window_bounds = array<i64: 1, 8, 8, 96>}]} {
    %c0 = arith.constant 0 : index
    %c0_0 = arith.constant 0 : index
    %c0_1 = arith.constant 0 : index
    %c0_2 = arith.constant 0 : index
    %0 = vector.load %arg2[%c0, %c0_0, %c0_1, %c0_2] : memref<1x8x8x96xbf16, #tpu.memory_space<vmem>>, vector<1x8x8x96xbf16>
    %1 = vector.shape_cast %0 : vector<1x8x8x96xbf16> to vector<8x8x96xbf16>
    %c0_3 = arith.constant 0 : index
    %c0_4 = arith.constant 0 : index
    %c0_5 = arith.constant 0 : index
    %c0_6 = arith.constant 0 : index
    %2 = vector.load %arg3[%c0_3, %c0_4, %c0_5, %c0_6] : memref<1x1x8x96xbf16, #tpu.memory_space<vmem>>, vector<1x1x8x96xbf16>
    %3 = vector.shape_cast %2 : vector<1x1x8x96xbf16> to vector<1x8x96xbf16>
    %c0_7 = arith.constant 0 : index
    %c0_8 = arith.constant 0 : index
    %c0_9 = arith.constant 0 : index
    %c0_10 = arith.constant 0 : index
    %4 = vector.load %arg4[%c0_7, %c0_8, %c0_9, %c0_10] : memref<1x1x8x96xbf16, #tpu.memory_space<vmem>>, vector<1x1x8x96xbf16>
    %5 = vector.shape_cast %4 : vector<1x1x8x96xbf16> to vector<1x8x96xbf16>
    %6 = vector.extract_strided_slice %1 {offsets = [0, 0, 0], sizes = [7, 8, 96], strides = [1, 1, 1]} : vector<8x8x96xbf16> to vector<7x8x96xbf16>
    %7 = tpu.concatenate %3, %6 in 0 : vector<1x8x96xbf16>, vector<7x8x96xbf16> -> vector<8x8x96xbf16>
    %8 = vector.extract_strided_slice %1 {offsets = [1, 0, 0], sizes = [7, 8, 96], strides = [1, 1, 1]} : vector<8x8x96xbf16> to vector<7x8x96xbf16>
    %9 = tpu.concatenate %8, %5 in 0 : vector<7x8x96xbf16>, vector<1x8x96xbf16> -> vector<8x8x96xbf16>
    %c0_11 = arith.constant 0 : index
    %c0_12 = arith.constant 0 : index
    %10 = vector.load %arg5[%c0_11, %c0_12] : memref<9x96xf32, #tpu.memory_space<vmem>>, vector<9x96xf32>
    %11 = tpu.iota {dimensions = array<i32: 1>} : vector<8x8x96xi32>
    %c0_i32 = arith.constant 0 : i32
    %12 = vector.broadcast %c0_i32 : i32 to vector<8x8x96xi32>
    %13 = arith.cmpi sgt, %11, %12 : vector<8x8x96xi32>
    %c7_i32 = arith.constant 7 : i32
    %14 = vector.broadcast %c7_i32 : i32 to vector<8x8x96xi32>
    %15 = arith.cmpi slt, %11, %14 : vector<8x8x96xi32>
    %cst = arith.constant 0.000000e+00 : f32
    %16 = vector.broadcast %cst : f32 to vector<8x8x96xf32>
    %17 = arith.extf %7 : vector<8x8x96xbf16> to vector<8x8x96xf32>
    %18 = vector.extract_strided_slice %10 {offsets = [1, 0], sizes = [1, 96], strides = [1, 1]} : vector<9x96xf32> to vector<1x96xf32>
    %19 = vector.shape_cast %18 : vector<1x96xf32> to vector<1x1x96xf32>
    %20 = vector.broadcast %19 : vector<1x1x96xf32> to vector<8x8x96xf32>
    %21 = arith.mulf %17, %20 : vector<8x8x96xf32>
    %22 = arith.addf %16, %21 : vector<8x8x96xf32>
    %c1_i32 = arith.constant 1 : i32
    %23 = tpu.dynamic_rotate %17 by %c1_i32 dim 1 : vector<8x8x96xf32>, i32 -> vector<8x8x96xf32>
    %cst_13 = arith.constant 0.000000e+00 : f32
    %24 = vector.broadcast %cst_13 : f32 to vector<8x8x96xf32>
    %25 = arith.select %13, %23, %24 : vector<8x8x96xi1>, vector<8x8x96xf32>
    %26 = vector.extract_strided_slice %10 {offsets = [0, 0], sizes = [1, 96], strides = [1, 1]} : vector<9x96xf32> to vector<1x96xf32>
    %27 = vector.shape_cast %26 : vector<1x96xf32> to vector<1x1x96xf32>
    %28 = vector.broadcast %27 : vector<1x1x96xf32> to vector<8x8x96xf32>
    %29 = arith.mulf %25, %28 : vector<8x8x96xf32>
    %30 = arith.addf %22, %29 : vector<8x8x96xf32>
    %c7_i32_14 = arith.constant 7 : i32
    %31 = tpu.dynamic_rotate %17 by %c7_i32_14 dim 1 : vector<8x8x96xf32>, i32 -> vector<8x8x96xf32>
    %cst_15 = arith.constant 0.000000e+00 : f32
    %32 = vector.broadcast %cst_15 : f32 to vector<8x8x96xf32>
    %33 = arith.select %15, %31, %32 : vector<8x8x96xi1>, vector<8x8x96xf32>
    %34 = vector.extract_strided_slice %10 {offsets = [2, 0], sizes = [1, 96], strides = [1, 1]} : vector<9x96xf32> to vector<1x96xf32>
    %35 = vector.shape_cast %34 : vector<1x96xf32> to vector<1x1x96xf32>
    %36 = vector.broadcast %35 : vector<1x1x96xf32> to vector<8x8x96xf32>
    %37 = arith.mulf %33, %36 : vector<8x8x96xf32>
    %38 = arith.addf %30, %37 : vector<8x8x96xf32>
    %39 = arith.extf %1 : vector<8x8x96xbf16> to vector<8x8x96xf32>
    %40 = vector.extract_strided_slice %10 {offsets = [4, 0], sizes = [1, 96], strides = [1, 1]} : vector<9x96xf32> to vector<1x96xf32>
    %41 = vector.shape_cast %40 : vector<1x96xf32> to vector<1x1x96xf32>
    %42 = vector.broadcast %41 : vector<1x1x96xf32> to vector<8x8x96xf32>
    %43 = arith.mulf %39, %42 : vector<8x8x96xf32>
    %44 = arith.addf %38, %43 : vector<8x8x96xf32>
    %c1_i32_16 = arith.constant 1 : i32
    %45 = tpu.dynamic_rotate %39 by %c1_i32_16 dim 1 : vector<8x8x96xf32>, i32 -> vector<8x8x96xf32>
    %cst_17 = arith.constant 0.000000e+00 : f32
    %46 = vector.broadcast %cst_17 : f32 to vector<8x8x96xf32>
    %47 = arith.select %13, %45, %46 : vector<8x8x96xi1>, vector<8x8x96xf32>
    %48 = vector.extract_strided_slice %10 {offsets = [3, 0], sizes = [1, 96], strides = [1, 1]} : vector<9x96xf32> to vector<1x96xf32>
    %49 = vector.shape_cast %48 : vector<1x96xf32> to vector<1x1x96xf32>
    %50 = vector.broadcast %49 : vector<1x1x96xf32> to vector<8x8x96xf32>
    %51 = arith.mulf %47, %50 : vector<8x8x96xf32>
    %52 = arith.addf %44, %51 : vector<8x8x96xf32>
    %c7_i32_18 = arith.constant 7 : i32
    %53 = tpu.dynamic_rotate %39 by %c7_i32_18 dim 1 : vector<8x8x96xf32>, i32 -> vector<8x8x96xf32>
    %cst_19 = arith.constant 0.000000e+00 : f32
    %54 = vector.broadcast %cst_19 : f32 to vector<8x8x96xf32>
    %55 = arith.select %15, %53, %54 : vector<8x8x96xi1>, vector<8x8x96xf32>
    %56 = vector.extract_strided_slice %10 {offsets = [5, 0], sizes = [1, 96], strides = [1, 1]} : vector<9x96xf32> to vector<1x96xf32>
    %57 = vector.shape_cast %56 : vector<1x96xf32> to vector<1x1x96xf32>
    %58 = vector.broadcast %57 : vector<1x1x96xf32> to vector<8x8x96xf32>
    %59 = arith.mulf %55, %58 : vector<8x8x96xf32>
    %60 = arith.addf %52, %59 : vector<8x8x96xf32>
    %61 = arith.extf %9 : vector<8x8x96xbf16> to vector<8x8x96xf32>
    %62 = vector.extract_strided_slice %10 {offsets = [7, 0], sizes = [1, 96], strides = [1, 1]} : vector<9x96xf32> to vector<1x96xf32>
    %63 = vector.shape_cast %62 : vector<1x96xf32> to vector<1x1x96xf32>
    %64 = vector.broadcast %63 : vector<1x1x96xf32> to vector<8x8x96xf32>
    %65 = arith.mulf %61, %64 : vector<8x8x96xf32>
    %66 = arith.addf %60, %65 : vector<8x8x96xf32>
    %c1_i32_20 = arith.constant 1 : i32
    %67 = tpu.dynamic_rotate %61 by %c1_i32_20 dim 1 : vector<8x8x96xf32>, i32 -> vector<8x8x96xf32>
    %cst_21 = arith.constant 0.000000e+00 : f32
    %68 = vector.broadcast %cst_21 : f32 to vector<8x8x96xf32>
    %69 = arith.select %13, %67, %68 : vector<8x8x96xi1>, vector<8x8x96xf32>
    %70 = vector.extract_strided_slice %10 {offsets = [6, 0], sizes = [1, 96], strides = [1, 1]} : vector<9x96xf32> to vector<1x96xf32>
    %71 = vector.shape_cast %70 : vector<1x96xf32> to vector<1x1x96xf32>
    %72 = vector.broadcast %71 : vector<1x1x96xf32> to vector<8x8x96xf32>
    %73 = arith.mulf %69, %72 : vector<8x8x96xf32>
    %74 = arith.addf %66, %73 : vector<8x8x96xf32>
    %c7_i32_22 = arith.constant 7 : i32
    %75 = tpu.dynamic_rotate %61 by %c7_i32_22 dim 1 : vector<8x8x96xf32>, i32 -> vector<8x8x96xf32>
    %cst_23 = arith.constant 0.000000e+00 : f32
    %76 = vector.broadcast %cst_23 : f32 to vector<8x8x96xf32>
    %77 = arith.select %15, %75, %76 : vector<8x8x96xi1>, vector<8x8x96xf32>
    %78 = vector.extract_strided_slice %10 {offsets = [8, 0], sizes = [1, 96], strides = [1, 1]} : vector<9x96xf32> to vector<1x96xf32>
    %79 = vector.shape_cast %78 : vector<1x96xf32> to vector<1x1x96xf32>
    %80 = vector.broadcast %79 : vector<1x1x96xf32> to vector<8x8x96xf32>
    %81 = arith.mulf %77, %80 : vector<8x8x96xf32>
    %82 = arith.addf %74, %81 : vector<8x8x96xf32>
    %c0_24 = arith.constant 0 : index
    %c0_25 = arith.constant 0 : index
    %83 = vector.load %arg6[%c0_24, %c0_25] : memref<1x96xf32, #tpu.memory_space<vmem>>, vector<1x96xf32>
    %84 = vector.shape_cast %83 : vector<1x96xf32> to vector<1x1x96xf32>
    %85 = vector.broadcast %84 : vector<1x1x96xf32> to vector<8x8x96xf32>
    %86 = arith.addf %82, %85 : vector<8x8x96xf32>
    %87 = arith.negf %86 : vector<8x8x96xf32>
    %88 = math.exp %87 : vector<8x8x96xf32>
    %cst_26 = arith.constant 1.000000e+00 : f32
    %89 = vector.broadcast %cst_26 : f32 to vector<8x8x96xf32>
    %90 = arith.addf %89, %88 : vector<8x8x96xf32>
    %91 = arith.divf %89, %90 : vector<8x8x96xf32>
    %92 = arith.mulf %86, %91 : vector<8x8x96xf32>
    %93 = arith.truncf %92 : vector<8x8x96xf32> to vector<8x8x96xbf16>
    %c0_27 = arith.constant 0 : index
    %c0_28 = arith.constant 0 : index
    %c0_29 = arith.constant 0 : index
    %c0_30 = arith.constant 0 : index
    %94 = vector.load %arg7[%c0_27, %c0_28, %c0_29, %c0_30] : memref<1x8x8x96xbf16, #tpu.memory_space<vmem>>, vector<1x8x8x96xbf16>
    %95 = vector.shape_cast %94 : vector<1x8x8x96xbf16> to vector<8x8x96xbf16>
    %96 = vector.shape_cast %93 : vector<8x8x96xbf16> to vector<1x8x8x96xbf16>
    tpu.vector_store %arg7[%c0_27, %c0_28, %c0_29, %c0_30], %96 {strides = array<i32>} : memref<1x8x8x96xbf16, #tpu.memory_space<vmem>>, vector<1x8x8x96xbf16>,
    return
  }
  func.func @transform_0(%arg0: i32, %arg1: i32) -> (i32, i32, i32, i32) {
    %c0_i32 = arith.constant 0 : i32
    %c0_i32_0 = arith.constant 0 : i32
    %c0_i32_1 = arith.constant 0 : i32
    return %arg0, %arg1, %c0_i32, %c0_i32_0 : i32, i32, i32, i32
  }
  func.func @transform_1(%arg0: i32, %arg1: i32) -> (i32, i32, i32, i32) {
    %c0_i32 = arith.constant 0 : i32
    %c0_i32_0 = arith.constant 0 : i32
    %c0_i32_1 = arith.constant 0 : i32
    return %arg0, %arg1, %c0_i32, %c0_i32_0 : i32, i32, i32, i32
  }
  func.func @transform_2(%arg0: i32, %arg1: i32) -> (i32, i32, i32, i32) {
    %c0_i32 = arith.constant 0 : i32
    %c0_i32_0 = arith.constant 0 : i32
    %c0_i32_1 = arith.constant 0 : i32
    return %arg0, %arg1, %c0_i32, %c0_i32_0 : i32, i32, i32, i32
  }
  func.func @transform_3(%arg0: i32, %arg1: i32) -> (i32, i32) {
    %c0_i32 = arith.constant 0 : i32
    %c0_i32_0 = arith.constant 0 : i32
    %c0_i32_1 = arith.constant 0 : i32
    return %c0_i32, %c0_i32_0 : i32, i32
  }
  func.func @transform_4(%arg0: i32, %arg1: i32) -> (i32, i32) {
    %c0_i32 = arith.constant 0 : i32
    %c0_i32_0 = arith.constant 0 : i32
    %c0_i32_1 = arith.constant 0 : i32
    return %c0_i32, %c0_i32_0 : i32, i32
  }
  func.func @transform_5(%arg0: i32, %arg1: i32) -> (i32, i32, i32, i32) {
    %c0_i32 = arith.constant 0 : i32
    %c0_i32_0 = arith.constant 0 : i32
    %c0_i32_1 = arith.constant 0 : i32
    return %arg0, %arg1, %c0_i32, %c0_i32_0 : i32, i32, i32, i32
  }
}

module attributes {stable_mosaic.version = 11 : i64} {
  func.func @_fused_attn_kernel(%arg0: i32, %arg1: i32, %arg2: i32, %arg3: memref<1x64x16xbf16, #tpu.memory_space<vmem>>, %arg4: memref<1x64x16xbf16, #tpu.memory_space<vmem>>, %arg5: memref<1x64x64xbf16, #tpu.memory_space<vmem>>, %arg6: memref<1x64x4xf32, #tpu.memory_space<vmem>>, %arg7: memref<1x64x64xbf16, #tpu.memory_space<vmem>>, %arg8: memref<4x64xf32, #tpu.memory_space<vmem>>, %arg9: memref<1x64xf32, #tpu.memory_space<vmem>>, %arg10: memref<1x64xf32, #tpu.memory_space<vmem>>, %arg11: memref<1x64xf32, #tpu.memory_space<vmem>>, %arg12: memref<1x64x64xbf16, #tpu.memory_space<vmem>>, %arg13: memref<16x64xf32, #tpu.memory_space<vmem>>) attributes {dimension_semantics = [#tpu.dimension_semantics<parallel>, #tpu.dimension_semantics<arbitrary>, #tpu.dimension_semantics<arbitrary>], iteration_bounds = array<i64: 1, 2, 1>, scalar_prefetch = 0 : i64, scratch_operands = 1 : i64, tpu.core_type = #tpu.core_type<tc>, window_params = [{transform_indices = @transform_0, window_bounds = array<i64: 1, 64, 16>}, {transform_indices = @transform_1, window_bounds = array<i64: 1, 64, 16>}, {transform_indices = @transform_2, window_bounds = array<i64: 1, 64, 64>}, {transform_indices = @transform_3, window_bounds = array<i64: 1, 64, 4>}, {transform_indices = @transform_4, window_bounds = array<i64: 1, 64, 64>}, {pipeline_mode = #tpu.pipeline_mode<synchronous>, transform_indices = @transform_5, window_bounds = array<i64: 4, 64>}, {pipeline_mode = #tpu.pipeline_mode<synchronous>, transform_indices = @transform_6, window_bounds = array<i64: 1, 64>}, {pipeline_mode = #tpu.pipeline_mode<synchronous>, transform_indices = @transform_7, window_bounds = array<i64: 1, 64>}, {pipeline_mode = #tpu.pipeline_mode<synchronous>, transform_indices = @transform_8, window_bounds = array<i64: 1, 64>}, {transform_indices = @transform_9, window_bounds = array<i64: 1, 64, 64>}]} {
    %c0_i32 = arith.constant 0 : i32
    %0 = arith.cmpi eq, %arg1, %c0_i32 : i32
    %c0_i32_0 = arith.constant 0 : i32
    %1 = arith.cmpi eq, %arg2, %c0_i32_0 : i32
    %2 = arith.andi %0, %1 : i1
    %3 = arith.extui %2 : i1 to i32
    %c0_i32_1 = arith.constant 0 : i32
    %4 = arith.cmpi ne, %3, %c0_i32_1 : i32
    scf.if %4 {
      %cst = arith.constant 0.000000e+00 : f32
      %11 = vector.broadcast %cst : f32 to vector<16x64xf32>
      %c0 = arith.constant 0 : index
      %c0_5 = arith.constant 0 : index
      %12 = vector.load %arg13[%c0, %c0_5] : memref<16x64xf32, #tpu.memory_space<vmem>>, vector<16x64xf32>
      tpu.vector_store %arg13[%c0, %c0_5], %11 {strides = array<i32>} : memref<16x64xf32, #tpu.memory_space<vmem>>, vector<16x64xf32>,
    } else {
    }
    %c0_i32_2 = arith.constant 0 : i32
    %5 = arith.cmpi eq, %arg1, %c0_i32_2 : i32
    %6 = arith.extui %5 : i1 to i32
    %c0_i32_3 = arith.constant 0 : i32
    %7 = arith.cmpi ne, %6, %c0_i32_3 : i32
    scf.if %7 {
      %c0 = arith.constant 0 : index
      %c0_5 = arith.constant 0 : index
      %c0_6 = arith.constant 0 : index
      %11 = vector.load %arg6[%c0, %c0_5, %c0_6] : memref<1x64x4xf32, #tpu.memory_space<vmem>>, vector<1x64x4xf32>
      %12 = vector.shape_cast %11 : vector<1x64x4xf32> to vector<64x4xf32>
      %c0_7 = arith.constant 0 : index
      %c0_8 = arith.constant 0 : index
      %13 = vector.load %arg8[%c0_7, %c0_8] : memref<4x64xf32, #tpu.memory_space<vmem>>, vector<4x64xf32>
      %cst = arith.constant dense<0.000000e+00> : vector<64x64xf32>
      %14 = tpu.matmul %12, %13, %cst {dimension_numbers = #tpu.dot_dimension_numbers<[1], [0], [0], [1], [0, 0, 1, 1], [], []>} : vector<64x4xf32>, vector<4x64xf32>, vector<64x64xf32> -> vector<64x64xf32>
      %c0_9 = arith.constant 0 : index
      %c0_10 = arith.constant 0 : index
      %c0_11 = arith.constant 0 : index
      %15 = vector.load %arg5[%c0_9, %c0_10, %c0_11] : memref<1x64x64xbf16, #tpu.memory_space<vmem>>, vector<1x64x64xbf16>
      %16 = vector.shape_cast %15 : vector<1x64x64xbf16> to vector<64x64xbf16>
      %17 = arith.extf %16 : vector<64x64xbf16> to vector<64x64xf32>
      %18 = arith.mulf %17, %14 : vector<64x64xf32>
      %c0_12 = arith.constant 0 : index
      %c0_13 = arith.constant 0 : index
      %19 = vector.load %arg13[%c0_12, %c0_13] : memref<16x64xf32, #tpu.memory_space<vmem>>, vector<16x64xf32>
      %c0_14 = arith.constant 0 : index
      %c0_15 = arith.constant 0 : index
      %c0_16 = arith.constant 0 : index
      %20 = vector.load %arg3[%c0_14, %c0_15, %c0_16] : memref<1x64x16xbf16, #tpu.memory_space<vmem>>, vector<1x64x16xbf16>
      %21 = vector.shape_cast %20 : vector<1x64x16xbf16> to vector<64x16xbf16>
      %22 = arith.extf %21 : vector<64x16xbf16> to vector<64x16xf32>
      %cst_17 = arith.constant dense<0.000000e+00> : vector<16x64xf32>
      %23 = tpu.matmul %22, %18, %cst_17 {dimension_numbers = #tpu.dot_dimension_numbers<[0], [0], [1], [1], [0, 1, 1, 1], [], []>} : vector<64x16xf32>, vector<64x64xf32>, vector<16x64xf32> -> vector<16x64xf32>
      %24 = arith.addf %19, %23 : vector<16x64xf32>
      %c0_18 = arith.constant 0 : index
      %c0_19 = arith.constant 0 : index
      %25 = vector.load %arg13[%c0_18, %c0_19] : memref<16x64xf32, #tpu.memory_space<vmem>>, vector<16x64xf32>
      tpu.vector_store %arg13[%c0_18, %c0_19], %24 {strides = array<i32>} : memref<16x64xf32, #tpu.memory_space<vmem>>, vector<16x64xf32>,
    } else {
    }
    %c1_i32 = arith.constant 1 : i32
    %8 = arith.cmpi eq, %arg1, %c1_i32 : i32
    %9 = arith.extui %8 : i1 to i32
    %c0_i32_4 = arith.constant 0 : i32
    %10 = arith.cmpi ne, %9, %c0_i32_4 : i32
    scf.if %10 {
      %c0 = arith.constant 0 : index
      %c0_5 = arith.constant 0 : index
      %c0_6 = arith.constant 0 : index
      %11 = vector.load %arg4[%c0, %c0_5, %c0_6] : memref<1x64x16xbf16, #tpu.memory_space<vmem>>, vector<1x64x16xbf16>
      %12 = vector.shape_cast %11 : vector<1x64x16xbf16> to vector<64x16xbf16>
      %13 = arith.extf %12 : vector<64x16xbf16> to vector<64x16xf32>
      %c0_7 = arith.constant 0 : index
      %c0_8 = arith.constant 0 : index
      %14 = vector.load %arg13[%c0_7, %c0_8] : memref<16x64xf32, #tpu.memory_space<vmem>>, vector<16x64xf32>
      %cst = arith.constant dense<0.000000e+00> : vector<64x64xf32>
      %15 = tpu.matmul %13, %14, %cst {dimension_numbers = #tpu.dot_dimension_numbers<[1], [0], [0], [1], [0, 0, 1, 1], [], []>} : vector<64x16xf32>, vector<16x64xf32>, vector<64x64xf32> -> vector<64x64xf32>
      %c0_9 = arith.constant 0 : index
      %c0_10 = arith.constant 0 : index
      %c0_11 = arith.constant 0 : index
      %16 = vector.load %arg5[%c0_9, %c0_10, %c0_11] : memref<1x64x64xbf16, #tpu.memory_space<vmem>>, vector<1x64x64xbf16>
      %17 = vector.shape_cast %16 : vector<1x64x64xbf16> to vector<64x64xbf16>
      %18 = arith.extf %17 : vector<64x64xbf16> to vector<64x64xf32>
      %c0_12 = arith.constant 0 : index
      %c0_13 = arith.constant 0 : index
      %19 = vector.load %arg9[%c0_12, %c0_13] : memref<1x64xf32, #tpu.memory_space<vmem>>, vector<1x64xf32>
      %20 = vector.broadcast %19 : vector<1x64xf32> to vector<64x64xf32>
      %21 = arith.mulf %18, %20 : vector<64x64xf32>
      %22 = arith.addf %15, %21 : vector<64x64xf32>
      %cst_14 = arith.constant dense<0.000000e+00> : vector<64xf32>
      %23 = vector.multi_reduction <add>, %22, %cst_14 [1] : vector<64x64xf32> to vector<64xf32>
      %24 = vector.shape_cast %23 : vector<64xf32> to vector<64x1xf32>
      %cst_15 = arith.constant 6.400000e+01 : f32
      %25 = vector.broadcast %cst_15 : f32 to vector<64x1xf32>
      %26 = arith.divf %24, %25 : vector<64x1xf32>
      %27 = vector.broadcast %26 : vector<64x1xf32> to vector<64x64xf32>
      %28 = arith.subf %22, %27 : vector<64x64xf32>
      %29 = arith.mulf %28, %28 : vector<64x64xf32>
      %cst_16 = arith.constant dense<0.000000e+00> : vector<64xf32>
      %30 = vector.multi_reduction <add>, %29, %cst_16 [1] : vector<64x64xf32> to vector<64xf32>
      %31 = vector.shape_cast %30 : vector<64xf32> to vector<64x1xf32>
      %cst_17 = arith.constant 6.400000e+01 : f32
      %32 = vector.broadcast %cst_17 : f32 to vector<64x1xf32>
      %33 = arith.divf %31, %32 : vector<64x1xf32>
      %cst_18 = arith.constant 9.99999974E-6 : f32
      %34 = vector.broadcast %cst_18 : f32 to vector<64x1xf32>
      %35 = arith.addf %33, %34 : vector<64x1xf32>
      %36 = math.rsqrt %35 : vector<64x1xf32>
      %37 = vector.broadcast %36 : vector<64x1xf32> to vector<64x64xf32>
      %38 = arith.mulf %28, %37 : vector<64x64xf32>
      %c0_19 = arith.constant 0 : index
      %c0_20 = arith.constant 0 : index
      %39 = vector.load %arg10[%c0_19, %c0_20] : memref<1x64xf32, #tpu.memory_space<vmem>>, vector<1x64xf32>
      %40 = vector.broadcast %39 : vector<1x64xf32> to vector<64x64xf32>
      %41 = arith.mulf %38, %40 : vector<64x64xf32>
      %c0_21 = arith.constant 0 : index
      %c0_22 = arith.constant 0 : index
      %42 = vector.load %arg11[%c0_21, %c0_22] : memref<1x64xf32, #tpu.memory_space<vmem>>, vector<1x64xf32>
      %43 = vector.broadcast %42 : vector<1x64xf32> to vector<64x64xf32>
      %44 = arith.addf %41, %43 : vector<64x64xf32>
      %c0_23 = arith.constant 0 : index
      %c0_24 = arith.constant 0 : index
      %c0_25 = arith.constant 0 : index
      %45 = vector.load %arg7[%c0_23, %c0_24, %c0_25] : memref<1x64x64xbf16, #tpu.memory_space<vmem>>, vector<1x64x64xbf16>
      %46 = vector.shape_cast %45 : vector<1x64x64xbf16> to vector<64x64xbf16>
      %47 = arith.extf %46 : vector<64x64xbf16> to vector<64x64xf32>
      %48 = arith.mulf %44, %47 : vector<64x64xf32>
      %49 = arith.truncf %48 : vector<64x64xf32> to vector<64x64xbf16>
      %c0_26 = arith.constant 0 : index
      %c0_27 = arith.constant 0 : index
      %c0_28 = arith.constant 0 : index
      %50 = vector.load %arg12[%c0_26, %c0_27, %c0_28] : memref<1x64x64xbf16, #tpu.memory_space<vmem>>, vector<1x64x64xbf16>
      %51 = vector.shape_cast %50 : vector<1x64x64xbf16> to vector<64x64xbf16>
      %52 = vector.shape_cast %49 : vector<64x64xbf16> to vector<1x64x64xbf16>
      tpu.vector_store %arg12[%c0_26, %c0_27, %c0_28], %52 {strides = array<i32>} : memref<1x64x64xbf16, #tpu.memory_space<vmem>>, vector<1x64x64xbf16>,
    } else {
    }
    return
  }
  func.func @transform_0(%arg0: i32, %arg1: i32, %arg2: i32) -> (i32, i32, i32) {
    %c1_i32 = arith.constant 1 : i32
    %0 = arith.subi %c1_i32, %arg1 : i32
    %1 = arith.muli %arg2, %0 : i32
    %c0_i32 = arith.constant 0 : i32
    %2 = arith.muli %c0_i32, %arg1 : i32
    %3 = arith.addi %1, %2 : i32
    %c0_i32_0 = arith.constant 0 : i32
    %c0_i32_1 = arith.constant 0 : i32
    return %arg0, %3, %c0_i32_0 : i32, i32, i32
  }
  func.func @transform_1(%arg0: i32, %arg1: i32, %arg2: i32) -> (i32, i32, i32) {
    %0 = arith.muli %arg2, %arg1 : i32
    %c0_i32 = arith.constant 0 : i32
    %c0_i32_0 = arith.constant 0 : i32
    return %arg0, %0, %c0_i32 : i32, i32, i32
  }
  func.func @transform_2(%arg0: i32, %arg1: i32, %arg2: i32) -> (i32, i32, i32) {
    %c0_i32 = arith.constant 0 : i32
    %c0_i32_0 = arith.constant 0 : i32
    return %arg0, %arg2, %c0_i32 : i32, i32, i32
  }
  func.func @transform_3(%arg0: i32, %arg1: i32, %arg2: i32) -> (i32, i32, i32) {
    %c1_i32 = arith.constant 1 : i32
    %0 = arith.subi %c1_i32, %arg1 : i32
    %1 = arith.muli %arg2, %0 : i32
    %c0_i32 = arith.constant 0 : i32
    %2 = arith.muli %c0_i32, %arg1 : i32
    %3 = arith.addi %1, %2 : i32
    %c0_i32_0 = arith.constant 0 : i32
    %c0_i32_1 = arith.constant 0 : i32
    return %arg0, %3, %c0_i32_0 : i32, i32, i32
  }
  func.func @transform_4(%arg0: i32, %arg1: i32, %arg2: i32) -> (i32, i32, i32) {
    %0 = arith.muli %arg2, %arg1 : i32
    %c0_i32 = arith.constant 0 : i32
    %c0_i32_0 = arith.constant 0 : i32
    return %arg0, %0, %c0_i32 : i32, i32, i32
  }
  func.func @transform_5(%arg0: i32, %arg1: i32, %arg2: i32) -> (i32, i32) {
    %c0_i32 = arith.constant 0 : i32
    %c0_i32_0 = arith.constant 0 : i32
    %c0_i32_1 = arith.constant 0 : i32
    return %c0_i32, %c0_i32_0 : i32, i32
  }
  func.func @transform_6(%arg0: i32, %arg1: i32, %arg2: i32) -> (i32, i32) {
    %c0_i32 = arith.constant 0 : i32
    %c0_i32_0 = arith.constant 0 : i32
    %c0_i32_1 = arith.constant 0 : i32
    return %c0_i32, %c0_i32_0 : i32, i32
  }
  func.func @transform_7(%arg0: i32, %arg1: i32, %arg2: i32) -> (i32, i32) {
    %c0_i32 = arith.constant 0 : i32
    %c0_i32_0 = arith.constant 0 : i32
    %c0_i32_1 = arith.constant 0 : i32
    return %c0_i32, %c0_i32_0 : i32, i32
  }
  func.func @transform_8(%arg0: i32, %arg1: i32, %arg2: i32) -> (i32, i32) {
    %c0_i32 = arith.constant 0 : i32
    %c0_i32_0 = arith.constant 0 : i32
    %c0_i32_1 = arith.constant 0 : i32
    return %c0_i32, %c0_i32_0 : i32, i32
  }
  func.func @transform_9(%arg0: i32, %arg1: i32, %arg2: i32) -> (i32, i32, i32) {
    %0 = arith.muli %arg2, %arg1 : i32
    %c0_i32 = arith.constant 0 : i32
    %c0_i32_0 = arith.constant 0 : i32
    return %arg0, %0, %c0_i32 : i32, i32, i32
  }
}

module attributes {stable_mosaic.version = 11 : i64} {
  func.func @_matmul_kernel(%arg0: i32, %arg1: i32, %arg2: i32, %arg3: memref<128x64xbf16, #tpu.memory_space<vmem>>, %arg4: memref<64x164xbf16, #tpu.memory_space<vmem>>, %arg5: memref<128x164xbf16, #tpu.memory_space<vmem>>, %arg6: memref<128x164xf32, #tpu.memory_space<vmem>>) attributes {dimension_semantics = [#tpu.dimension_semantics<parallel>, #tpu.dimension_semantics<parallel>, #tpu.dimension_semantics<arbitrary>], iteration_bounds = array<i64: 1, 1, 1>, scalar_prefetch = 0 : i64, scratch_operands = 1 : i64, tpu.core_type = #tpu.core_type<tc>, window_params = [{transform_indices = @transform_0, window_bounds = array<i64: 128, 64>}, {transform_indices = @transform_1, window_bounds = array<i64: 64, 164>}, {transform_indices = @transform_2, window_bounds = array<i64: 128, 164>}]} {
    %c0_i32 = arith.constant 0 : i32
    %0 = arith.cmpi eq, %arg2, %c0_i32 : i32
    %1 = arith.extui %0 : i1 to i32
    %c0_i32_0 = arith.constant 0 : i32
    %2 = arith.cmpi ne, %1, %c0_i32_0 : i32
    scf.if %2 {
      %cst_10 = arith.constant 0.000000e+00 : f32
      %12 = vector.broadcast %cst_10 : f32 to vector<128x164xf32>
      %c0_11 = arith.constant 0 : index
      %c0_12 = arith.constant 0 : index
      %13 = vector.load %arg6[%c0_11, %c0_12] : memref<128x164xf32, #tpu.memory_space<vmem>>, vector<128x164xf32>
      tpu.vector_store %arg6[%c0_11, %c0_12], %12 {strides = array<i32>} : memref<128x164xf32, #tpu.memory_space<vmem>>, vector<128x164xf32>,
    } else {
    }
    %c0 = arith.constant 0 : index
    %c0_1 = arith.constant 0 : index
    %3 = vector.load %arg6[%c0, %c0_1] : memref<128x164xf32, #tpu.memory_space<vmem>>, vector<128x164xf32>
    %c0_2 = arith.constant 0 : index
    %c0_3 = arith.constant 0 : index
    %4 = vector.load %arg3[%c0_2, %c0_3] : memref<128x64xbf16, #tpu.memory_space<vmem>>, vector<128x64xbf16>
    %c0_4 = arith.constant 0 : index
    %c0_5 = arith.constant 0 : index
    %5 = vector.load %arg4[%c0_4, %c0_5] : memref<64x164xbf16, #tpu.memory_space<vmem>>, vector<64x164xbf16>
    %cst = arith.constant dense<0.000000e+00> : vector<128x164xf32>
    %6 = tpu.matmul %4, %5, %cst {dimension_numbers = #tpu.dot_dimension_numbers<[1], [0], [0], [1], [0, 0, 1, 1], [], []>} : vector<128x64xbf16>, vector<64x164xbf16>, vector<128x164xf32> -> vector<128x164xf32>
    %7 = arith.addf %3, %6 : vector<128x164xf32>
    %c0_6 = arith.constant 0 : index
    %c0_7 = arith.constant 0 : index
    %8 = vector.load %arg6[%c0_6, %c0_7] : memref<128x164xf32, #tpu.memory_space<vmem>>, vector<128x164xf32>
    tpu.vector_store %arg6[%c0_6, %c0_7], %7 {strides = array<i32>} : memref<128x164xf32, #tpu.memory_space<vmem>>, vector<128x164xf32>,
    %c0_i32_8 = arith.constant 0 : i32
    %9 = arith.cmpi eq, %arg2, %c0_i32_8 : i32
    %10 = arith.extui %9 : i1 to i32
    %c0_i32_9 = arith.constant 0 : i32
    %11 = arith.cmpi ne, %10, %c0_i32_9 : i32
    scf.if %11 {
      %c0_10 = arith.constant 0 : index
      %c0_11 = arith.constant 0 : index
      %12 = vector.load %arg6[%c0_10, %c0_11] : memref<128x164xf32, #tpu.memory_space<vmem>>, vector<128x164xf32>
      %13 = arith.truncf %12 : vector<128x164xf32> to vector<128x164xbf16>
      %c0_12 = arith.constant 0 : index
      %c0_13 = arith.constant 0 : index
      %14 = vector.load %arg5[%c0_12, %c0_13] : memref<128x164xbf16, #tpu.memory_space<vmem>>, vector<128x164xbf16>
      tpu.vector_store %arg5[%c0_12, %c0_13], %13 {strides = array<i32>} : memref<128x164xbf16, #tpu.memory_space<vmem>>, vector<128x164xbf16>,
    } else {
    }
    return
  }
  func.func @transform_0(%arg0: i32, %arg1: i32, %arg2: i32) -> (i32, i32) {
    %c0_i32 = arith.constant 0 : i32
    return %arg0, %arg2 : i32, i32
  }
  func.func @transform_1(%arg0: i32, %arg1: i32, %arg2: i32) -> (i32, i32) {
    %c0_i32 = arith.constant 0 : i32
    return %arg2, %arg1 : i32, i32
  }
  func.func @transform_2(%arg0: i32, %arg1: i32, %arg2: i32) -> (i32, i32) {
    %c0_i32 = arith.constant 0 : i32
    return %arg0, %arg1 : i32, i32
  }
}

module attributes {stable_mosaic.version = 11 : i64} {
  func.func @_dwconv3x3_kernel(%arg0: i32, %arg1: i32, %arg2: memref<1x8x8x96xbf16, #tpu.memory_space<vmem>>, %arg3: memref<1x1x8x96xbf16, #tpu.memory_space<vmem>>, %arg4: memref<1x1x8x96xbf16, #tpu.memory_space<vmem>>, %arg5: memref<9x96xf32, #tpu.memory_space<vmem>>, %arg6: memref<1x96xf32, #tpu.memory_space<vmem>>, %arg7: memref<1x8x8x96xbf16, #tpu.memory_space<vmem>>) attributes {dimension_semantics = [#tpu.dimension_semantics<parallel>, #tpu.dimension_semantics<parallel>], iteration_bounds = array<i64: 2, 1>, scalar_prefetch = 0 : i64, scratch_operands = 0 : i64, tpu.core_type = #tpu.core_type<tc>, window_params = [{transform_indices = @transform_0, window_bounds = array<i64: 1, 8, 8, 96>}, {transform_indices = @transform_1, window_bounds = array<i64: 1, 1, 8, 96>}, {transform_indices = @transform_2, window_bounds = array<i64: 1, 1, 8, 96>}, {pipeline_mode = #tpu.pipeline_mode<synchronous>, transform_indices = @transform_3, window_bounds = array<i64: 9, 96>}, {pipeline_mode = #tpu.pipeline_mode<synchronous>, transform_indices = @transform_4, window_bounds = array<i64: 1, 96>}, {transform_indices = @transform_5, window_bounds = array<i64: 1, 8, 8, 96>}]} {
    %c0 = arith.constant 0 : index
    %c0_0 = arith.constant 0 : index
    %c0_1 = arith.constant 0 : index
    %c0_2 = arith.constant 0 : index
    %0 = vector.load %arg2[%c0, %c0_0, %c0_1, %c0_2] : memref<1x8x8x96xbf16, #tpu.memory_space<vmem>>, vector<1x8x8x96xbf16>
    %1 = vector.shape_cast %0 : vector<1x8x8x96xbf16> to vector<8x8x96xbf16>
    %c0_3 = arith.constant 0 : index
    %c0_4 = arith.constant 0 : index
    %c0_5 = arith.constant 0 : index
    %c0_6 = arith.constant 0 : index
    %2 = vector.load %arg3[%c0_3, %c0_4, %c0_5, %c0_6] : memref<1x1x8x96xbf16, #tpu.memory_space<vmem>>, vector<1x1x8x96xbf16>
    %3 = vector.shape_cast %2 : vector<1x1x8x96xbf16> to vector<1x8x96xbf16>
    %c0_7 = arith.constant 0 : index
    %c0_8 = arith.constant 0 : index
    %c0_9 = arith.constant 0 : index
    %c0_10 = arith.constant 0 : index
    %4 = vector.load %arg4[%c0_7, %c0_8, %c0_9, %c0_10] : memref<1x1x8x96xbf16, #tpu.memory_space<vmem>>, vector<1x1x8x96xbf16>
    %5 = vector.shape_cast %4 : vector<1x1x8x96xbf16> to vector<1x8x96xbf16>
    %6 = vector.extract_strided_slice %1 {offsets = [0, 0, 0], sizes = [7, 8, 96], strides = [1, 1, 1]} : vector<8x8x96xbf16> to vector<7x8x96xbf16>
    %7 = tpu.concatenate %3, %6 in 0 : vector<1x8x96xbf16>, vector<7x8x96xbf16> -> vector<8x8x96xbf16>
    %8 = vector.extract_strided_slice %1 {offsets = [1, 0, 0], sizes = [7, 8, 96], strides = [1, 1, 1]} : vector<8x8x96xbf16> to vector<7x8x96xbf16>
    %9 = tpu.concatenate %8, %5 in 0 : vector<7x8x96xbf16>, vector<1x8x96xbf16> -> vector<8x8x96xbf16>
    %c0_11 = arith.constant 0 : index
    %c0_12 = arith.constant 0 : index
    %10 = vector.load %arg5[%c0_11, %c0_12] : memref<9x96xf32, #tpu.memory_space<vmem>>, vector<9x96xf32>
    %11 = tpu.iota {dimensions = array<i32: 1>} : vector<8x8x96xi32>
    %c0_i32 = arith.constant 0 : i32
    %12 = vector.broadcast %c0_i32 : i32 to vector<8x8x96xi32>
    %13 = arith.cmpi sgt, %11, %12 : vector<8x8x96xi32>
    %c7_i32 = arith.constant 7 : i32
    %14 = vector.broadcast %c7_i32 : i32 to vector<8x8x96xi32>
    %15 = arith.cmpi slt, %11, %14 : vector<8x8x96xi32>
    %cst = arith.constant 0.000000e+00 : f32
    %16 = vector.broadcast %cst : f32 to vector<8x8x96xf32>
    %17 = arith.extf %7 : vector<8x8x96xbf16> to vector<8x8x96xf32>
    %18 = vector.extract_strided_slice %10 {offsets = [1, 0], sizes = [1, 96], strides = [1, 1]} : vector<9x96xf32> to vector<1x96xf32>
    %19 = vector.shape_cast %18 : vector<1x96xf32> to vector<1x1x96xf32>
    %20 = vector.broadcast %19 : vector<1x1x96xf32> to vector<8x8x96xf32>
    %21 = arith.mulf %17, %20 : vector<8x8x96xf32>
    %22 = arith.addf %16, %21 : vector<8x8x96xf32>
    %c1_i32 = arith.constant 1 : i32
    %23 = tpu.dynamic_rotate %17 by %c1_i32 dim 1 : vector<8x8x96xf32>, i32 -> vector<8x8x96xf32>
    %cst_13 = arith.constant 0.000000e+00 : f32
    %24 = vector.broadcast %cst_13 : f32 to vector<8x8x96xf32>
    %25 = arith.select %13, %23, %24 : vector<8x8x96xi1>, vector<8x8x96xf32>
    %26 = vector.extract_strided_slice %10 {offsets = [0, 0], sizes = [1, 96], strides = [1, 1]} : vector<9x96xf32> to vector<1x96xf32>
    %27 = vector.shape_cast %26 : vector<1x96xf32> to vector<1x1x96xf32>
    %28 = vector.broadcast %27 : vector<1x1x96xf32> to vector<8x8x96xf32>
    %29 = arith.mulf %25, %28 : vector<8x8x96xf32>
    %30 = arith.addf %22, %29 : vector<8x8x96xf32>
    %c7_i32_14 = arith.constant 7 : i32
    %31 = tpu.dynamic_rotate %17 by %c7_i32_14 dim 1 : vector<8x8x96xf32>, i32 -> vector<8x8x96xf32>
    %cst_15 = arith.constant 0.000000e+00 : f32
    %32 = vector.broadcast %cst_15 : f32 to vector<8x8x96xf32>
    %33 = arith.select %15, %31, %32 : vector<8x8x96xi1>, vector<8x8x96xf32>
    %34 = vector.extract_strided_slice %10 {offsets = [2, 0], sizes = [1, 96], strides = [1, 1]} : vector<9x96xf32> to vector<1x96xf32>
    %35 = vector.shape_cast %34 : vector<1x96xf32> to vector<1x1x96xf32>
    %36 = vector.broadcast %35 : vector<1x1x96xf32> to vector<8x8x96xf32>
    %37 = arith.mulf %33, %36 : vector<8x8x96xf32>
    %38 = arith.addf %30, %37 : vector<8x8x96xf32>
    %39 = arith.extf %1 : vector<8x8x96xbf16> to vector<8x8x96xf32>
    %40 = vector.extract_strided_slice %10 {offsets = [4, 0], sizes = [1, 96], strides = [1, 1]} : vector<9x96xf32> to vector<1x96xf32>
    %41 = vector.shape_cast %40 : vector<1x96xf32> to vector<1x1x96xf32>
    %42 = vector.broadcast %41 : vector<1x1x96xf32> to vector<8x8x96xf32>
    %43 = arith.mulf %39, %42 : vector<8x8x96xf32>
    %44 = arith.addf %38, %43 : vector<8x8x96xf32>
    %c1_i32_16 = arith.constant 1 : i32
    %45 = tpu.dynamic_rotate %39 by %c1_i32_16 dim 1 : vector<8x8x96xf32>, i32 -> vector<8x8x96xf32>
    %cst_17 = arith.constant 0.000000e+00 : f32
    %46 = vector.broadcast %cst_17 : f32 to vector<8x8x96xf32>
    %47 = arith.select %13, %45, %46 : vector<8x8x96xi1>, vector<8x8x96xf32>
    %48 = vector.extract_strided_slice %10 {offsets = [3, 0], sizes = [1, 96], strides = [1, 1]} : vector<9x96xf32> to vector<1x96xf32>
    %49 = vector.shape_cast %48 : vector<1x96xf32> to vector<1x1x96xf32>
    %50 = vector.broadcast %49 : vector<1x1x96xf32> to vector<8x8x96xf32>
    %51 = arith.mulf %47, %50 : vector<8x8x96xf32>
    %52 = arith.addf %44, %51 : vector<8x8x96xf32>
    %c7_i32_18 = arith.constant 7 : i32
    %53 = tpu.dynamic_rotate %39 by %c7_i32_18 dim 1 : vector<8x8x96xf32>, i32 -> vector<8x8x96xf32>
    %cst_19 = arith.constant 0.000000e+00 : f32
    %54 = vector.broadcast %cst_19 : f32 to vector<8x8x96xf32>
    %55 = arith.select %15, %53, %54 : vector<8x8x96xi1>, vector<8x8x96xf32>
    %56 = vector.extract_strided_slice %10 {offsets = [5, 0], sizes = [1, 96], strides = [1, 1]} : vector<9x96xf32> to vector<1x96xf32>
    %57 = vector.shape_cast %56 : vector<1x96xf32> to vector<1x1x96xf32>
    %58 = vector.broadcast %57 : vector<1x1x96xf32> to vector<8x8x96xf32>
    %59 = arith.mulf %55, %58 : vector<8x8x96xf32>
    %60 = arith.addf %52, %59 : vector<8x8x96xf32>
    %61 = arith.extf %9 : vector<8x8x96xbf16> to vector<8x8x96xf32>
    %62 = vector.extract_strided_slice %10 {offsets = [7, 0], sizes = [1, 96], strides = [1, 1]} : vector<9x96xf32> to vector<1x96xf32>
    %63 = vector.shape_cast %62 : vector<1x96xf32> to vector<1x1x96xf32>
    %64 = vector.broadcast %63 : vector<1x1x96xf32> to vector<8x8x96xf32>
    %65 = arith.mulf %61, %64 : vector<8x8x96xf32>
    %66 = arith.addf %60, %65 : vector<8x8x96xf32>
    %c1_i32_20 = arith.constant 1 : i32
    %67 = tpu.dynamic_rotate %61 by %c1_i32_20 dim 1 : vector<8x8x96xf32>, i32 -> vector<8x8x96xf32>
    %cst_21 = arith.constant 0.000000e+00 : f32
    %68 = vector.broadcast %cst_21 : f32 to vector<8x8x96xf32>
    %69 = arith.select %13, %67, %68 : vector<8x8x96xi1>, vector<8x8x96xf32>
    %70 = vector.extract_strided_slice %10 {offsets = [6, 0], sizes = [1, 96], strides = [1, 1]} : vector<9x96xf32> to vector<1x96xf32>
    %71 = vector.shape_cast %70 : vector<1x96xf32> to vector<1x1x96xf32>
    %72 = vector.broadcast %71 : vector<1x1x96xf32> to vector<8x8x96xf32>
    %73 = arith.mulf %69, %72 : vector<8x8x96xf32>
    %74 = arith.addf %66, %73 : vector<8x8x96xf32>
    %c7_i32_22 = arith.constant 7 : i32
    %75 = tpu.dynamic_rotate %61 by %c7_i32_22 dim 1 : vector<8x8x96xf32>, i32 -> vector<8x8x96xf32>
    %cst_23 = arith.constant 0.000000e+00 : f32
    %76 = vector.broadcast %cst_23 : f32 to vector<8x8x96xf32>
    %77 = arith.select %15, %75, %76 : vector<8x8x96xi1>, vector<8x8x96xf32>
    %78 = vector.extract_strided_slice %10 {offsets = [8, 0], sizes = [1, 96], strides = [1, 1]} : vector<9x96xf32> to vector<1x96xf32>
    %79 = vector.shape_cast %78 : vector<1x96xf32> to vector<1x1x96xf32>
    %80 = vector.broadcast %79 : vector<1x1x96xf32> to vector<8x8x96xf32>
    %81 = arith.mulf %77, %80 : vector<8x8x96xf32>
    %82 = arith.addf %74, %81 : vector<8x8x96xf32>
    %c0_24 = arith.constant 0 : index
    %c0_25 = arith.constant 0 : index
    %83 = vector.load %arg6[%c0_24, %c0_25] : memref<1x96xf32, #tpu.memory_space<vmem>>, vector<1x96xf32>
    %84 = vector.shape_cast %83 : vector<1x96xf32> to vector<1x1x96xf32>
    %85 = vector.broadcast %84 : vector<1x1x96xf32> to vector<8x8x96xf32>
    %86 = arith.addf %82, %85 : vector<8x8x96xf32>
    %87 = arith.negf %86 : vector<8x8x96xf32>
    %88 = math.exp %87 : vector<8x8x96xf32>
    %cst_26 = arith.constant 1.000000e+00 : f32
    %89 = vector.broadcast %cst_26 : f32 to vector<8x8x96xf32>
    %90 = arith.addf %89, %88 : vector<8x8x96xf32>
    %91 = arith.divf %89, %90 : vector<8x8x96xf32>
    %92 = arith.mulf %86, %91 : vector<8x8x96xf32>
    %93 = arith.truncf %92 : vector<8x8x96xf32> to vector<8x8x96xbf16>
    %c0_27 = arith.constant 0 : index
    %c0_28 = arith.constant 0 : index
    %c0_29 = arith.constant 0 : index
    %c0_30 = arith.constant 0 : index
    %94 = vector.load %arg7[%c0_27, %c0_28, %c0_29, %c0_30] : memref<1x8x8x96xbf16, #tpu.memory_space<vmem>>, vector<1x8x8x96xbf16>
    %95 = vector.shape_cast %94 : vector<1x8x8x96xbf16> to vector<8x8x96xbf16>
    %96 = vector.shape_cast %93 : vector<8x8x96xbf16> to vector<1x8x8x96xbf16>
    tpu.vector_store %arg7[%c0_27, %c0_28, %c0_29, %c0_30], %96 {strides = array<i32>} : memref<1x8x8x96xbf16, #tpu.memory_space<vmem>>, vector<1x8x8x96xbf16>,
    return
  }
  func.func @transform_0(%arg0: i32, %arg1: i32) -> (i32, i32, i32, i32) {
    %c0_i32 = arith.constant 0 : i32
    %c0_i32_0 = arith.constant 0 : i32
    %c0_i32_1 = arith.constant 0 : i32
    return %arg0, %arg1, %c0_i32, %c0_i32_0 : i32, i32, i32, i32
  }
  func.func @transform_1(%arg0: i32, %arg1: i32) -> (i32, i32, i32, i32) {
    %c0_i32 = arith.constant 0 : i32
    %c0_i32_0 = arith.constant 0 : i32
    %c0_i32_1 = arith.constant 0 : i32
    return %arg0, %arg1, %c0_i32, %c0_i32_0 : i32, i32, i32, i32
  }
  func.func @transform_2(%arg0: i32, %arg1: i32) -> (i32, i32, i32, i32) {
    %c0_i32 = arith.constant 0 : i32
    %c0_i32_0 = arith.constant 0 : i32
    %c0_i32_1 = arith.constant 0 : i32
    return %arg0, %arg1, %c0_i32, %c0_i32_0 : i32, i32, i32, i32
  }
  func.func @transform_3(%arg0: i32, %arg1: i32) -> (i32, i32) {
    %c0_i32 = arith.constant 0 : i32
    %c0_i32_0 = arith.constant 0 : i32
    %c0_i32_1 = arith.constant 0 : i32
    return %c0_i32, %c0_i32_0 : i32, i32
  }
  func.func @transform_4(%arg0: i32, %arg1: i32) -> (i32, i32) {
    %c0_i32 = arith.constant 0 : i32
    %c0_i32_0 = arith.constant 0 : i32
    %c0_i32_1 = arith.constant 0 : i32
    return %c0_i32, %c0_i32_0 : i32, i32
  }
  func.func @transform_5(%arg0: i32, %arg1: i32) -> (i32, i32, i32, i32) {
    %c0_i32 = arith.constant 0 : i32
    %c0_i32_0 = arith.constant 0 : i32
    %c0_i32_1 = arith.constant 0 : i32
    return %arg0, %arg1, %c0_i32, %c0_i32_0 : i32, i32, i32, i32
  }
}

module attributes {stable_mosaic.version = 11 : i64} {
  func.func @_fused_attn_kernel(%arg0: i32, %arg1: i32, %arg2: i32, %arg3: memref<1x64x16xbf16, #tpu.memory_space<vmem>>, %arg4: memref<1x64x16xbf16, #tpu.memory_space<vmem>>, %arg5: memref<1x64x64xbf16, #tpu.memory_space<vmem>>, %arg6: memref<1x64x4xf32, #tpu.memory_space<vmem>>, %arg7: memref<1x64x64xbf16, #tpu.memory_space<vmem>>, %arg8: memref<4x64xf32, #tpu.memory_space<vmem>>, %arg9: memref<1x64xf32, #tpu.memory_space<vmem>>, %arg10: memref<1x64xf32, #tpu.memory_space<vmem>>, %arg11: memref<1x64xf32, #tpu.memory_space<vmem>>, %arg12: memref<1x64x64xbf16, #tpu.memory_space<vmem>>, %arg13: memref<16x64xf32, #tpu.memory_space<vmem>>) attributes {dimension_semantics = [#tpu.dimension_semantics<parallel>, #tpu.dimension_semantics<arbitrary>, #tpu.dimension_semantics<arbitrary>], iteration_bounds = array<i64: 2, 2, 1>, scalar_prefetch = 0 : i64, scratch_operands = 1 : i64, tpu.core_type = #tpu.core_type<tc>, window_params = [{transform_indices = @transform_0, window_bounds = array<i64: 1, 64, 16>}, {transform_indices = @transform_1, window_bounds = array<i64: 1, 64, 16>}, {transform_indices = @transform_2, window_bounds = array<i64: 1, 64, 64>}, {transform_indices = @transform_3, window_bounds = array<i64: 1, 64, 4>}, {transform_indices = @transform_4, window_bounds = array<i64: 1, 64, 64>}, {pipeline_mode = #tpu.pipeline_mode<synchronous>, transform_indices = @transform_5, window_bounds = array<i64: 4, 64>}, {pipeline_mode = #tpu.pipeline_mode<synchronous>, transform_indices = @transform_6, window_bounds = array<i64: 1, 64>}, {pipeline_mode = #tpu.pipeline_mode<synchronous>, transform_indices = @transform_7, window_bounds = array<i64: 1, 64>}, {pipeline_mode = #tpu.pipeline_mode<synchronous>, transform_indices = @transform_8, window_bounds = array<i64: 1, 64>}, {transform_indices = @transform_9, window_bounds = array<i64: 1, 64, 64>}]} {
    %c0_i32 = arith.constant 0 : i32
    %0 = arith.cmpi eq, %arg1, %c0_i32 : i32
    %c0_i32_0 = arith.constant 0 : i32
    %1 = arith.cmpi eq, %arg2, %c0_i32_0 : i32
    %2 = arith.andi %0, %1 : i1
    %3 = arith.extui %2 : i1 to i32
    %c0_i32_1 = arith.constant 0 : i32
    %4 = arith.cmpi ne, %3, %c0_i32_1 : i32
    scf.if %4 {
      %cst = arith.constant 0.000000e+00 : f32
      %11 = vector.broadcast %cst : f32 to vector<16x64xf32>
      %c0 = arith.constant 0 : index
      %c0_5 = arith.constant 0 : index
      %12 = vector.load %arg13[%c0, %c0_5] : memref<16x64xf32, #tpu.memory_space<vmem>>, vector<16x64xf32>
      tpu.vector_store %arg13[%c0, %c0_5], %11 {strides = array<i32>} : memref<16x64xf32, #tpu.memory_space<vmem>>, vector<16x64xf32>,
    } else {
    }
    %c0_i32_2 = arith.constant 0 : i32
    %5 = arith.cmpi eq, %arg1, %c0_i32_2 : i32
    %6 = arith.extui %5 : i1 to i32
    %c0_i32_3 = arith.constant 0 : i32
    %7 = arith.cmpi ne, %6, %c0_i32_3 : i32
    scf.if %7 {
      %c0 = arith.constant 0 : index
      %c0_5 = arith.constant 0 : index
      %c0_6 = arith.constant 0 : index
      %11 = vector.load %arg6[%c0, %c0_5, %c0_6] : memref<1x64x4xf32, #tpu.memory_space<vmem>>, vector<1x64x4xf32>
      %12 = vector.shape_cast %11 : vector<1x64x4xf32> to vector<64x4xf32>
      %c0_7 = arith.constant 0 : index
      %c0_8 = arith.constant 0 : index
      %13 = vector.load %arg8[%c0_7, %c0_8] : memref<4x64xf32, #tpu.memory_space<vmem>>, vector<4x64xf32>
      %cst = arith.constant dense<0.000000e+00> : vector<64x64xf32>
      %14 = tpu.matmul %12, %13, %cst {dimension_numbers = #tpu.dot_dimension_numbers<[1], [0], [0], [1], [0, 0, 1, 1], [], []>} : vector<64x4xf32>, vector<4x64xf32>, vector<64x64xf32> -> vector<64x64xf32>
      %c0_9 = arith.constant 0 : index
      %c0_10 = arith.constant 0 : index
      %c0_11 = arith.constant 0 : index
      %15 = vector.load %arg5[%c0_9, %c0_10, %c0_11] : memref<1x64x64xbf16, #tpu.memory_space<vmem>>, vector<1x64x64xbf16>
      %16 = vector.shape_cast %15 : vector<1x64x64xbf16> to vector<64x64xbf16>
      %17 = arith.extf %16 : vector<64x64xbf16> to vector<64x64xf32>
      %18 = arith.mulf %17, %14 : vector<64x64xf32>
      %c0_12 = arith.constant 0 : index
      %c0_13 = arith.constant 0 : index
      %19 = vector.load %arg13[%c0_12, %c0_13] : memref<16x64xf32, #tpu.memory_space<vmem>>, vector<16x64xf32>
      %c0_14 = arith.constant 0 : index
      %c0_15 = arith.constant 0 : index
      %c0_16 = arith.constant 0 : index
      %20 = vector.load %arg3[%c0_14, %c0_15, %c0_16] : memref<1x64x16xbf16, #tpu.memory_space<vmem>>, vector<1x64x16xbf16>
      %21 = vector.shape_cast %20 : vector<1x64x16xbf16> to vector<64x16xbf16>
      %22 = arith.extf %21 : vector<64x16xbf16> to vector<64x16xf32>
      %cst_17 = arith.constant dense<0.000000e+00> : vector<16x64xf32>
      %23 = tpu.matmul %22, %18, %cst_17 {dimension_numbers = #tpu.dot_dimension_numbers<[0], [0], [1], [1], [0, 1, 1, 1], [], []>} : vector<64x16xf32>, vector<64x64xf32>, vector<16x64xf32> -> vector<16x64xf32>
      %24 = arith.addf %19, %23 : vector<16x64xf32>
      %c0_18 = arith.constant 0 : index
      %c0_19 = arith.constant 0 : index
      %25 = vector.load %arg13[%c0_18, %c0_19] : memref<16x64xf32, #tpu.memory_space<vmem>>, vector<16x64xf32>
      tpu.vector_store %arg13[%c0_18, %c0_19], %24 {strides = array<i32>} : memref<16x64xf32, #tpu.memory_space<vmem>>, vector<16x64xf32>,
    } else {
    }
    %c1_i32 = arith.constant 1 : i32
    %8 = arith.cmpi eq, %arg1, %c1_i32 : i32
    %9 = arith.extui %8 : i1 to i32
    %c0_i32_4 = arith.constant 0 : i32
    %10 = arith.cmpi ne, %9, %c0_i32_4 : i32
    scf.if %10 {
      %c0 = arith.constant 0 : index
      %c0_5 = arith.constant 0 : index
      %c0_6 = arith.constant 0 : index
      %11 = vector.load %arg4[%c0, %c0_5, %c0_6] : memref<1x64x16xbf16, #tpu.memory_space<vmem>>, vector<1x64x16xbf16>
      %12 = vector.shape_cast %11 : vector<1x64x16xbf16> to vector<64x16xbf16>
      %13 = arith.extf %12 : vector<64x16xbf16> to vector<64x16xf32>
      %c0_7 = arith.constant 0 : index
      %c0_8 = arith.constant 0 : index
      %14 = vector.load %arg13[%c0_7, %c0_8] : memref<16x64xf32, #tpu.memory_space<vmem>>, vector<16x64xf32>
      %cst = arith.constant dense<0.000000e+00> : vector<64x64xf32>
      %15 = tpu.matmul %13, %14, %cst {dimension_numbers = #tpu.dot_dimension_numbers<[1], [0], [0], [1], [0, 0, 1, 1], [], []>} : vector<64x16xf32>, vector<16x64xf32>, vector<64x64xf32> -> vector<64x64xf32>
      %c0_9 = arith.constant 0 : index
      %c0_10 = arith.constant 0 : index
      %c0_11 = arith.constant 0 : index
      %16 = vector.load %arg5[%c0_9, %c0_10, %c0_11] : memref<1x64x64xbf16, #tpu.memory_space<vmem>>, vector<1x64x64xbf16>
      %17 = vector.shape_cast %16 : vector<1x64x64xbf16> to vector<64x64xbf16>
      %18 = arith.extf %17 : vector<64x64xbf16> to vector<64x64xf32>
      %c0_12 = arith.constant 0 : index
      %c0_13 = arith.constant 0 : index
      %19 = vector.load %arg9[%c0_12, %c0_13] : memref<1x64xf32, #tpu.memory_space<vmem>>, vector<1x64xf32>
      %20 = vector.broadcast %19 : vector<1x64xf32> to vector<64x64xf32>
      %21 = arith.mulf %18, %20 : vector<64x64xf32>
      %22 = arith.addf %15, %21 : vector<64x64xf32>
      %cst_14 = arith.constant dense<0.000000e+00> : vector<64xf32>
      %23 = vector.multi_reduction <add>, %22, %cst_14 [1] : vector<64x64xf32> to vector<64xf32>
      %24 = vector.shape_cast %23 : vector<64xf32> to vector<64x1xf32>
      %cst_15 = arith.constant 6.400000e+01 : f32
      %25 = vector.broadcast %cst_15 : f32 to vector<64x1xf32>
      %26 = arith.divf %24, %25 : vector<64x1xf32>
      %27 = vector.broadcast %26 : vector<64x1xf32> to vector<64x64xf32>
      %28 = arith.subf %22, %27 : vector<64x64xf32>
      %29 = arith.mulf %28, %28 : vector<64x64xf32>
      %cst_16 = arith.constant dense<0.000000e+00> : vector<64xf32>
      %30 = vector.multi_reduction <add>, %29, %cst_16 [1] : vector<64x64xf32> to vector<64xf32>
      %31 = vector.shape_cast %30 : vector<64xf32> to vector<64x1xf32>
      %cst_17 = arith.constant 6.400000e+01 : f32
      %32 = vector.broadcast %cst_17 : f32 to vector<64x1xf32>
      %33 = arith.divf %31, %32 : vector<64x1xf32>
      %cst_18 = arith.constant 9.99999974E-6 : f32
      %34 = vector.broadcast %cst_18 : f32 to vector<64x1xf32>
      %35 = arith.addf %33, %34 : vector<64x1xf32>
      %36 = math.rsqrt %35 : vector<64x1xf32>
      %37 = vector.broadcast %36 : vector<64x1xf32> to vector<64x64xf32>
      %38 = arith.mulf %28, %37 : vector<64x64xf32>
      %c0_19 = arith.constant 0 : index
      %c0_20 = arith.constant 0 : index
      %39 = vector.load %arg10[%c0_19, %c0_20] : memref<1x64xf32, #tpu.memory_space<vmem>>, vector<1x64xf32>
      %40 = vector.broadcast %39 : vector<1x64xf32> to vector<64x64xf32>
      %41 = arith.mulf %38, %40 : vector<64x64xf32>
      %c0_21 = arith.constant 0 : index
      %c0_22 = arith.constant 0 : index
      %42 = vector.load %arg11[%c0_21, %c0_22] : memref<1x64xf32, #tpu.memory_space<vmem>>, vector<1x64xf32>
      %43 = vector.broadcast %42 : vector<1x64xf32> to vector<64x64xf32>
      %44 = arith.addf %41, %43 : vector<64x64xf32>
      %c0_23 = arith.constant 0 : index
      %c0_24 = arith.constant 0 : index
      %c0_25 = arith.constant 0 : index
      %45 = vector.load %arg7[%c0_23, %c0_24, %c0_25] : memref<1x64x64xbf16, #tpu.memory_space<vmem>>, vector<1x64x64xbf16>
      %46 = vector.shape_cast %45 : vector<1x64x64xbf16> to vector<64x64xbf16>
      %47 = arith.extf %46 : vector<64x64xbf16> to vector<64x64xf32>
      %48 = arith.mulf %44, %47 : vector<64x64xf32>
      %49 = arith.truncf %48 : vector<64x64xf32> to vector<64x64xbf16>
      %c0_26 = arith.constant 0 : index
      %c0_27 = arith.constant 0 : index
      %c0_28 = arith.constant 0 : index
      %50 = vector.load %arg12[%c0_26, %c0_27, %c0_28] : memref<1x64x64xbf16, #tpu.memory_space<vmem>>, vector<1x64x64xbf16>
      %51 = vector.shape_cast %50 : vector<1x64x64xbf16> to vector<64x64xbf16>
      %52 = vector.shape_cast %49 : vector<64x64xbf16> to vector<1x64x64xbf16>
      tpu.vector_store %arg12[%c0_26, %c0_27, %c0_28], %52 {strides = array<i32>} : memref<1x64x64xbf16, #tpu.memory_space<vmem>>, vector<1x64x64xbf16>,
    } else {
    }
    return
  }
  func.func @transform_0(%arg0: i32, %arg1: i32, %arg2: i32) -> (i32, i32, i32) {
    %c1_i32 = arith.constant 1 : i32
    %0 = arith.subi %c1_i32, %arg1 : i32
    %1 = arith.muli %arg2, %0 : i32
    %c0_i32 = arith.constant 0 : i32
    %2 = arith.muli %c0_i32, %arg1 : i32
    %3 = arith.addi %1, %2 : i32
    %c0_i32_0 = arith.constant 0 : i32
    %c0_i32_1 = arith.constant 0 : i32
    return %arg0, %3, %c0_i32_0 : i32, i32, i32
  }
  func.func @transform_1(%arg0: i32, %arg1: i32, %arg2: i32) -> (i32, i32, i32) {
    %0 = arith.muli %arg2, %arg1 : i32
    %c0_i32 = arith.constant 0 : i32
    %c0_i32_0 = arith.constant 0 : i32
    return %arg0, %0, %c0_i32 : i32, i32, i32
  }
  func.func @transform_2(%arg0: i32, %arg1: i32, %arg2: i32) -> (i32, i32, i32) {
    %c0_i32 = arith.constant 0 : i32
    %c0_i32_0 = arith.constant 0 : i32
    return %arg0, %arg2, %c0_i32 : i32, i32, i32
  }
  func.func @transform_3(%arg0: i32, %arg1: i32, %arg2: i32) -> (i32, i32, i32) {
    %c1_i32 = arith.constant 1 : i32
    %0 = arith.subi %c1_i32, %arg1 : i32
    %1 = arith.muli %arg2, %0 : i32
    %c0_i32 = arith.constant 0 : i32
    %2 = arith.muli %c0_i32, %arg1 : i32
    %3 = arith.addi %1, %2 : i32
    %c0_i32_0 = arith.constant 0 : i32
    %c0_i32_1 = arith.constant 0 : i32
    return %arg0, %3, %c0_i32_0 : i32, i32, i32
  }
  func.func @transform_4(%arg0: i32, %arg1: i32, %arg2: i32) -> (i32, i32, i32) {
    %0 = arith.muli %arg2, %arg1 : i32
    %c0_i32 = arith.constant 0 : i32
    %c0_i32_0 = arith.constant 0 : i32
    return %arg0, %0, %c0_i32 : i32, i32, i32
  }
  func.func @transform_5(%arg0: i32, %arg1: i32, %arg2: i32) -> (i32, i32) {
    %c0_i32 = arith.constant 0 : i32
    %c0_i32_0 = arith.constant 0 : i32
    %c0_i32_1 = arith.constant 0 : i32
    return %c0_i32, %c0_i32_0 : i32, i32
  }
  func.func @transform_6(%arg0: i32, %arg1: i32, %arg2: i32) -> (i32, i32) {
    %c0_i32 = arith.constant 0 : i32
    %c0_i32_0 = arith.constant 0 : i32
    %c0_i32_1 = arith.constant 0 : i32
    return %c0_i32, %c0_i32_0 : i32, i32
  }
  func.func @transform_7(%arg0: i32, %arg1: i32, %arg2: i32) -> (i32, i32) {
    %c0_i32 = arith.constant 0 : i32
    %c0_i32_0 = arith.constant 0 : i32
    %c0_i32_1 = arith.constant 0 : i32
    return %c0_i32, %c0_i32_0 : i32, i32
  }
  func.func @transform_8(%arg0: i32, %arg1: i32, %arg2: i32) -> (i32, i32) {
    %c0_i32 = arith.constant 0 : i32
    %c0_i32_0 = arith.constant 0 : i32
    %c0_i32_1 = arith.constant 0 : i32
    return %c0_i32, %c0_i32_0 : i32, i32
  }
  func.func @transform_9(%arg0: i32, %arg1: i32, %arg2: i32) -> (i32, i32, i32) {
    %0 = arith.muli %arg2, %arg1 : i32
    %c0_i32 = arith.constant 0 : i32
    %c0_i32_0 = arith.constant 0 : i32
    return %arg0, %0, %c0_i32 : i32, i32, i32
  }
}

module attributes {stable_mosaic.version = 11 : i64} {
  func.func @_matmul_kernel(%arg0: i32, %arg1: i32, %arg2: i32, %arg3: memref<128x64xbf16, #tpu.memory_space<vmem>>, %arg4: memref<64x32xbf16, #tpu.memory_space<vmem>>, %arg5: memref<128x32xf32, #tpu.memory_space<vmem>>, %arg6: memref<128x32xf32, #tpu.memory_space<vmem>>) attributes {dimension_semantics = [#tpu.dimension_semantics<parallel>, #tpu.dimension_semantics<parallel>, #tpu.dimension_semantics<arbitrary>], iteration_bounds = array<i64: 1, 1, 1>, scalar_prefetch = 0 : i64, scratch_operands = 1 : i64, tpu.core_type = #tpu.core_type<tc>, window_params = [{transform_indices = @transform_0, window_bounds = array<i64: 128, 64>}, {transform_indices = @transform_1, window_bounds = array<i64: 64, 32>}, {transform_indices = @transform_2, window_bounds = array<i64: 128, 32>}]} {
    %c0_i32 = arith.constant 0 : i32
    %0 = arith.cmpi eq, %arg2, %c0_i32 : i32
    %1 = arith.extui %0 : i1 to i32
    %c0_i32_0 = arith.constant 0 : i32
    %2 = arith.cmpi ne, %1, %c0_i32_0 : i32
    scf.if %2 {
      %cst_10 = arith.constant 0.000000e+00 : f32
      %12 = vector.broadcast %cst_10 : f32 to vector<128x32xf32>
      %c0_11 = arith.constant 0 : index
      %c0_12 = arith.constant 0 : index
      %13 = vector.load %arg6[%c0_11, %c0_12] : memref<128x32xf32, #tpu.memory_space<vmem>>, vector<128x32xf32>
      tpu.vector_store %arg6[%c0_11, %c0_12], %12 {strides = array<i32>} : memref<128x32xf32, #tpu.memory_space<vmem>>, vector<128x32xf32>,
    } else {
    }
    %c0 = arith.constant 0 : index
    %c0_1 = arith.constant 0 : index
    %3 = vector.load %arg6[%c0, %c0_1] : memref<128x32xf32, #tpu.memory_space<vmem>>, vector<128x32xf32>
    %c0_2 = arith.constant 0 : index
    %c0_3 = arith.constant 0 : index
    %4 = vector.load %arg3[%c0_2, %c0_3] : memref<128x64xbf16, #tpu.memory_space<vmem>>, vector<128x64xbf16>
    %c0_4 = arith.constant 0 : index
    %c0_5 = arith.constant 0 : index
    %5 = vector.load %arg4[%c0_4, %c0_5] : memref<64x32xbf16, #tpu.memory_space<vmem>>, vector<64x32xbf16>
    %cst = arith.constant dense<0.000000e+00> : vector<128x32xf32>
    %6 = tpu.matmul %4, %5, %cst {dimension_numbers = #tpu.dot_dimension_numbers<[1], [0], [0], [1], [0, 0, 1, 1], [], []>} : vector<128x64xbf16>, vector<64x32xbf16>, vector<128x32xf32> -> vector<128x32xf32>
    %7 = arith.addf %3, %6 : vector<128x32xf32>
    %c0_6 = arith.constant 0 : index
    %c0_7 = arith.constant 0 : index
    %8 = vector.load %arg6[%c0_6, %c0_7] : memref<128x32xf32, #tpu.memory_space<vmem>>, vector<128x32xf32>
    tpu.vector_store %arg6[%c0_6, %c0_7], %7 {strides = array<i32>} : memref<128x32xf32, #tpu.memory_space<vmem>>, vector<128x32xf32>,
    %c0_i32_8 = arith.constant 0 : i32
    %9 = arith.cmpi eq, %arg2, %c0_i32_8 : i32
    %10 = arith.extui %9 : i1 to i32
    %c0_i32_9 = arith.constant 0 : i32
    %11 = arith.cmpi ne, %10, %c0_i32_9 : i32
    scf.if %11 {
      %c0_10 = arith.constant 0 : index
      %c0_11 = arith.constant 0 : index
      %12 = vector.load %arg6[%c0_10, %c0_11] : memref<128x32xf32, #tpu.memory_space<vmem>>, vector<128x32xf32>
      %c0_12 = arith.constant 0 : index
      %c0_13 = arith.constant 0 : index
      %13 = vector.load %arg5[%c0_12, %c0_13] : memref<128x32xf32, #tpu.memory_space<vmem>>, vector<128x32xf32>
      tpu.vector_store %arg5[%c0_12, %c0_13], %12 {strides = array<i32>} : memref<128x32xf32, #tpu.memory_space<vmem>>, vector<128x32xf32>,
    } else {
    }
    return
  }
  func.func @transform_0(%arg0: i32, %arg1: i32, %arg2: i32) -> (i32, i32) {
    %c0_i32 = arith.constant 0 : i32
    return %arg0, %arg2 : i32, i32
  }
  func.func @transform_1(%arg0: i32, %arg1: i32, %arg2: i32) -> (i32, i32) {
    %c0_i32 = arith.constant 0 : i32
    return %arg2, %arg1 : i32, i32
  }
  func.func @transform_2(%arg0: i32, %arg1: i32, %arg2: i32) -> (i32, i32) {
    %c0_i32 = arith.constant 0 : i32
    return %arg0, %arg1 : i32, i32
  }
}

</mosaic_0001>

<llo_original>
// kernel: mamba2_forward.9
$region0: #{mamba2_forward.9}
  #allocation0 [shape = 'u32[]', space=smem, size = 0x4, offset = 0x4, fixed_abs, tag = 'smem constant byte address 0x4 - core index']
  #allocation1 [shape = 'u32[72,128]{1,0:T(1,128)}', space=vmem, size = 0x9000, scoped, tag = 'internal scratch']
  #allocation2 [shape = 'f32[128,164]{1,0:T(8,128)}', space=vmem, size = 0x20000, scoped, tag = 'scratch operand']
  %s0 = inlined_call_operand.vmem [shape: bf16[128,32], index: 0, kind: input, shape index: {}]
  %s1 = inlined_call_operand.vmem [shape: bf16[32,164], index: 1, kind: input, shape index: {}]
  %s2 = inlined_call_operand.vmem [shape: bf16[128,164], index: 2, kind: output, shape index: {}]
  %s3 = sld [smem:[#allocation0]]
  $region26: #{mamba2_forward.9} parent=0
    _
  %s5 = ssub.s32 1, %s3
  %s6 = scalar_select 0, %s5, %s3
  // Predicated region
  $region2: #{mamba2_forward.9} parent=0 // pred_check
    _
  $region3: #{mamba2_forward.9} parent=0 // pred_check_branch
    %8 = sbr.rel (0) target = $region5
  $region4: #{mamba2_forward.9} parent=0 // pred_region
    _
  $region5: #{mamba2_forward.9} parent=0 // pred_fallthru
    _
  // Predicated region
  $region6: #{mamba2_forward.9} parent=0 // pred_check
    _
  $region7: #{mamba2_forward.9} parent=0 // pred_check_branch
    %10 = sbr.rel (0) target = $region9
  $region8: #{mamba2_forward.9} parent=0 // pred_region
    _
  $region9: #{mamba2_forward.9} parent=0 // pred_fallthru
    _
  %p12 = scmp.eq.s32.totalorder 0, 0
  // Predicated region
  $region10: #{mamba2_forward.9} parent=0 // pred_check
    %p13 = pneg %p12
  $region11: #{mamba2_forward.9} parent=0 // pred_check_branch
    %15 = sbr.rel (%p13) target = $region13
  $region12: #{mamba2_forward.9} parent=0 // pred_region
    %16 = vst [vmem:[#allocation2] sm:$0xff] 0.0
    %vm17 = vcmask 293888
    %18 = vst.msk [vmem:[#allocation2 + $0x8] sm:$0xff] %vm17, 0.0
    %19 = vst [vmem:[#allocation2 + $0x10] sm:$0xff] 0.0
    %20 = vst.msk [vmem:[#allocation2 + $0x18] sm:$0xff] %vm17, 0.0
    %21 = vst [vmem:[#allocation2 + $0x20] sm:$0xff] 0.0
    %22 = vst.msk [vmem:[#allocation2 + $0x28] sm:$0xff] %vm17, 0.0
    %23 = vst [vmem:[#allocation2 + $0x30] sm:$0xff] 0.0
    %24 = vst.msk [vmem:[#allocation2 + $0x38] sm:$0xff] %vm17, 0.0
    %25 = vst [vmem:[#allocation2 + $0x40] sm:$0xff] 0.0
    %26 = vst.msk [vmem:[#allocation2 + $0x48] sm:$0xff] %vm17, 0.0
    %27 = vst [vmem:[#allocation2 + $0x50] sm:$0xff] 0.0
    %28 = vst.msk [vmem:[#allocation2 + $0x58] sm:$0xff] %vm17, 0.0
    %29 = vst [vmem:[#allocation2 + $0x60] sm:$0xff] 0.0
    %30 = vst.msk [vmem:[#allocation2 + $0x68] sm:$0xff] %vm17, 0.0
    %31 = vst [vmem:[#allocation2 + $0x70] sm:$0xff] 0.0
    %32 = vst.msk [vmem:[#allocation2 + $0x78] sm:$0xff] %vm17, 0.0
    %33 = vst [vmem:[#allocation2 + $0x80] sm:$0xff] 0.0
    %34 = vst.msk [vmem:[#allocation2 + $0x88] sm:$0xff] %vm17, 0.0
    %35 = vst [vmem:[#allocation2 + $0x90] sm:$0xff] 0.0
    %36 = vst.msk [vmem:[#allocation2 + $0x98] sm:$0xff] %vm17, 0.0
    %37 = vst [vmem:[#allocation2 + $0xa0] sm:$0xff] 0.0
    %38 = vst.msk [vmem:[#allocation2 + $0xa8] sm:$0xff] %vm17, 0.0
    %39 = vst [vmem:[#allocation2 + $0xb0] sm:$0xff] 0.0
    %40 = vst.msk [vmem:[#allocation2 + $0xb8] sm:$0xff] %vm17, 0.0
    %41 = vst [vmem:[#allocation2 + $0xc0] sm:$0xff] 0.0
    %42 = vst.msk [vmem:[#allocation2 + $0xc8] sm:$0xff] %vm17, 0.0
    %43 = vst [vmem:[#allocation2 + $0xd0] sm:$0xff] 0.0
    %44 = vst.msk [vmem:[#allocation2 + $0xd8] sm:$0xff] %vm17, 0.0
    %45 = vst [vmem:[#allocation2 + $0xe0] sm:$0xff] 0.0
    %46 = vst.msk [vmem:[#allocation2 + $0xe8] sm:$0xff] %vm17, 0.0
    %47 = vst [vmem:[#allocation2 + $0xf0] sm:$0xff] 0.0
    %48 = vst.msk [vmem:[#allocation2 + $0xf8] sm:$0xff] %vm17, 0.0
  $region13: #{mamba2_forward.9} parent=0 // pred_fallthru
    _
  %v49 = vld [vmem:[#allocation2] sm:$0xff]
  %v50 = vld [vmem:[#allocation2 + $0x8] sm:$0xff]
  %v51 = vld [vmem:[#allocation2 + $0x10] sm:$0xff]
  %v52 = vld [vmem:[#allocation2 + $0x18] sm:$0xff]
  %v53 = vld [vmem:[#allocation2 + $0x20] sm:$0xff]
  %v54 = vld [vmem:[#allocation2 + $0x28] sm:$0xff]
  %v55 = vld [vmem:[#allocation2 + $0x30] sm:$0xff]
  %v56 = vld [vmem:[#allocation2 + $0x38] sm:$0xff]
  %v57 = vld [vmem:[#allocation2 + $0x40] sm:$0xff]
  %v58 = vld [vmem:[#allocation2 + $0x48] sm:$0xff]
  %v59 = vld [vmem:[#allocation2 + $0x50] sm:$0xff]
  %v60 = vld [vmem:[#allocation2 + $0x58] sm:$0xff]
  %v61 = vld [vmem:[#allocation2 + $0x60] sm:$0xff]
  %v62 = vld [vmem:[#allocation2 + $0x68] sm:$0xff]
  %v63 = vld [vmem:[#allocation2 + $0x70] sm:$0xff]
  %v64 = vld [vmem:[#allocation2 + $0x78] sm:$0xff]
  %v65 = vld [vmem:[#allocation2 + $0x80] sm:$0xff]
  %v66 = vld [vmem:[#allocation2 + $0x88] sm:$0xff]
  %v67 = vld [vmem:[#allocation2 + $0x90] sm:$0xff]
  %v68 = vld [vmem:[#allocation2 + $0x98] sm:$0xff]
  %v69 = vld [vmem:[#allocation2 + $0xa0] sm:$0xff]
  %v70 = vld [vmem:[#allocation2 + $0xa8] sm:$0xff]
  %v71 = vld [vmem:[#allocation2 + $0xb0] sm:$0xff]
  %v72 = vld [vmem:[#allocation2 + $0xb8] sm:$0xff]
  %v73 = vld [vmem:[#allocation2 + $0xc0] sm:$0xff]
  %v74 = vld [vmem:[#allocation2 + $0xc8] sm:$0xff]
  %v75 = vld [vmem:[#allocation2 + $0xd0] sm:$0xff]
  %v76 = vld [vmem:[#allocation2 + $0xd8] sm:$0xff]
  %v77 = vld [vmem:[#allocation2 + $0xe0] sm:$0xff]
  %v78 = vld [vmem:[#allocation2 + $0xe8] sm:$0xff]
  %v79 = vld [vmem:[#allocation2 + $0xf0] sm:$0xff]
  %v80 = vld [vmem:[#allocation2 + $0xf8] sm:$0xff]
  %v81 = vld [vmem:[%s0] sm:$0xf]
  %v82 = vld [vmem:[%s0 + $0x4] sm:$0xf]
  %v83 = vld [vmem:[%s0 + $0x8] sm:$0xf]
  %v84 = vld [vmem:[%s0 + $0xc] sm:$0xf]
  %v85 = vld [vmem:[%s0 + $0x10] sm:$0xf]
  %v86 = vld [vmem:[%s0 + $0x14] sm:$0xf]
  %v87 = vld [vmem:[%s0 + $0x18] sm:$0xf]
  %v88 = vld [vmem:[%s0 + $0x1c] sm:$0xf]
  %v89 = vld [vmem:[%s0 + $0x20] sm:$0xf]
  %v90 = vld [vmem:[%s0 + $0x24] sm:$0xf]
  %v91 = vld [vmem:[%s0 + $0x28] sm:$0xf]
  %v92 = vld [vmem:[%s0 + $0x2c] sm:$0xf]
  %v93 = vld [vmem:[%s0 + $0x30] sm:$0xf]
  %v94 = vld [vmem:[%s0 + $0x34] sm:$0xf]
  %v95 = vld [vmem:[%s0 + $0x38] sm:$0xf]
  %v96 = vld [vmem:[%s0 + $0x3c] sm:$0xf]
  %v97 = vld [vmem:[%s1] sm:$0xff]
  %v98 = vld [vmem:[%s1 + $0x8] sm:$0xff]
  %v99 = vld [vmem:[%s1 + $0x10] sm:$0xff]
  %v100 = vld [vmem:[%s1 + $0x18] sm:$0xff]
  %v117 = vunpack.c.l.b16 %v81
  %v118 = vunpack.c.l.b16 %v82
  %v119 = vunpack.c.l.b16 %v83
  %v120 = vunpack.c.l.b16 %v84
  %v121 = vunpack.c.l.b16 %v85
  %v122 = vunpack.c.l.b16 %v86
  %v123 = vunpack.c.l.b16 %v87
  %v124 = vunpack.c.l.b16 %v88
  %v125 = vunpack.c.l.b16 %v89
  %v126 = vunpack.c.l.b16 %v90
  %v127 = vunpack.c.l.b16 %v91
  %v128 = vunpack.c.l.b16 %v92
  %v129 = vunpack.c.l.b16 %v93
  %v130 = vunpack.c.l.b16 %v94
  %v131 = vunpack.c.l.b16 %v95
  %v132 = vunpack.c.l.b16 %v96
  %v133 = vpack.c.b16 %v118, %v117
  %v134 = vpack.c.b16 %v120, %v119
  %v135 = vpack.c.b16 %v122, %v121
  %v136 = vpack.c.b16 %v124, %v123
  %v137 = vpack.c.b16 %v126, %v125
  %v138 = vpack.c.b16 %v128, %v127
  %v139 = vpack.c.b16 %v130, %v129
  %v140 = vpack.c.b16 %v132, %v131
  %v145 = vunpack.c.l.b16 %v97
  %v146 = vunpack.c.h.b16 %v97
  %v147 = vunpack.c.l.b16 %v98
  %v148 = vunpack.c.h.b16 %v98
  %v149 = vunpack.c.l.b16 %v99
  %v150 = vunpack.c.h.b16 %v99
  %v151 = vunpack.c.l.b16 %v100
  %v152 = vunpack.c.h.b16 %v100
  %v153 = vpack.c.b16 %v147, %v145
  %v154 = vpack.c.b16 %v148, %v146
  %v155 = vpack.c.b16 %v151, %v149
  %v156 = vpack.c.b16 %v152, %v150
  %vm161 = vcmask 261120
  %v163 = vsel %vm161, %v133, 0
  %v166 = vsel %vm161, %v134, 0
  %v169 = vsel %vm161, %v135, 0
  %v172 = vsel %vm161, %v136, 0
  %v175 = vsel %vm161, %v137, 0
  %v178 = vsel %vm161, %v138, 0
  %v181 = vsel %vm161, %v139, 0
  %v184 = vsel %vm161, %v140, 0
  %186 = vmatpush.bf16.msra.mxu0 0
  %187 = vmatpush.bf16.msra.mxu0 0
  %188 = vmatpush.bf16.msra.mxu0 0
  %189 = vmatpush.bf16.msra.mxu0 0
  %190 = vmatpush.bf16.msra.mxu0 0
  %191 = vmatpush.bf16.msra.mxu0 0
  %192 = vmatpush.bf16.msra.mxu0 %v155
  %193 = vmatpush.bf16.msra.mxu0 %v153
  %194 = vmatmul.bf16.gmra.mxu0 %v163
  %v195 = vpop.f32.mrf.mxu0
  %v196 = vadd.f32 0.0, %v195
  %v197 = vpop.f32.mrf.mxu0
  %v198 = vadd.f32 0.0, %v197
  %199 = vmatmul.bf16.gmra.mxu0 %v166
  %v200 = vpop.f32.mrf.mxu0
  %v201 = vadd.f32 0.0, %v200
  %v202 = vpop.f32.mrf.mxu0
  %v203 = vadd.f32 0.0, %v202
  %204 = vmatmul.bf16.gmra.mxu0 %v169
  %v205 = vpop.f32.mrf.mxu0
  %v206 = vadd.f32 0.0, %v205
  %v207 = vpop.f32.mrf.mxu0
  %v208 = vadd.f32 0.0, %v207
  %209 = vmatmul.bf16.gmra.mxu0 %v172
  %v210 = vpop.f32.mrf.mxu0
  %v211 = vadd.f32 0.0, %v210
  %v212 = vpop.f32.mrf.mxu0
  %v213 = vadd.f32 0.0, %v212
  %214 = vmatmul.bf16.gmra.mxu0 %v175
  %v215 = vpop.f32.mrf.mxu0
  %v216 = vadd.f32 0.0, %v215
  %v217 = vpop.f32.mrf.mxu0
  %v218 = vadd.f32 0.0, %v217
  %219 = vmatmul.bf16.gmra.mxu0 %v178
  %v220 = vpop.f32.mrf.mxu0
  %v221 = vadd.f32 0.0, %v220
  %v222 = vpop.f32.mrf.mxu0
  %v223 = vadd.f32 0.0, %v222
  %224 = vmatmul.bf16.gmra.mxu0 %v181
  %v225 = vpop.f32.mrf.mxu0
  %v226 = vadd.f32 0.0, %v225
  %v227 = vpop.f32.mrf.mxu0
  %v228 = vadd.f32 0.0, %v227
  %229 = vmatmul.bf16.gmra.mxu0 %v184
  %v230 = vpop.f32.mrf.mxu0
  %v231 = vadd.f32 0.0, %v230
  %v232 = vpop.f32.mrf.mxu0
  %v233 = vadd.f32 0.0, %v232
  %234 = vdwg.mxu0
  %235 = vmatpush.bf16.msra.mxu0 0
  %236 = vmatpush.bf16.msra.mxu0 0
  %237 = vmatpush.bf16.msra.mxu0 0
  %238 = vmatpush.bf16.msra.mxu0 0
  %239 = vmatpush.bf16.msra.mxu0 0
  %240 = vmatpush.bf16.msra.mxu0 0
  %241 = vmatpush.bf16.msra.mxu0 %v156
  %242 = vmatpush.bf16.msra.mxu0 %v154
  %243 = vmatmul.bf16.gmra.mxu0 %v163
  %v244 = vpop.f32.mrf.mxu0
  %v245 = vadd.f32 0.0, %v244
  %v246 = vpop.f32.mrf.mxu0
  %v247 = vadd.f32 0.0, %v246
  %248 = vmatmul.bf16.gmra.mxu0 %v166
  %v249 = vpop.f32.mrf.mxu0
  %v250 = vadd.f32 0.0, %v249
  %v251 = vpop.f32.mrf.mxu0
  %v252 = vadd.f32 0.0, %v251
  %253 = vmatmul.bf16.gmra.mxu0 %v169
  %v254 = vpop.f32.mrf.mxu0
  %v255 = vadd.f32 0.0, %v254
  %v256 = vpop.f32.mrf.mxu0
  %v257 = vadd.f32 0.0, %v256
  %258 = vmatmul.bf16.gmra.mxu0 %v172
  %v259 = vpop.f32.mrf.mxu0
  %v260 = vadd.f32 0.0, %v259
  %v261 = vpop.f32.mrf.mxu0
  %v262 = vadd.f32 0.0, %v261
  %263 = vmatmul.bf16.gmra.mxu0 %v175
  %v264 = vpop.f32.mrf.mxu0
  %v265 = vadd.f32 0.0, %v264
  %v266 = vpop.f32.mrf.mxu0
  %v267 = vadd.f32 0.0, %v266
  %268 = vmatmul.bf16.gmra.mxu0 %v178
  %v269 = vpop.f32.mrf.mxu0
  %v270 = vadd.f32 0.0, %v269
  %v271 = vpop.f32.mrf.mxu0
  %v272 = vadd.f32 0.0, %v271
  %273 = vmatmul.bf16.gmra.mxu0 %v181
  %v274 = vpop.f32.mrf.mxu0
  %v275 = vadd.f32 0.0, %v274
  %v276 = vpop.f32.mrf.mxu0
  %v277 = vadd.f32 0.0, %v276
  %278 = vmatmul.bf16.gmra.mxu0 %v184
  %v279 = vpop.f32.mrf.mxu0
  %v280 = vadd.f32 0.0, %v279
  %v281 = vpop.f32.mrf.mxu0
  %v282 = vadd.f32 0.0, %v281
  %283 = vdwg.mxu0
  %v284 = vadd.f32 %v49, %v196
  %v285 = vadd.f32 %v50, %v245
  %v286 = vadd.f32 %v51, %v198
  %v287 = vadd.f32 %v52, %v247
  %v288 = vadd.f32 %v53, %v201
  %v289 = vadd.f32 %v54, %v250
  %v290 = vadd.f32 %v55, %v203
  %v291 = vadd.f32 %v56, %v252
  %v292 = vadd.f32 %v57, %v206
  %v293 = vadd.f32 %v58, %v255
  %v294 = vadd.f32 %v59, %v208
  %v295 = vadd.f32 %v60, %v257
  %v296 = vadd.f32 %v61, %v211
  %v297 = vadd.f32 %v62, %v260
  %v298 = vadd.f32 %v63, %v213
  %v299 = vadd.f32 %v64, %v262
  %v300 = vadd.f32 %v65, %v216
  %v301 = vadd.f32 %v66, %v265
  %v302 = vadd.f32 %v67, %v218
  %v303 = vadd.f32 %v68, %v267
  %v304 = vadd.f32 %v69, %v221
  %v305 = vadd.f32 %v70, %v270
  %v306 = vadd.f32 %v71, %v223
  %v307 = vadd.f32 %v72, %v272
  %v308 = vadd.f32 %v73, %v226
  %v309 = vadd.f32 %v74, %v275
  %v310 = vadd.f32 %v75, %v228
  %v311 = vadd.f32 %v76, %v277
  %v312 = vadd.f32 %v77, %v231
  %v313 = vadd.f32 %v78, %v280
  %v314 = vadd.f32 %v79, %v233
  %v315 = vadd.f32 %v80, %v282
  %316 = vst [vmem:[#allocation2] sm:$0xff] %v284
  %vm317 = vcmask 293888
  %318 = vst.msk [vmem:[#allocation2 + $0x8] sm:$0xff] %vm317, %v285
  %319 = vst [vmem:[#allocation2 + $0x10] sm:$0xff] %v286
  %320 = vst.msk [vmem:[#allocation2 + $0x18] sm:$0xff] %vm317, %v287
  %321 = vst [vmem:[#allocation2 + $0x20] sm:$0xff] %v288
  %322 = vst.msk [vmem:[#allocation2 + $0x28] sm:$0xff] %vm317, %v289
  %323 = vst [vmem:[#allocation2 + $0x30] sm:$0xff] %v290
  %324 = vst.msk [vmem:[#allocation2 + $0x38] sm:$0xff] %vm317, %v291
  %325 = vst [vmem:[#allocation2 + $0x40] sm:$0xff] %v292
  %326 = vst.msk [vmem:[#allocation2 + $0x48] sm:$0xff] %vm317, %v293
  %327 = vst [vmem:[#allocation2 + $0x50] sm:$0xff] %v294
  %328 = vst.msk [vmem:[#allocation2 + $0x58] sm:$0xff] %vm317, %v295
  %329 = vst [vmem:[#allocation2 + $0x60] sm:$0xff] %v296
  %330 = vst.msk [vmem:[#allocation2 + $0x68] sm:$0xff] %vm317, %v297
  %331 = vst [vmem:[#allocation2 + $0x70] sm:$0xff] %v298
  %332 = vst.msk [vmem:[#allocation2 + $0x78] sm:$0xff] %vm317, %v299
  %333 = vst [vmem:[#allocation2 + $0x80] sm:$0xff] %v300
  %334 = vst.msk [vmem:[#allocation2 + $0x88] sm:$0xff] %vm317, %v301
  %335 = vst [vmem:[#allocation2 + $0x90] sm:$0xff] %v302
  %336 = vst.msk [vmem:[#allocation2 + $0x98] sm:$0xff] %vm317, %v303
  %337 = vst [vmem:[#allocation2 + $0xa0] sm:$0xff] %v304
  %338 = vst.msk [vmem:[#allocation2 + $0xa8] sm:$0xff] %vm317, %v305
  %339 = vst [vmem:[#allocation2 + $0xb0] sm:$0xff] %v306
  %340 = vst.msk [vmem:[#allocation2 + $0xb8] sm:$0xff] %vm317, %v307
  %341 = vst [vmem:[#allocation2 + $0xc0] sm:$0xff] %v308
  %342 = vst.msk [vmem:[#allocation2 + $0xc8] sm:$0xff] %vm317, %v309
  %343 = vst [vmem:[#allocation2 + $0xd0] sm:$0xff] %v310
  %344 = vst.msk [vmem:[#allocation2 + $0xd8] sm:$0xff] %vm317, %v311
  %345 = vst [vmem:[#allocation2 + $0xe0] sm:$0xff] %v312
  %346 = vst.msk [vmem:[#allocation2 + $0xe8] sm:$0xff] %vm317, %v313
  %347 = vst [vmem:[#allocation2 + $0xf0] sm:$0xff] %v314
  %348 = vst.msk [vmem:[#allocation2 + $0xf8] sm:$0xff] %vm317, %v315
  // Predicated region
  $region14: #{mamba2_forward.9} parent=0 // pred_check
    %p349 = pneg %p12
  $region15: #{mamba2_forward.9} parent=0 // pred_check_branch
    %351 = sbr.rel (%p349) target = $region17
  $region16: #{mamba2_forward.9} parent=0 // pred_region
    %v352 = vld [vmem:[#allocation2] sm:$0xff]
    %v353 = vld [vmem:[#allocation2 + $0x8] sm:$0xff]
    %v354 = vld [vmem:[#allocation2 + $0x10] sm:$0xff]
    %v355 = vld [vmem:[#allocation2 + $0x18] sm:$0xff]
    %v356 = vld [vmem:[#allocation2 + $0x20] sm:$0xff]
    %v357 = vld [vmem:[#allocation2 + $0x28] sm:$0xff]
    %v358 = vld [vmem:[#allocation2 + $0x30] sm:$0xff]
    %v359 = vld [vmem:[#allocation2 + $0x38] sm:$0xff]
    %v360 = vld [vmem:[#allocation2 + $0x40] sm:$0xff]
    %v361 = vld [vmem:[#allocation2 + $0x48] sm:$0xff]
    %v362 = vld [vmem:[#allocation2 + $0x50] sm:$0xff]
    %v363 = vld [vmem:[#allocation2 + $0x58] sm:$0xff]
    %v364 = vld [vmem:[#allocation2 + $0x60] sm:$0xff]
    %v365 = vld [vmem:[#allocation2 + $0x68] sm:$0xff]
    %v366 = vld [vmem:[#allocation2 + $0x70] sm:$0xff]
    %v367 = vld [vmem:[#allocation2 + $0x78] sm:$0xff]
    %v368 = vld [vmem:[#allocation2 + $0x80] sm:$0xff]
    %v369 = vld [vmem:[#allocation2 + $0x88] sm:$0xff]
    %v370 = vld [vmem:[#allocation2 + $0x90] sm:$0xff]
    %v371 = vld [vmem:[#allocation2 + $0x98] sm:$0xff]
    %v372 = vld [vmem:[#allocation2 + $0xa0] sm:$0xff]
    %v373 = vld [vmem:[#allocation2 + $0xa8] sm:$0xff]
    %v374 = vld [vmem:[#allocation2 + $0xb0] sm:$0xff]
    %v375 = vld [vmem:[#allocation2 + $0xb8] sm:$0xff]
    %v376 = vld [vmem:[#allocation2 + $0xc0] sm:$0xff]
    %v377 = vld [vmem:[#allocation2 + $0xc8] sm:$0xff]
    %v378 = vld [vmem:[#allocation2 + $0xd0] sm:$0xff]
    %v379 = vld [vmem:[#allocation2 + $0xd8] sm:$0xff]
    %v380 = vld [vmem:[#allocation2 + $0xe0] sm:$0xff]
    %v381 = vld [vmem:[#allocation2 + $0xe8] sm:$0xff]
    %v382 = vld [vmem:[#allocation2 + $0xf0] sm:$0xff]
    %v383 = vld [vmem:[#allocation2 + $0xf8] sm:$0xff]
    %v384 = vpack.c.bf16 %v353, %v352
    %v385 = vpack.c.bf16 %v355, %v354
    %v386 = vpack.c.bf16 %v357, %v356
    %v387 = vpack.c.bf16 %v359, %v358
    %v388 = vpack.c.bf16 %v361, %v360
    %v389 = vpack.c.bf16 %v363, %v362
    %v390 = vpack.c.bf16 %v365, %v364
    %v391 = vpack.c.bf16 %v367, %v366
    %v392 = vpack.c.bf16 %v369, %v368
    %v393 = vpack.c.bf16 %v371, %v370
    %v394 = vpack.c.bf16 %v373, %v372
    %v395 = vpack.c.bf16 %v375, %v374
    %v396 = vpack.c.bf16 %v377, %v376
    %v397 = vpack.c.bf16 %v379, %v378
    %v398 = vpack.c.bf16 %v381, %v380
    %v399 = vpack.c.bf16 %v383, %v382
    %vm400 = vcmask 1043456
    %vm401 = vcmask 293892
    %vm402 = vmor %vm401, %vm400
    %403 = vst.msk [vmem:[%s2] sm:$0xff] %vm402, %v384
    %404 = vst.msk [vmem:[%s2 + $0x8] sm:$0xff] %vm402, %v385
    %405 = vst.msk [vmem:[%s2 + $0x10] sm:$0xff] %vm402, %v386
    %406 = vst.msk [vmem:[%s2 + $0x18] sm:$0xff] %vm402, %v387
    %407 = vst.msk [vmem:[%s2 + $0x20] sm:$0xff] %vm402, %v388
    %408 = vst.msk [vmem:[%s2 + $0x28] sm:$0xff] %vm402, %v389
    %409 = vst.msk [vmem:[%s2 + $0x30] sm:$0xff] %vm402, %v390
    %410 = vst.msk [vmem:[%s2 + $0x38] sm:$0xff] %vm402, %v391
    %411 = vst.msk [vmem:[%s2 + $0x40] sm:$0xff] %vm402, %v392
    %412 = vst.msk [vmem:[%s2 + $0x48] sm:$0xff] %vm402, %v393
    %413 = vst.msk [vmem:[%s2 + $0x50] sm:$0xff] %vm402, %v394
    %414 = vst.msk [vmem:[%s2 + $0x58] sm:$0xff] %vm402, %v395
    %415 = vst.msk [vmem:[%s2 + $0x60] sm:$0xff] %vm402, %v396
    %416 = vst.msk [vmem:[%s2 + $0x68] sm:$0xff] %vm402, %v397
    %417 = vst.msk [vmem:[%s2 + $0x70] sm:$0xff] %vm402, %v398
    %418 = vst.msk [vmem:[%s2 + $0x78] sm:$0xff] %vm402, %v399
  $region17: #{mamba2_forward.9} parent=0 // pred_fallthru
    _
  // Predicated region
  $region18: #{mamba2_forward.9} parent=0 // pred_check
    _
  $region19: #{mamba2_forward.9} parent=0 // pred_check_branch
    %420 = sbr.rel (0) target = $region21
  $region20: #{mamba2_forward.9} parent=0 // pred_region
    _
  $region21: #{mamba2_forward.9} parent=0 // pred_fallthru
    _
  // Predicated region
  $region22: #{mamba2_forward.9} parent=0 // pred_check
    _
  $region23: #{mamba2_forward.9} parent=0 // pred_check_branch
    %422 = sbr.rel (0) target = $region25
  $region24: #{mamba2_forward.9} parent=0 // pred_region
    _
  $region25: #{mamba2_forward.9} parent=0 // pred_fallthru
    _

// kernel: mamba2_forward.10
$region0: #{mamba2_forward.10}
  #allocation0 [shape = 'u32[]', space=smem, size = 0x4, offset = 0x4, fixed_abs, tag = 'smem constant byte address 0x4 - core index']
  #allocation1 [shape = 'u32[72,128]{1,0:T(1,128)}', space=vmem, size = 0x9000, scoped, tag = 'internal scratch']
  %s0 = inlined_call_operand.vmem [shape: bf16[1,8,8,96], index: 0, kind: input, shape index: {}]
  %s1 = inlined_call_operand.vmem [shape: bf16[1,1,8,96], index: 1, kind: input, shape index: {}, may-alias: {1,2}]
  %s2 = inlined_call_operand.vmem [shape: bf16[1,1,8,96], index: 2, kind: input, shape index: {}, may-alias: {1,2}]
  %s3 = inlined_call_operand.vmem [shape: f32[9,96], index: 3, kind: input, shape index: {}]
  %s4 = inlined_call_operand.vmem [shape: f32[1,96], index: 4, kind: input, shape index: {}]
  %s5 = inlined_call_operand.vmem [shape: bf16[1,8,8,96], index: 5, kind: output, shape index: {}]
  %s6 = sld [smem:[#allocation0]]
  $region30: #{mamba2_forward.10} parent=0
    _
  %s8 = ssub.s32 1, %s6
  %s9 = scalar_select 0, %s8, %s6
  // Predicated region
  $region2: #{mamba2_forward.10} parent=0 // pred_check
    _
  $region3: #{mamba2_forward.10} parent=0 // pred_check_branch
    %11 = sbr.rel (0) target = $region5
  $region4: #{mamba2_forward.10} parent=0 // pred_region
    _
  $region5: #{mamba2_forward.10} parent=0 // pred_fallthru
    _
  // Predicated region
  $region6: #{mamba2_forward.10} parent=0 // pred_check
    _
  $region7: #{mamba2_forward.10} parent=0 // pred_check_branch
    %13 = sbr.rel (0) target = $region9
  $region8: #{mamba2_forward.10} parent=0 // pred_region
    _
  $region9: #{mamba2_forward.10} parent=0 // pred_fallthru
    _
  // Predicated region
  $region10: #{mamba2_forward.10} parent=0 // pred_check
    _
  $region11: #{mamba2_forward.10} parent=0 // pred_check_branch
    %15 = sbr.rel (0) target = $region13
  $region12: #{mamba2_forward.10} parent=0 // pred_region
    _
  $region13: #{mamba2_forward.10} parent=0 // pred_fallthru
    _
  // Predicated region
  $region14: #{mamba2_forward.10} parent=0 // pred_check
    _
  $region15: #{mamba2_forward.10} parent=0 // pred_check_branch
    %17 = sbr.rel (0) target = $region17
  $region16: #{mamba2_forward.10} parent=0 // pred_region
    _
  $region17: #{mamba2_forward.10} parent=0 // pred_fallthru
    _
  // Predicated region
  $region18: #{mamba2_forward.10} parent=0 // pred_check
    _
  $region19: #{mamba2_forward.10} parent=0 // pred_check_branch
    %19 = sbr.rel (0) target = $region21
  $region20: #{mamba2_forward.10} parent=0 // pred_region
    _
  $region21: #{mamba2_forward.10} parent=0 // pred_fallthru
    _
  %v20 = vld [vmem:[%s0] sm:$0xf]
  %v21 = vld [vmem:[%s0 + $0x4] sm:$0xf]
  %v22 = vld [vmem:[%s0 + $0x8] sm:$0xf]
  %v23 = vld [vmem:[%s0 + $0xc] sm:$0xf]
  %v24 = vld [vmem:[%s0 + $0x10] sm:$0xf]
  %v25 = vld [vmem:[%s0 + $0x14] sm:$0xf]
  %v26 = vld [vmem:[%s0 + $0x18] sm:$0xf]
  %v27 = vld [vmem:[%s0 + $0x1c] sm:$0xf]
  %v28 = vld [vmem:[%s1] sm:$0xf]
  %v29 = vld [vmem:[%s2] sm:$0xf]
  %v30 = vld [vmem:[%s3] sm:$0xff]
  %v31 = vld [vmem:[%s3 + $0x8] sm:$0x1]
  %v32 = vlaneseq
  %v33 = vshrl.u32 %v32, 7
  %vm34 = vcmp.gt.s32.totalorder %v33, 0
  %vm35 = vcmp.lt.s32.totalorder %v33, 7
  %v36 = vunpack.c.l.bf16 %v28
  %v37 = vunpack.c.l.bf16 %v20
  %v38 = vunpack.c.l.bf16 %v21
  %v39 = vunpack.c.l.bf16 %v22
  %v40 = vunpack.c.l.bf16 %v23
  %v41 = vunpack.c.l.bf16 %v24
  %v42 = vunpack.c.l.bf16 %v25
  %v43 = vunpack.c.l.bf16 %v26
  %v44 = vperm.slane %v30, 1
  %v45 = vmul.f32 %v36, %v44
  %v46 = vmul.f32 %v37, %v44
  %v47 = vmul.f32 %v38, %v44
  %v48 = vmul.f32 %v39, %v44
  %v49 = vmul.f32 %v40, %v44
  %v50 = vmul.f32 %v41, %v44
  %v51 = vmul.f32 %v42, %v44
  %v52 = vmul.f32 %v43, %v44
  %v53 = vadd.f32 %v45, 0.0
  %v54 = vadd.f32 %v46, 0.0
  %v55 = vadd.f32 %v47, 0.0
  %v56 = vadd.f32 %v48, 0.0
  %v57 = vadd.f32 %v49, 0.0
  %v58 = vadd.f32 %v50, 0.0
  %v59 = vadd.f32 %v51, 0.0
  %v60 = vadd.f32 %v52, 0.0
  %v61 = vrot.slane %v36, 7
  %v62 = vrot.slane %v37, 7
  %v63 = vrot.slane %v38, 7
  %v64 = vrot.slane %v39, 7
  %v65 = vrot.slane %v40, 7
  %v66 = vrot.slane %v41, 7
  %v67 = vrot.slane %v42, 7
  %v68 = vrot.slane %v43, 7
  %v69 = vsel %vm34, %v61, 0.0
  %v70 = vsel %vm34, %v62, 0.0
  %v71 = vsel %vm34, %v63, 0.0
  %v72 = vsel %vm34, %v64, 0.0
  %v73 = vsel %vm34, %v65, 0.0
  %v74 = vsel %vm34, %v66, 0.0
  %v75 = vsel %vm34, %v67, 0.0
  %v76 = vsel %vm34, %v68, 0.0
  %v77 = vperm.slane %v30, 0
  %v78 = vmul.f32 %v69, %v77
  %v79 = vmul.f32 %v70, %v77
  %v80 = vmul.f32 %v71, %v77
  %v81 = vmul.f32 %v72, %v77
  %v82 = vmul.f32 %v73, %v77
  %v83 = vmul.f32 %v74, %v77
  %v84 = vmul.f32 %v75, %v77
  %v85 = vmul.f32 %v76, %v77
  %v86 = vadd.f32 %v53, %v78
  %v87 = vadd.f32 %v54, %v79
  %v88 = vadd.f32 %v55, %v80
  %v89 = vadd.f32 %v56, %v81
  %v90 = vadd.f32 %v57, %v82
  %v91 = vadd.f32 %v58, %v83
  %v92 = vadd.f32 %v59, %v84
  %v93 = vadd.f32 %v60, %v85
  %v94 = vrot.slane %v36, 1
  %v95 = vrot.slane %v37, 1
  %v96 = vrot.slane %v38, 1
  %v97 = vrot.slane %v39, 1
  %v98 = vrot.slane %v40, 1
  %v99 = vrot.slane %v41, 1
  %v100 = vrot.slane %v42, 1
  %v101 = vrot.slane %v43, 1
  %v102 = vsel %vm35, %v94, 0.0
  %v103 = vsel %vm35, %v95, 0.0
  %v104 = vsel %vm35, %v96, 0.0
  %v105 = vsel %vm35, %v97, 0.0
  %v106 = vsel %vm35, %v98, 0.0
  %v107 = vsel %vm35, %v99, 0.0
  %v108 = vsel %vm35, %v100, 0.0
  %v109 = vsel %vm35, %v101, 0.0
  %v110 = vperm.slane %v30, 2
  %v111 = vmul.f32 %v102, %v110
  %v112 = vmul.f32 %v103, %v110
  %v113 = vmul.f32 %v104, %v110
  %v114 = vmul.f32 %v105, %v110
  %v115 = vmul.f32 %v106, %v110
  %v116 = vmul.f32 %v107, %v110
  %v117 = vmul.f32 %v108, %v110
  %v118 = vmul.f32 %v109, %v110
  %v119 = vadd.f32 %v86, %v111
  %v120 = vadd.f32 %v87, %v112
  %v121 = vadd.f32 %v88, %v113
  %v122 = vadd.f32 %v89, %v114
  %v123 = vadd.f32 %v90, %v115
  %v124 = vadd.f32 %v91, %v116
  %v125 = vadd.f32 %v92, %v117
  %v126 = vadd.f32 %v93, %v118
  %v127 = vunpack.c.l.bf16 %v27
  %v128 = vperm.slane %v30, 4
  %v129 = vmul.f32 %v37, %v128
  %v130 = vmul.f32 %v38, %v128
  %v131 = vmul.f32 %v39, %v128
  %v132 = vmul.f32 %v40, %v128
  %v133 = vmul.f32 %v41, %v128
  %v134 = vmul.f32 %v42, %v128
  %v135 = vmul.f32 %v43, %v128
  %v136 = vmul.f32 %v127, %v128
  %v137 = vadd.f32 %v119, %v129
  %v138 = vadd.f32 %v120, %v130
  %v139 = vadd.f32 %v121, %v131
  %v140 = vadd.f32 %v122, %v132
  %v141 = vadd.f32 %v123, %v133
  %v142 = vadd.f32 %v124, %v134
  %v143 = vadd.f32 %v125, %v135
  %v144 = vadd.f32 %v126, %v136
  %v145 = vrot.slane %v127, 7
  %v146 = vsel %vm34, %v145, 0.0
  %v147 = vperm.slane %v30, 3
  %v148 = vmul.f32 %v70, %v147
  %v149 = vmul.f32 %v71, %v147
  %v150 = vmul.f32 %v72, %v147
  %v151 = vmul.f32 %v73, %v147
  %v152 = vmul.f32 %v74, %v147
  %v153 = vmul.f32 %v75, %v147
  %v154 = vmul.f32 %v76, %v147
  %v155 = vmul.f32 %v146, %v147
  %v156 = vadd.f32 %v137, %v148
  %v157 = vadd.f32 %v138, %v149
  %v158 = vadd.f32 %v139, %v150
  %v159 = vadd.f32 %v140, %v151
  %v160 = vadd.f32 %v141, %v152
  %v161 = vadd.f32 %v142, %v153
  %v162 = vadd.f32 %v143, %v154
  %v163 = vadd.f32 %v144, %v155
  %v164 = vrot.slane %v127, 1
  %v165 = vsel %vm35, %v164, 0.0
  %v166 = vperm.slane %v30, 5
  %v167 = vmul.f32 %v103, %v166
  %v168 = vmul.f32 %v104, %v166
  %v169 = vmul.f32 %v105, %v166
  %v170 = vmul.f32 %v106, %v166
  %v171 = vmul.f32 %v107, %v166
  %v172 = vmul.f32 %v108, %v166
  %v173 = vmul.f32 %v109, %v166
  %v174 = vmul.f32 %v165, %v166
  %v175 = vadd.f32 %v156, %v167
  %v176 = vadd.f32 %v157, %v168
  %v177 = vadd.f32 %v158, %v169
  %v178 = vadd.f32 %v159, %v170
  %v179 = vadd.f32 %v160, %v171
  %v180 = vadd.f32 %v161, %v172
  %v181 = vadd.f32 %v162, %v173
  %v182 = vadd.f32 %v163, %v174
  %v183 = vunpack.c.l.bf16 %v29
  %v184 = vperm.slane %v30, 7
  %v185 = vmul.f32 %v38, %v184
  %v186 = vmul.f32 %v39, %v184
  %v187 = vmul.f32 %v40, %v184
  %v188 = vmul.f32 %v41, %v184
  %v189 = vmul.f32 %v42, %v184
  %v190 = vmul.f32 %v43, %v184
  %v191 = vmul.f32 %v127, %v184
  %v192 = vmul.f32 %v183, %v184
  %v193 = vadd.f32 %v175, %v185
  %v194 = vadd.f32 %v176, %v186
  %v195 = vadd.f32 %v177, %v187
  %v196 = vadd.f32 %v178, %v188
  %v197 = vadd.f32 %v179, %v189
  %v198 = vadd.f32 %v180, %v190
  %v199 = vadd.f32 %v181, %v191
  %v200 = vadd.f32 %v182, %v192
  %v201 = vrot.slane %v183, 7
  %v202 = vsel %vm34, %v201, 0.0
  %v203 = vperm.slane %v30, 6
  %v204 = vmul.f32 %v71, %v203
  %v205 = vmul.f32 %v72, %v203
  %v206 = vmul.f32 %v73, %v203
  %v207 = vmul.f32 %v74, %v203
  %v208 = vmul.f32 %v75, %v203
  %v209 = vmul.f32 %v76, %v203
  %v210 = vmul.f32 %v146, %v203
  %v211 = vmul.f32 %v202, %v203
  %v212 = vadd.f32 %v193, %v204
  %v213 = vadd.f32 %v194, %v205
  %v214 = vadd.f32 %v195, %v206
  %v215 = vadd.f32 %v196, %v207
  %v216 = vadd.f32 %v197, %v208
  %v217 = vadd.f32 %v198, %v209
  %v218 = vadd.f32 %v199, %v210
  %v219 = vadd.f32 %v200, %v211
  %v220 = vrot.slane %v183, 1
  %v221 = vsel %vm35, %v220, 0.0
  %v222 = vperm.slane %v31, 0
  %v223 = vmul.f32 %v104, %v222
  %v224 = vmul.f32 %v105, %v222
  %v225 = vmul.f32 %v106, %v222
  %v226 = vmul.f32 %v107, %v222
  %v227 = vmul.f32 %v108, %v222
  %v228 = vmul.f32 %v109, %v222
  %v229 = vmul.f32 %v165, %v222
  %v230 = vmul.f32 %v221, %v222
  %v231 = vadd.f32 %v212, %v223
  %v232 = vadd.f32 %v213, %v224
  %v233 = vadd.f32 %v214, %v225
  %v234 = vadd.f32 %v215, %v226
  %v235 = vadd.f32 %v216, %v227
  %v236 = vadd.f32 %v217, %v228
  %v237 = vadd.f32 %v218, %v229
  %v238 = vadd.f32 %v219, %v230
  %v239 = vld [vmem:[%s4] sm:$0x1]
  %v241 = vperm.slane %v239, 0
  %v243 = vadd.f32 %v231, %v241
  %v244 = vadd.f32 %v232, %v241
  %v245 = vadd.f32 %v233, %v241
  %v246 = vadd.f32 %v234, %v241
  %v247 = vadd.f32 %v235, %v241
  %v248 = vadd.f32 %v236, %v241
  %v249 = vadd.f32 %v237, %v241
  %v250 = vadd.f32 %v238, %v241
  %v251 = vxor.u32 %v243, 2147483648
  %v252 = vxor.u32 %v244, 2147483648
  %v253 = vxor.u32 %v245, 2147483648
  %v254 = vxor.u32 %v246, 2147483648
  %v255 = vxor.u32 %v247, 2147483648
  %v256 = vxor.u32 %v248, 2147483648
  %v257 = vxor.u32 %v249, 2147483648
  %v258 = vxor.u32 %v250, 2147483648
  %v259 = vmul.f32 %v251, 1.442695
  %v260 = vpow.pop %v259
  %v261 = vmul.f32 %v252, 1.442695
  %v262 = vpow.pop %v261
  %v263 = vmul.f32 %v253, 1.442695
  %v264 = vpow.pop %v263
  %v265 = vmul.f32 %v254, 1.442695
  %v266 = vpow.pop %v265
  %v267 = vmul.f32 %v255, 1.442695
  %v268 = vpow.pop %v267
  %v269 = vmul.f32 %v256, 1.442695
  %v270 = vpow.pop %v269
  %v271 = vmul.f32 %v257, 1.442695
  %v272 = vpow.pop %v271
  %v273 = vmul.f32 %v258, 1.442695
  %v274 = vpow.pop %v273
  %v275 = vadd.f32 %v260, 1.0
  %v276 = vadd.f32 %v262, 1.0
  %v277 = vadd.f32 %v264, 1.0
  %v278 = vadd.f32 %v266, 1.0
  %v279 = vadd.f32 %v268, 1.0
  %v280 = vadd.f32 %v270, 1.0
  %v281 = vadd.f32 %v272, 1.0
  %v282 = vadd.f32 %v274, 1.0
  %v283 = vrcp.pop %v275
  %v284 = vmul.f32 %v275, %v283
  %v285 = vsub.f32 1.0, %v284
  %v286 = vmul.f32 %v283, %v285
  %v287 = vadd.f32 %v283, %v286
  %vm288 = vweird.f32 %v275
  %vm289 = vweird.f32 %v283
  %vm290 = vmor %vm288, %vm289
  %v291 = vsel %vm290, %v283, %v287
  %v292 = vand.u32 2147483647, %v275
  %vm293 = vcmp.eq.f32.partialorder %v292, 8.507059e+37
  %v294 = vand.u32 %v275, 2147483648
  %v295 = vor.u32 1.1754944e-38, %v294
  %v296 = vsel %vm293, %v295, %v291
  %v297 = vmul.f32 1.0, %v296
  %v298 = vrcp.pop %v276
  %v299 = vmul.f32 %v276, %v298
  %v300 = vsub.f32 1.0, %v299
  %v301 = vmul.f32 %v298, %v300
  %v302 = vadd.f32 %v298, %v301
  %vm303 = vweird.f32 %v276
  %vm304 = vweird.f32 %v298
  %vm305 = vmor %vm303, %vm304
  %v306 = vsel %vm305, %v298, %v302
  %v307 = vand.u32 2147483647, %v276
  %vm308 = vcmp.eq.f32.partialorder %v307, 8.507059e+37
  %v309 = vand.u32 %v276, 2147483648
  %v310 = vor.u32 1.1754944e-38, %v309
  %v311 = vsel %vm308, %v310, %v306
  %v312 = vmul.f32 1.0, %v311
  %v313 = vrcp.pop %v277
  %v314 = vmul.f32 %v277, %v313
  %v315 = vsub.f32 1.0, %v314
  %v316 = vmul.f32 %v313, %v315
  %v317 = vadd.f32 %v313, %v316
  %vm318 = vweird.f32 %v277
  %vm319 = vweird.f32 %v313
  %vm320 = vmor %vm318, %vm319
  %v321 = vsel %vm320, %v313, %v317
  %v322 = vand.u32 2147483647, %v277
  %vm323 = vcmp.eq.f32.partialorder %v322, 8.507059e+37
  %v324 = vand.u32 %v277, 2147483648
  %v325 = vor.u32 1.1754944e-38, %v324
  %v326 = vsel %vm323, %v325, %v321
  %v327 = vmul.f32 1.0, %v326
  %v328 = vrcp.pop %v278
  %v329 = vmul.f32 %v278, %v328
  %v330 = vsub.f32 1.0, %v329
  %v331 = vmul.f32 %v328, %v330
  %v332 = vadd.f32 %v328, %v331
  %vm333 = vweird.f32 %v278
  %vm334 = vweird.f32 %v328
  %vm335 = vmor %vm333, %vm334
  %v336 = vsel %vm335, %v328, %v332
  %v337 = vand.u32 2147483647, %v278
  %vm338 = vcmp.eq.f32.partialorder %v337, 8.507059e+37
  %v339 = vand.u32 %v278, 2147483648
  %v340 = vor.u32 1.1754944e-38, %v339
  %v341 = vsel %vm338, %v340, %v336
  %v342 = vmul.f32 1.0, %v341
  %v343 = vrcp.pop %v279
  %v344 = vmul.f32 %v279, %v343
  %v345 = vsub.f32 1.0, %v344
  %v346 = vmul.f32 %v343, %v345
  %v347 = vadd.f32 %v343, %v346
  %vm348 = vweird.f32 %v279
  %vm349 = vweird.f32 %v343
  %vm350 = vmor %vm348, %vm349
  %v351 = vsel %vm350, %v343, %v347
  %v352 = vand.u32 2147483647, %v279
  %vm353 = vcmp.eq.f32.partialorder %v352, 8.507059e+37
  %v354 = vand.u32 %v279, 2147483648
  %v355 = vor.u32 1.1754944e-38, %v354
  %v356 = vsel %vm353, %v355, %v351
  %v357 = vmul.f32 1.0, %v356
  %v358 = vrcp.pop %v280
  %v359 = vmul.f32 %v280, %v358
  %v360 = vsub.f32 1.0, %v359
  %v361 = vmul.f32 %v358, %v360
  %v362 = vadd.f32 %v358, %v361
  %vm363 = vweird.f32 %v280
  %vm364 = vweird.f32 %v358
  %vm365 = vmor %vm363, %vm364
  %v366 = vsel %vm365, %v358, %v362
  %v367 = vand.u32 2147483647, %v280
  %vm368 = vcmp.eq.f32.partialorder %v367, 8.507059e+37
  %v369 = vand.u32 %v280, 2147483648
  %v370 = vor.u32 1.1754944e-38, %v369
  %v371 = vsel %vm368, %v370, %v366
  %v372 = vmul.f32 1.0, %v371
  %v373 = vrcp.pop %v281
  %v374 = vmul.f32 %v281, %v373
  %v375 = vsub.f32 1.0, %v374
  %v376 = vmul.f32 %v373, %v375
  %v377 = vadd.f32 %v373, %v376
  %vm378 = vweird.f32 %v281
  %vm379 = vweird.f32 %v373
  %vm380 = vmor %vm378, %vm379
  %v381 = vsel %vm380, %v373, %v377
  %v382 = vand.u32 2147483647, %v281
  %vm383 = vcmp.eq.f32.partialorder %v382, 8.507059e+37
  %v384 = vand.u32 %v281, 2147483648
  %v385 = vor.u32 1.1754944e-38, %v384
  %v386 = vsel %vm383, %v385, %v381
  %v387 = vmul.f32 1.0, %v386
  %v388 = vrcp.pop %v282
  %v389 = vmul.f32 %v282, %v388
  %v390 = vsub.f32 1.0, %v389
  %v391 = vmul.f32 %v388, %v390
  %v392 = vadd.f32 %v388, %v391
  %vm393 = vweird.f32 %v282
  %vm394 = vweird.f32 %v388
  %vm395 = vmor %vm393, %vm394
  %v396 = vsel %vm395, %v388, %v392
  %v397 = vand.u32 2147483647, %v282
  %vm398 = vcmp.eq.f32.partialorder %v397, 8.507059e+37
  %v399 = vand.u32 %v282, 2147483648
  %v400 = vor.u32 1.1754944e-38, %v399
  %v401 = vsel %vm398, %v400, %v396
  %v402 = vmul.f32 1.0, %v401
  %v403 = vmul.f32 %v243, %v297
  %v404 = vmul.f32 %v244, %v312
  %v405 = vmul.f32 %v245, %v327
  %v406 = vmul.f32 %v246, %v342
  %v407 = vmul.f32 %v247, %v357
  %v408 = vmul.f32 %v248, %v372
  %v409 = vmul.f32 %v249, %v387
  %v410 = vmul.f32 %v250, %v402
  %v411 = vpack.c.bf16 %v403, %v403
  %v412 = vpack.c.bf16 %v404, %v404
  %v413 = vpack.c.bf16 %v405, %v405
  %v414 = vpack.c.bf16 %v406, %v406
  %v415 = vpack.c.bf16 %v407, %v407
  %v416 = vpack.c.bf16 %v408, %v408
  %v417 = vpack.c.bf16 %v409, %v409
  %v418 = vpack.c.bf16 %v410, %v410
  %vm419 = vcmask 781312
  %420 = vst.msk [vmem:[%s5] sm:$0xf] %vm419, %v411
  %421 = vst.msk [vmem:[%s5 + $0x4] sm:$0xf] %vm419, %v412
  %422 = vst.msk [vmem:[%s5 + $0x8] sm:$0xf] %vm419, %v413
  %423 = vst.msk [vmem:[%s5 + $0xc] sm:$0xf] %vm419, %v414
  %424 = vst.msk [vmem:[%s5 + $0x10] sm:$0xf] %vm419, %v415
  %425 = vst.msk [vmem:[%s5 + $0x14] sm:$0xf] %vm419, %v416
  %426 = vst.msk [vmem:[%s5 + $0x18] sm:$0xf] %vm419, %v417
  %427 = vst.msk [vmem:[%s5 + $0x1c] sm:$0xf] %vm419, %v418
  // Predicated region
  $region22: #{mamba2_forward.10} parent=0 // pred_check
    _
  $region23: #{mamba2_forward.10} parent=0 // pred_check_branch
    %429 = sbr.rel (0) target = $region25
  $region24: #{mamba2_forward.10} parent=0 // pred_region
    _
  $region25: #{mamba2_forward.10} parent=0 // pred_fallthru
    _
  // Predicated region
  $region26: #{mamba2_forward.10} parent=0 // pred_check
    _
  $region27: #{mamba2_forward.10} parent=0 // pred_check_branch
    %431 = sbr.rel (0) target = $region29
  $region28: #{mamba2_forward.10} parent=0 // pred_region
    _
  $region29: #{mamba2_forward.10} parent=0 // pred_fallthru
    _

// kernel: mamba2_forward.12
$region0: #{mamba2_forward.12}
  #allocation0 [shape = 'u32[]', space=smem, size = 0x4, offset = 0x4, fixed_abs, tag = 'smem constant byte address 0x4 - core index']
  #allocation1 [shape = 'u32[72,128]{1,0:T(1,128)}', space=vmem, size = 0x9000, scoped, tag = 'internal scratch']
  #allocation2 [shape = 'f32[16,64]{1,0:T(8,128)}', space=vmem, size = 0x2000, scoped, tag = 'scratch operand']
  %s0 = inlined_call_operand.vmem [shape: bf16[1,64,16], index: 0, kind: input, shape index: {}]
  %s1 = inlined_call_operand.vmem [shape: bf16[1,64,16], index: 1, kind: input, shape index: {}]
  %s2 = inlined_call_operand.vmem [shape: bf16[1,64,64], index: 2, kind: input, shape index: {}]
  %s3 = inlined_call_operand.vmem [shape: f32[1,64,4], index: 3, kind: input, shape index: {}]
  %s4 = inlined_call_operand.vmem [shape: bf16[1,64,64], index: 4, kind: input, shape index: {}]
  %s5 = inlined_call_operand.vmem [shape: f32[4,64], index: 5, kind: input, shape index: {}]
  %s6 = inlined_call_operand.vmem [shape: f32[1,64], index: 6, kind: input, shape index: {}]
  %s7 = inlined_call_operand.vmem [shape: f32[1,64], index: 7, kind: input, shape index: {}]
  %s8 = inlined_call_operand.vmem [shape: f32[1,64], index: 8, kind: input, shape index: {}]
  %s9 = inlined_call_operand.vmem [shape: bf16[1,64,64], index: 9, kind: output, shape index: {}]
  %s10 = sld [smem:[#allocation0]]
  $region81: #{mamba2_forward.12} parent=0
    _
  %s12 = ssub.s32 1, %s10
  %s13 = scalar_select 0, %s12, %s10
  loop: start=0, step=1, limit=4
  $region2: #{mamba2_forward.12} parent=0 // loop_pre_header
    _
  $region3: #{mamba2_forward.12} parent=0 // loop_header
    %s15 = sphi 0, %s19
    %p16 = scmp.ge.s32.totalorder %s15, 4
    %s22 = sphi 0, %s41
    %s23 = sphi 0, %s37
    %s24 = sphi 0, %s33
    %s25 = sphi 0, %s22
    %s26 = sphi 0, %s23
    %s27 = sphi 0, %s24
    %s28 = sphi 0, %s25
    %s29 = sphi 0, %s26
    %s30 = sphi 0, %s27
    %s50 = sphi 0, %s52
    %s53 = sphi 0, %s50
    %s54 = sphi 0, %s53
    %s70 = sphi 0, %s54
    %s80 = sphi 0, %s82
    %s83 = sphi 0, %s80
    %s84 = sphi 0, %s83
    %s100 = sphi 0, %s84
    %s108 = sphi 0, %s110
    %s111 = sphi 0, %s108
    %s112 = sphi 0, %s111
    %s128 = sphi 0, %s112
    %s140 = sphi 0, %s142
    %s143 = sphi 0, %s140
    %s144 = sphi 0, %s143
    %s160 = sphi 0, %s144
    %s170 = sphi 0, %s172
    %s173 = sphi 0, %s170
    %s174 = sphi 0, %s173
    %s190 = sphi 0, %s174
    %s194 = sphi 0, %s194
    %s196 = sphi 0, %s194
    %s197 = sphi 0, %s196
    %s211 = sphi 0, %s197
    %s215 = sphi 0, %s215
    %s217 = sphi 0, %s215
    %s218 = sphi 0, %s217
    %s232 = sphi 0, %s218
    %s236 = sphi 0, %s236
    %s238 = sphi 0, %s236
    %s239 = sphi 0, %s238
    %s253 = sphi 0, %s239
    %s257 = sphi 0, %s257
    %s259 = sphi 0, %s257
    %s260 = sphi 0, %s259
    %s274 = sphi 0, %s260
    %s284 = sphi 0, %s286
    %s287 = sphi 0, %s284
    %s288 = sphi 0, %s287
    %s304 = sphi 0, %s288
  $region4: #{mamba2_forward.12} parent=0 // loop_header_branch
    %18 = sbr.rel (%p16) target = $region8
  $region5: #{mamba2_forward.12} parent=0 // loop_body
    %s20 = ssub.s32 %s15, 1
    %s21 = ssub.s32 %s15, 2
    %s31 = sadd.s32 1, %s24
    %p32 = scmp.ge.s32.totalorder %s31, 1
    %s33 = scalar_select %p32, 0, %s31
    %s34 = sadd.s32 1, %s23
    %s35 = scalar_select %p32, %s34, %s23
    %p36 = scmp.ge.s32.totalorder %s35, 2
    %s37 = scalar_select %p36, 0, %s35
    %s38 = sadd.s32 1, %s22
    %s39 = scalar_select %p36, %s38, %s22
    %p40 = scmp.ge.s32.totalorder %s39, 1
    %s41 = scalar_select %p40, 0, %s39
    %s42 = ssub.s32 1, %s23
    %s43 = smul.u32 %s24, %s42
    %s44 = ssub.s32 1, %s37
    %s45 = smul.u32 %s33, %s44
    %s46 = ssub.s32 %s22, %s41
    %s47 = ssub.s32 %s43, %s45
    %s48 = sor.u32 %s46, %s47
    %p49 = scmp.eq.s32.totalorder %s48, 0
    %s51 = sadd.s32 %s50, 1
    %s52 = scalar_select %p49, %s50, %s51
    %p55 = pneg %p49
    %p56 = scmp.eq.s32.totalorder %s15, 1
    %p57 = por %p55, %p56
    %p58 = scmp.ne.s32.totalorder %s50, %s53
    %p59 = scmp.eq.s32.totalorder %s15, 0
    %p60 = por %p58, %p59
    %p61 = scmp.ne.s32.totalorder %s50, %s53
    %p62 = scmp.eq.s32.totalorder %s20, 1
    %p63 = por %p61, %p62
    %p64 = scmp.ne.s32.totalorder %s53, %s54
    %p65 = scmp.eq.s32.totalorder %s20, 0
    %p66 = por %p64, %p65
    %p67 = scmp.ne.s32.totalorder %s53, %s54
    %p68 = scmp.eq.s32.totalorder %s21, 1
    %p69 = por %p67, %p68
    %p71 = scmp.ne.s32.totalorder %s54, %s70
    %p72 = scmp.eq.s32.totalorder %s21, 0
    %p73 = por %p71, %p72
    %s74 = smul.u32 %s24, %s23
    %s75 = smul.u32 %s33, %s37
    %s76 = ssub.s32 %s22, %s41
    %s77 = ssub.s32 %s74, %s75
    %s78 = sor.u32 %s76, %s77
    %p79 = scmp.eq.s32.totalorder %s78, 0
    %s81 = sadd.s32 %s80, 1
    %s82 = scalar_select %p79, %s80, %s81
    %p85 = pneg %p79
    %p86 = scmp.eq.s32.totalorder %s15, 1
    %p87 = por %p85, %p86
    %p88 = scmp.ne.s32.totalorder %s80, %s83
    %p89 = scmp.eq.s32.totalorder %s15, 0
    %p90 = por %p88, %p89
    %p91 = scmp.ne.s32.totalorder %s80, %s83
    %p92 = scmp.eq.s32.totalorder %s20, 1
    %p93 = por %p91, %p92
    %p94 = scmp.ne.s32.totalorder %s83, %s84
    %p95 = scmp.eq.s32.totalorder %s20, 0
    %p96 = por %p94, %p95
    %p97 = scmp.ne.s32.totalorder %s83, %s84
    %p98 = scmp.eq.s32.totalorder %s21, 1
    %p99 = por %p97, %p98
    %p101 = scmp.ne.s32.totalorder %s84, %s100
    %p102 = scmp.eq.s32.totalorder %s21, 0
    %p103 = por %p101, %p102
    %s104 = ssub.s32 %s22, %s41
    %s105 = ssub.s32 %s24, %s33
    %s106 = sor.u32 %s104, %s105
    %p107 = scmp.eq.s32.totalorder %s106, 0
    %s109 = sadd.s32 %s108, 1
    %s110 = scalar_select %p107, %s108, %s109
    %p113 = pneg %p107
    %p114 = scmp.eq.s32.totalorder %s15, 1
    %p115 = por %p113, %p114
    %p116 = scmp.ne.s32.totalorder %s108, %s111
    %p117 = scmp.eq.s32.totalorder %s15, 0
    %p118 = por %p116, %p117
    %p119 = scmp.ne.s32.totalorder %s108, %s111
    %p120 = scmp.eq.s32.totalorder %s20, 1
    %p121 = por %p119, %p120
    %p122 = scmp.ne.s32.totalorder %s111, %s112
    %p123 = scmp.eq.s32.totalorder %s20, 0
    %p124 = por %p122, %p123
    %p125 = scmp.ne.s32.totalorder %s111, %s112
    %p126 = scmp.eq.s32.totalorder %s21, 1
    %p127 = por %p125, %p126
    %p129 = scmp.ne.s32.totalorder %s112, %s128
    %p130 = scmp.eq.s32.totalorder %s21, 0
    %p131 = por %p129, %p130
    %s132 = ssub.s32 1, %s23
    %s133 = smul.u32 %s24, %s132
    %s134 = ssub.s32 1, %s37
    %s135 = smul.u32 %s33, %s134
    %s136 = ssub.s32 %s22, %s41
    %s137 = ssub.s32 %s133, %s135
    %s138 = sor.u32 %s136, %s137
    %p139 = scmp.eq.s32.totalorder %s138, 0
    %s141 = sadd.s32 %s140, 1
    %s142 = scalar_select %p139, %s140, %s141
    %p145 = pneg %p139
    %p146 = scmp.eq.s32.totalorder %s15, 1
    %p147 = por %p145, %p146
    %p148 = scmp.ne.s32.totalorder %s140, %s143
    %p149 = scmp.eq.s32.totalorder %s15, 0
    %p150 = por %p148, %p149
    %p151 = scmp.ne.s32.totalorder %s140, %s143
    %p152 = scmp.eq.s32.totalorder %s20, 1
    %p153 = por %p151, %p152
    %p154 = scmp.ne.s32.totalorder %s143, %s144
    %p155 = scmp.eq.s32.totalorder %s20, 0
    %p156 = por %p154, %p155
    %p157 = scmp.ne.s32.totalorder %s143, %s144
    %p158 = scmp.eq.s32.totalorder %s21, 1
    %p159 = por %p157, %p158
    %p161 = scmp.ne.s32.totalorder %s144, %s160
    %p162 = scmp.eq.s32.totalorder %s21, 0
    %p163 = por %p161, %p162
    %s164 = smul.u32 %s24, %s23
    %s165 = smul.u32 %s33, %s37
    %s166 = ssub.s32 %s22, %s41
    %s167 = ssub.s32 %s164, %s165
    %s168 = sor.u32 %s166, %s167
    %p169 = scmp.eq.s32.totalorder %s168, 0
    %s171 = sadd.s32 %s170, 1
    %s172 = scalar_select %p169, %s170, %s171
    %p175 = pneg %p169
    %p176 = scmp.eq.s32.totalorder %s15, 1
    %p177 = por %p175, %p176
    %p178 = scmp.ne.s32.totalorder %s170, %s173
    %p179 = scmp.eq.s32.totalorder %s15, 0
    %p180 = por %p178, %p179
    %p181 = scmp.ne.s32.totalorder %s170, %s173
    %p182 = scmp.eq.s32.totalorder %s20, 1
    %p183 = por %p181, %p182
    %p184 = scmp.ne.s32.totalorder %s173, %s174
    %p185 = scmp.eq.s32.totalorder %s20, 0
    %p186 = por %p184, %p185
    %p187 = scmp.ne.s32.totalorder %s173, %s174
    %p188 = scmp.eq.s32.totalorder %s21, 1
    %p189 = por %p187, %p188
    %p191 = scmp.ne.s32.totalorder %s174, %s190
    %p192 = scmp.eq.s32.totalorder %s21, 0
    %p193 = por %p191, %p192
    %s195 = sadd.s32 %s194, 1
    %p198 = scmp.eq.s32.totalorder %s15, 1
    %p199 = scmp.ne.s32.totalorder %s194, %s196
    %p200 = scmp.eq.s32.totalorder %s15, 0
    %p201 = por %p199, %p200
    %p202 = scmp.ne.s32.totalorder %s194, %s196
    %p203 = scmp.eq.s32.totalorder %s20, 1
    %p204 = por %p202, %p203
    %p205 = scmp.ne.s32.totalorder %s196, %s197
    %p206 = scmp.eq.s32.totalorder %s20, 0
    %p207 = por %p205, %p206
    %p208 = scmp.ne.s32.totalorder %s196, %s197
    %p209 = scmp.eq.s32.totalorder %s21, 1
    %p210 = por %p208, %p209
    %p212 = scmp.ne.s32.totalorder %s197, %s211
    %p213 = scmp.eq.s32.totalorder %s21, 0
    %p214 = por %p212, %p213
    %s216 = sadd.s32 %s215, 1
    %p219 = scmp.eq.s32.totalorder %s15, 1
    %p220 = scmp.ne.s32.totalorder %s215, %s217
    %p221 = scmp.eq.s32.totalorder %s15, 0
    %p222 = por %p220, %p221
    %p223 = scmp.ne.s32.totalorder %s215, %s217
    %p224 = scmp.eq.s32.totalorder %s20, 1
    %p225 = por %p223, %p224
    %p226 = scmp.ne.s32.totalorder %s217, %s218
    %p227 = scmp.eq.s32.totalorder %s20, 0
    %p228 = por %p226, %p227
    %p229 = scmp.ne.s32.totalorder %s217, %s218
    %p230 = scmp.eq.s32.totalorder %s21, 1
    %p231 = por %p229, %p230
    %p233 = scmp.ne.s32.totalorder %s218, %s232
    %p234 = scmp.eq.s32.totalorder %s21, 0
    %p235 = por %p233, %p234
    %s237 = sadd.s32 %s236, 1
    %p240 = scmp.eq.s32.totalorder %s15, 1
    %p241 = scmp.ne.s32.totalorder %s236, %s238
    %p242 = scmp.eq.s32.totalorder %s15, 0
    %p243 = por %p241, %p242
    %p244 = scmp.ne.s32.totalorder %s236, %s238
    %p245 = scmp.eq.s32.totalorder %s20, 1
    %p246 = por %p244, %p245
    %p247 = scmp.ne.s32.totalorder %s238, %s239
    %p248 = scmp.eq.s32.totalorder %s20, 0
    %p249 = por %p247, %p248
    %p250 = scmp.ne.s32.totalorder %s238, %s239
    %p251 = scmp.eq.s32.totalorder %s21, 1
    %p252 = por %p250, %p251
    %p254 = scmp.ne.s32.totalorder %s239, %s253
    %p255 = scmp.eq.s32.totalorder %s21, 0
    %p256 = por %p254, %p255
    %s258 = sadd.s32 %s257, 1
    %p261 = scmp.eq.s32.totalorder %s15, 1
    %p262 = scmp.ne.s32.totalorder %s257, %s259
    %p263 = scmp.eq.s32.totalorder %s15, 0
    %p264 = por %p262, %p263
    %p265 = scmp.ne.s32.totalorder %s257, %s259
    %p266 = scmp.eq.s32.totalorder %s20, 1
    %p267 = por %p265, %p266
    %p268 = scmp.ne.s32.totalorder %s259, %s260
    %p269 = scmp.eq.s32.totalorder %s20, 0
    %p270 = por %p268, %p269
    %p271 = scmp.ne.s32.totalorder %s259, %s260
    %p272 = scmp.eq.s32.totalorder %s21, 1
    %p273 = por %p271, %p272
    %p275 = scmp.ne.s32.totalorder %s260, %s274
    %p276 = scmp.eq.s32.totalorder %s21, 0
    %p277 = por %p275, %p276
    %s278 = smul.u32 %s24, %s23
    %s279 = smul.u32 %s33, %s37
    %s280 = ssub.s32 %s22, %s41
    %s281 = ssub.s32 %s278, %s279
    %s282 = sor.u32 %s280, %s281
    %p283 = scmp.eq.s32.totalorder %s282, 0
    %s285 = sadd.s32 %s284, 1
    %s286 = scalar_select %p283, %s284, %s285
    %p289 = pneg %p283
    %p290 = scmp.eq.s32.totalorder %s15, 1
    %p291 = por %p289, %p290
    %p292 = scmp.ne.s32.totalorder %s284, %s287
    %p293 = scmp.eq.s32.totalorder %s15, 0
    %p294 = por %p292, %p293
    %p295 = scmp.ne.s32.totalorder %s284, %s287
    %p296 = scmp.eq.s32.totalorder %s20, 1
    %p297 = por %p295, %p296
    %p298 = scmp.ne.s32.totalorder %s287, %s288
    %p299 = scmp.eq.s32.totalorder %s20, 0
    %p300 = por %p298, %p299
    %p301 = scmp.ne.s32.totalorder %s287, %s288
    %p302 = scmp.eq.s32.totalorder %s21, 1
    %p303 = por %p301, %p302
    %p305 = scmp.ne.s32.totalorder %s288, %s304
    %p306 = scmp.eq.s32.totalorder %s21, 0
    %p307 = por %p305, %p306
    %p308 = scmp.le.s32.totalorder 1, %s15
    %p309 = scmp.lt.s32.totalorder %s15, 3
    %p310 = pnand %p308, %p309
    %p311 = pneg %p310
    // Predicated region
    $region9: #{mamba2_forward.12} parent=5 // pred_check
      _
    $region10: #{mamba2_forward.12} parent=5 // pred_check_branch
      %313 = sbr.rel (%p310) target = $region12
    $region11: #{mamba2_forward.12} parent=5 // pred_region
      %s314 = ssub.s32 %s15, 1
      // Predicated region
      $region13: #{mamba2_forward.12} parent=11 // pred_check
        %p315 = pneg %p124
      $region14: #{mamba2_forward.12} parent=11 // pred_check_branch
        %317 = sbr.rel (%p315) target = $region16
      $region15: #{mamba2_forward.12} parent=11 // pred_region
        %s318 = smul.u32 8, %s27
        %p319 = scmp.lt.s32.totalorder %s25, 0
        %s320 = scalar_select %p319, %s25, 0
        %p321 = scmp.lt.s32.totalorder %s318, 7
        %s322 = scalar_select %p321, %s318, 7
        %s323 = smul.addr %s320, 8
        %s324 = sadd.s32 %s322, %s323
        %s325 = smul.addr %s324, 4
        %s326 = scalar_lea.vmem %s2, %s325
        %s327 = smul.u32 8, %s27
      $region16: #{mamba2_forward.12} parent=11 // pred_fallthru
        _
      // Predicated region
      $region17: #{mamba2_forward.12} parent=11 // pred_check
        %p328 = pneg %p207
      $region18: #{mamba2_forward.12} parent=11 // pred_check_branch
        %330 = sbr.rel (%p328) target = $region20
      $region19: #{mamba2_forward.12} parent=11 // pred_region
        _
      $region20: #{mamba2_forward.12} parent=11 // pred_fallthru
        _
      // Predicated region
      $region21: #{mamba2_forward.12} parent=11 // pred_check
        %p331 = pneg %p228
      $region22: #{mamba2_forward.12} parent=11 // pred_check_branch
        %333 = sbr.rel (%p331) target = $region24
      $region23: #{mamba2_forward.12} parent=11 // pred_region
        _
      $region24: #{mamba2_forward.12} parent=11 // pred_fallthru
        _
      // Predicated region
      $region25: #{mamba2_forward.12} parent=11 // pred_check
        %p334 = pneg %p249
      $region26: #{mamba2_forward.12} parent=11 // pred_check_branch
        %336 = sbr.rel (%p334) target = $region28
      $region27: #{mamba2_forward.12} parent=11 // pred_region
        _
      $region28: #{mamba2_forward.12} parent=11 // pred_fallthru
        _
      // Predicated region
      $region29: #{mamba2_forward.12} parent=11 // pred_check
        %p337 = pneg %p270
      $region30: #{mamba2_forward.12} parent=11 // pred_check_branch
        %339 = sbr.rel (%p337) target = $region32
      $region31: #{mamba2_forward.12} parent=11 // pred_region
        _
      $region32: #{mamba2_forward.12} parent=11 // pred_fallthru
        _
    $region12: #{mamba2_forward.12} parent=5 // pred_fallthru
      _
    %p340 = scmp.lt.s32.totalorder %s15, 2
    // Predicated region
    $region33: #{mamba2_forward.12} parent=5 // pred_check
      %p341 = pneg %p340
    $region34: #{mamba2_forward.12} parent=5 // pred_check_branch
      %343 = sbr.rel (%p341) target = $region36
    $region35: #{mamba2_forward.12} parent=5 // pred_region
      // Predicated region
      $region37: #{mamba2_forward.12} parent=35 // pred_check
        %p344 = pneg %p60
      $region38: #{mamba2_forward.12} parent=35 // pred_check_branch
        %346 = sbr.rel (%p344) target = $region40
      $region39: #{mamba2_forward.12} parent=35 // pred_region
        %s347 = ssub.s32 1, %s23
        %s348 = smul.u32 %s24, %s347
        %s349 = smul.u32 8, %s348
        %p350 = scmp.lt.s32.totalorder %s22, 0
        %s351 = scalar_select %p350, %s22, 0
        %p352 = scmp.lt.s32.totalorder %s349, 7
        %s353 = scalar_select %p352, %s349, 7
        %s354 = smul.addr %s351, 8
        %s355 = sadd.s32 %s353, %s354
        %s356 = smul.addr %s355, 4
        %s357 = scalar_lea.vmem %s0, %s356
        %s358 = ssub.s32 1, %s23
        %s359 = smul.u32 %s24, %s358
        %s360 = smul.u32 8, %s359
      $region40: #{mamba2_forward.12} parent=35 // pred_fallthru
        _
      // Predicated region
      $region41: #{mamba2_forward.12} parent=35 // pred_check
        %p361 = pneg %p90
      $region42: #{mamba2_forward.12} parent=35 // pred_check_branch
        %363 = sbr.rel (%p361) target = $region44
      $region43: #{mamba2_forward.12} parent=35 // pred_region
        %s364 = smul.u32 %s24, %s23
        %s365 = smul.u32 8, %s364
        %p366 = scmp.lt.s32.totalorder %s22, 0
        %s367 = scalar_select %p366, %s22, 0
        %p368 = scmp.lt.s32.totalorder %s365, 7
        %s369 = scalar_select %p368, %s365, 7
        %s370 = smul.addr %s367, 8
        %s371 = sadd.s32 %s369, %s370
        %s372 = smul.addr %s371, 4
        %s373 = scalar_lea.vmem %s1, %s372
        %s374 = smul.u32 %s24, %s23
        %s375 = smul.u32 8, %s374
      $region44: #{mamba2_forward.12} parent=35 // pred_fallthru
        _
      // Predicated region
      $region45: #{mamba2_forward.12} parent=35 // pred_check
        %p376 = pneg %p150
      $region46: #{mamba2_forward.12} parent=35 // pred_check_branch
        %378 = sbr.rel (%p376) target = $region48
      $region47: #{mamba2_forward.12} parent=35 // pred_region
        %s379 = ssub.s32 1, %s23
        %s380 = smul.u32 %s24, %s379
        %s381 = smul.u32 8, %s380
        %p382 = scmp.lt.s32.totalorder %s22, 0
        %s383 = scalar_select %p382, %s22, 0
        %p384 = scmp.lt.s32.totalorder %s381, 7
        %s385 = scalar_select %p384, %s381, 7
        %s386 = smul.addr %s383, 8
        %s387 = sadd.s32 %s385, %s386
        %s388 = smul.addr %s387, 8
        %s389 = scalar_lea.vmem %s3, %s388
        %s390 = ssub.s32 1, %s23
        %s391 = smul.u32 %s24, %s390
        %s392 = smul.u32 8, %s391
      $region48: #{mamba2_forward.12} parent=35 // pred_fallthru
        _
      // Predicated region
      $region49: #{mamba2_forward.12} parent=35 // pred_check
        %p393 = pneg %p180
      $region50: #{mamba2_forward.12} parent=35 // pred_check_branch
        %395 = sbr.rel (%p393) target = $region52
      $region51: #{mamba2_forward.12} parent=35 // pred_region
        %s396 = smul.u32 %s24, %s23
        %s397 = smul.u32 8, %s396
        %p398 = scmp.lt.s32.totalorder %s22, 0
        %s399 = scalar_select %p398, %s22, 0
        %p400 = scmp.lt.s32.totalorder %s397, 7
        %s401 = scalar_select %p400, %s397, 7
        %s402 = smul.addr %s399, 8
        %s403 = sadd.s32 %s401, %s402
        %s404 = smul.addr %s403, 4
        %s405 = scalar_lea.vmem %s4, %s404
        %s406 = smul.u32 %s24, %s23
        %s407 = smul.u32 8, %s406
      $region52: #{mamba2_forward.12} parent=35 // pred_fallthru
        _
    $region36: #{mamba2_forward.12} parent=5 // pred_fallthru
      _
    %p408 = scmp.le.s32.totalorder 1, %s15
    %p409 = scmp.lt.s32.totalorder %s15, 3
    %p410 = pnand %p408, %p409
    %p411 = pneg %p410
    // Predicated region
    $region53: #{mamba2_forward.12} parent=5 // pred_check
      _
    $region54: #{mamba2_forward.12} parent=5 // pred_check_branch
      %413 = sbr.rel (%p410) target = $region56
    $region55: #{mamba2_forward.12} parent=5 // pred_region
      %s414 = ssub.s32 %s15, 1
      %s415 = ssub.s32 1, %s26
      %s416 = smul.u32 %s27, %s415
      %s417 = smul.u32 8, %s416
      %p418 = scmp.lt.s32.totalorder %s25, 0
      %s419 = scalar_select %p418, %s25, 0
      %p420 = scmp.lt.s32.totalorder %s417, 7
      %s421 = scalar_select %p420, %s417, 7
      %s422 = smul.addr %s419, 8
      %s423 = sadd.s32 %s421, %s422
      %s424 = smul.addr %s423, 4
      %s425 = scalar_lea.vmem %s0, %s424
      %p426 = pneg %p66
      %p427 = pneg %p63
      %s428 = smul.u32 %s27, %s26
      %s429 = smul.u32 8, %s428
      %p430 = scmp.lt.s32.totalorder %s25, 0
      %s431 = scalar_select %p430, %s25, 0
      %p432 = scmp.lt.s32.totalorder %s429, 7
      %s433 = scalar_select %p432, %s429, 7
      %s434 = smul.addr %s431, 8
      %s435 = sadd.s32 %s433, %s434
      %s436 = smul.addr %s435, 4
      %s437 = scalar_lea.vmem %s1, %s436
      %p438 = pneg %p96
      %p439 = pneg %p93
      %s440 = smul.u32 8, %s27
      %p441 = scmp.lt.s32.totalorder %s25, 0
      %s442 = scalar_select %p441, %s25, 0
      %p443 = scmp.lt.s32.totalorder %s440, 7
      %s444 = scalar_select %p443, %s440, 7
      %s445 = smul.addr %s442, 8
      %s446 = sadd.s32 %s444, %s445
      %s447 = smul.addr %s446, 4
      %s448 = scalar_lea.vmem %s2, %s447
      %p449 = pneg %p124
      %p450 = pneg %p121
      %s451 = ssub.s32 1, %s26
      %s452 = smul.u32 %s27, %s451
      %s453 = smul.u32 8, %s452
      %p454 = scmp.lt.s32.totalorder %s25, 0
      %s455 = scalar_select %p454, %s25, 0
      %p456 = scmp.lt.s32.totalorder %s453, 7
      %s457 = scalar_select %p456, %s453, 7
      %s458 = smul.addr %s455, 8
      %s459 = sadd.s32 %s457, %s458
      %s460 = smul.addr %s459, 8
      %s461 = scalar_lea.vmem %s3, %s460
      %p462 = pneg %p156
      %p463 = pneg %p153
      %s464 = smul.u32 %s27, %s26
      %s465 = smul.u32 8, %s464
      %p466 = scmp.lt.s32.totalorder %s25, 0
      %s467 = scalar_select %p466, %s25, 0
      %p468 = scmp.lt.s32.totalorder %s465, 7
      %s469 = scalar_select %p468, %s465, 7
      %s470 = smul.addr %s467, 8
      %s471 = sadd.s32 %s469, %s470
      %s472 = smul.addr %s471, 4
      %s473 = scalar_lea.vmem %s4, %s472
      %p474 = pneg %p186
      %p475 = pneg %p183
      %p476 = pneg %p207
      %p477 = pneg %p204
      %p478 = pneg %p228
      %p479 = pneg %p225
      %p480 = pneg %p249
      %p481 = pneg %p246
      %p482 = pneg %p270
      %p483 = pneg %p267
      %p484 = pneg %p300
      %p485 = pneg %p297
      %s486 = smul.u32 %s27, %s26
      %s487 = smul.u32 8, %s486
      %p488 = scmp.lt.s32.totalorder %s25, 0
      %s489 = scalar_select %p488, %s25, 0
      %p490 = scmp.lt.s32.totalorder %s487, 7
      %s491 = scalar_select %p490, %s487, 7
      %s492 = smul.addr %s489, 8
      %s493 = sadd.s32 %s491, %s492
      %s494 = smul.addr %s493, 4
      %s495 = scalar_lea.vmem %s9, %s494
      %s496 = ssub.s32 1, %s26
      %s497 = smul.u32 %s27, %s496
      %s498 = smul.u32 8, %s497
      %p499 = scmp.lt.s32.totalorder %s25, 0
      %s500 = scalar_select %p499, %s25, 0
      %p501 = scmp.lt.s32.totalorder %s498, 7
      %s502 = scalar_select %p501, %s498, 7
      %s503 = smul.addr %s500, 8
      %s504 = sadd.s32 %s502, %s503
      %s505 = smul.addr %s504, 4
      %s506 = scalar_lea.vmem %s0, %s505
      %s507 = ssub.s32 1, %s26
      %s508 = smul.u32 %s27, %s507
      %s509 = smul.u32 8, %s508
      %s510 = smul.u32 %s27, %s26
      %s511 = smul.u32 8, %s510
      %p512 = scmp.lt.s32.totalorder %s25, 0
      %s513 = scalar_select %p512, %s25, 0
      %p514 = scmp.lt.s32.totalorder %s511, 7
      %s515 = scalar_select %p514, %s511, 7
      %s516 = smul.addr %s513, 8
      %s517 = sadd.s32 %s515, %s516
      %s518 = smul.addr %s517, 4
      %s519 = scalar_lea.vmem %s1, %s518
      %s520 = smul.u32 %s27, %s26
      %s521 = smul.u32 8, %s520
      %s522 = smul.u32 8, %s27
      %p523 = scmp.lt.s32.totalorder %s25, 0
      %s524 = scalar_select %p523, %s25, 0
      %p525 = scmp.lt.s32.totalorder %s522, 7
      %s526 = scalar_select %p525, %s522, 7
      %s527 = smul.addr %s524, 8
      %s528 = sadd.s32 %s526, %s527
      %s529 = smul.addr %s528, 4
      %s530 = scalar_lea.vmem %s2, %s529
      %s531 = smul.u32 8, %s27
      %s532 = ssub.s32 1, %s26
      %s533 = smul.u32 %s27, %s532
      %s534 = smul.u32 8, %s533
      %p535 = scmp.lt.s32.totalorder %s25, 0
      %s536 = scalar_select %p535, %s25, 0
      %p537 = scmp.lt.s32.totalorder %s534, 7
      %s538 = scalar_select %p537, %s534, 7
      %s539 = smul.addr %s536, 8
      %s540 = sadd.s32 %s538, %s539
      %s541 = smul.addr %s540, 8
      %s542 = scalar_lea.vmem %s3, %s541
      %s543 = ssub.s32 1, %s26
      %s544 = smul.u32 %s27, %s543
      %s545 = smul.u32 8, %s544
      %s546 = smul.u32 %s27, %s26
      %s547 = smul.u32 8, %s546
      %p548 = scmp.lt.s32.totalorder %s25, 0
      %s549 = scalar_select %p548, %s25, 0
      %p550 = scmp.lt.s32.totalorder %s547, 7
      %s551 = scalar_select %p550, %s547, 7
      %s552 = smul.addr %s549, 8
      %s553 = sadd.s32 %s551, %s552
      %s554 = smul.addr %s553, 4
      %s555 = scalar_lea.vmem %s4, %s554
      %s556 = smul.u32 %s27, %s26
      %s557 = smul.u32 8, %s556
      %s558 = smul.u32 %s27, %s26
      %s559 = smul.u32 8, %s558
      %p560 = scmp.lt.s32.totalorder %s25, 0
      %s561 = scalar_select %p560, %s25, 0
      %p562 = scmp.lt.s32.totalorder %s559, 7
      %s563 = scalar_select %p562, %s559, 7
      %s564 = smul.addr %s561, 8
      %s565 = sadd.s32 %s563, %s564
      %s566 = smul.addr %s565, 4
      %s567 = scalar_lea.vmem %s9, %s566
      %s568 = smul.u32 %s27, %s26
      %s569 = smul.u32 8, %s568
      %p570 = scmp.eq.s32.totalorder %s26, 0
      %p571 = scmp.eq.s32.totalorder %s27, 0
      %p572 = pnand %p570, %p571
      %p573 = pneg %p572
      // Predicated region
      $region57: #{mamba2_forward.12} parent=55 // pred_check
        _
      $region58: #{mamba2_forward.12} parent=55 // pred_check_branch
        %575 = sbr.rel (%p572) target = $region60
      $region59: #{mamba2_forward.12} parent=55 // pred_region
        %vm576 = vcmask 523264
        %577 = vst.msk [vmem:[#allocation2] sm:$0xff] %vm576, 0.0
        %578 = vst.msk [vmem:[#allocation2 + $0x8] sm:$0xff] %vm576, 0.0
      $region60: #{mamba2_forward.12} parent=55 // pred_fallthru
        _
      // Predicated region
      $region61: #{mamba2_forward.12} parent=55 // pred_check
        %p579 = pneg %p570
      $region62: #{mamba2_forward.12} parent=55 // pred_check_branch
        %581 = sbr.rel (%p579) target = $region64
      $region63: #{mamba2_forward.12} parent=55 // pred_region
        %v582 = vld [vmem:[%s542] sm:$0xff]
        %v583 = vld [vmem:[%s542 + $0x8] sm:$0xff]
        %v584 = vld [vmem:[%s542 + $0x10] sm:$0xff]
        %v585 = vld [vmem:[%s542 + $0x18] sm:$0xff]
        %v586 = vld [vmem:[%s542 + $0x20] sm:$0xff]
        %v587 = vld [vmem:[%s542 + $0x28] sm:$0xff]
        %v588 = vld [vmem:[%s542 + $0x30] sm:$0xff]
        %v589 = vld [vmem:[%s542 + $0x38] sm:$0xff]
        %v590 = vld [vmem:[%s5] sm:$0xf]
        %vm591 = vcmask 31744
        %v593 = vsel %vm591, %v582, 0
        %v596 = vsel %vm591, %v583, 0
        %v599 = vsel %vm591, %v584, 0
        %v602 = vsel %vm591, %v585, 0
        %v605 = vsel %vm591, %v586, 0
        %v608 = vsel %vm591, %v587, 0
        %v611 = vsel %vm591, %v588, 0
        %v614 = vsel %vm591, %v589, 0
        %vm616 = vcmask 1043456
        %v618 = vsel %vm616, %v590, 0
        %620 = vmatpush.msra.mxu0 0.0
        %621 = vmatpush.msra.mxu0 0.0
        %622 = vmatpush.msra.mxu0 0.0
        %623 = vmatpush.msra.mxu0 0.0
        %624 = vmatpush.msra.mxu0 0.0
        %625 = vmatpush.msra.mxu0 0.0
        %626 = vmatpush.msra.mxu0 0.0
        %627 = vmatpush.msra.mxu0 0.0
        %628 = vmatpush.msra.mxu0 0.0
        %629 = vmatpush.msra.mxu0 0.0
        %630 = vmatpush.msra.mxu0 0.0
        %631 = vmatpush.msra.mxu0 0.0
        %632 = vmatpush.msra.mxu0 0.0
        %633 = vmatpush.msra.mxu0 0.0
        %634 = vmatpush.msra.mxu0 0.0
        %635 = vmatpush.msra.mxu0 %v618
        %636 = vmatmul.f32.gmra.mxu0 %v593
        %v637 = vpop.f32.mrf.mxu0
        %v638 = vadd.f32 0.0, %v637
        %639 = vmatmul.f32.gmra.mxu0 %v596
        %v640 = vpop.f32.mrf.mxu0
        %v641 = vadd.f32 0.0, %v640
        %642 = vmatmul.f32.gmra.mxu0 %v599
        %v643 = vpop.f32.mrf.mxu0
        %v644 = vadd.f32 0.0, %v643
        %645 = vmatmul.f32.gmra.mxu0 %v602
        %v646 = vpop.f32.mrf.mxu0
        %v647 = vadd.f32 0.0, %v646
        %648 = vmatmul.f32.gmra.mxu0 %v605
        %v649 = vpop.f32.mrf.mxu0
        %v650 = vadd.f32 0.0, %v649
        %651 = vmatmul.f32.gmra.mxu0 %v608
        %v652 = vpop.f32.mrf.mxu0
        %v653 = vadd.f32 0.0, %v652
        %654 = vmatmul.f32.gmra.mxu0 %v611
        %v655 = vpop.f32.mrf.mxu0
        %v656 = vadd.f32 0.0, %v655
        %657 = vmatmul.f32.gmra.mxu0 %v614
        %v658 = vpop.f32.mrf.mxu0
        %v659 = vadd.f32 0.0, %v658
        %660 = vdwg.mxu0
        %v661 = vld [vmem:[%s530] sm:$0xf]
        %v662 = vld [vmem:[%s530 + $0x4] sm:$0xf]
        %v663 = vld [vmem:[%s530 + $0x8] sm:$0xf]
        %v664 = vld [vmem:[%s530 + $0xc] sm:$0xf]
        %v665 = vld [vmem:[%s530 + $0x10] sm:$0xf]
        %v666 = vld [vmem:[%s530 + $0x14] sm:$0xf]
        %v667 = vld [vmem:[%s530 + $0x18] sm:$0xf]
        %v668 = vld [vmem:[%s530 + $0x1c] sm:$0xf]
        %v669 = vunpack.c.l.bf16 %v661
        %v670 = vunpack.c.l.bf16 %v662
        %v671 = vunpack.c.l.bf16 %v663
        %v672 = vunpack.c.l.bf16 %v664
        %v673 = vunpack.c.l.bf16 %v665
        %v674 = vunpack.c.l.bf16 %v666
        %v675 = vunpack.c.l.bf16 %v667
        %v676 = vunpack.c.l.bf16 %v668
        %v677 = vmul.f32 %v669, %v638
        %v678 = vmul.f32 %v670, %v641
        %v679 = vmul.f32 %v671, %v644
        %v680 = vmul.f32 %v672, %v647
        %v681 = vmul.f32 %v673, %v650
        %v682 = vmul.f32 %v674, %v653
        %v683 = vmul.f32 %v675, %v656
        %v684 = vmul.f32 %v676, %v659
        %v685 = vld [vmem:[#allocation2] sm:$0xff]
        %v686 = vld [vmem:[#allocation2 + $0x8] sm:$0xff]
        %v687 = vld [vmem:[%s506] sm:$0xf]
        %v688 = vld [vmem:[%s506 + $0x4] sm:$0xf]
        %v689 = vld [vmem:[%s506 + $0x8] sm:$0xf]
        %v690 = vld [vmem:[%s506 + $0xc] sm:$0xf]
        %v691 = vld [vmem:[%s506 + $0x10] sm:$0xf]
        %v692 = vld [vmem:[%s506 + $0x14] sm:$0xf]
        %v693 = vld [vmem:[%s506 + $0x18] sm:$0xf]
        %v694 = vld [vmem:[%s506 + $0x1c] sm:$0xf]
        %v695 = vunpack.c.l.bf16 %v687
        %v696 = vunpack.c.l.bf16 %v688
        %v697 = vunpack.c.l.bf16 %v689
        %v698 = vunpack.c.l.bf16 %v690
        %v699 = vunpack.c.l.bf16 %v691
        %v700 = vunpack.c.l.bf16 %v692
        %v701 = vunpack.c.l.bf16 %v693
        %v702 = vunpack.c.l.bf16 %v694
        %703 = vxpose.xlu0.b32.start [1/16] %v695, 128
        %704 = vxpose.xlu0.b32.cont [2/16] %v696, 128
        %705 = vxpose.xlu0.b32.cont [3/16] %v697, 128
        %706 = vxpose.xlu0.b32.cont [4/16] %v698, 128
        %707 = vxpose.xlu0.b32.cont [5/16] %v699, 128
        %708 = vxpose.xlu0.b32.cont [6/16] %v700, 128
        %709 = vxpose.xlu0.b32.cont [7/16] %v701, 128
        %710 = vxpose.xlu0.b32.cont [8/16] %v702, 128
        %711 = vxpose.xlu0.b32.cont [9/16] 0.0, 128
        %712 = vxpose.xlu0.b32.cont [10/16] 0.0, 128
        %713 = vxpose.xlu0.b32.cont [11/16] 0.0, 128
        %714 = vxpose.xlu0.b32.cont [12/16] 0.0, 128
        %715 = vxpose.xlu0.b32.cont [13/16] 0.0, 128
        %716 = vxpose.xlu0.b32.cont [14/16] 0.0, 128
        %717 = vxpose.xlu0.b32.cont [15/16] 0.0, 128
        %718 = vxpose.xlu0.b32.end [16/16] 0.0, 128
        %v719 = vpop.trf.xlu0
        %v720 = vpop.trf.xlu0
        %v721 = vpop.trf.xlu0
        %v722 = vpop.trf.xlu0
        %v723 = vpop.trf.xlu0
        %v724 = vpop.trf.xlu0
        %v725 = vpop.trf.xlu0
        %v726 = vpop.trf.xlu0
        %v727 = vpop.trf.xlu0
        %v728 = vpop.trf.xlu0
        %v729 = vpop.trf.xlu0
        %v730 = vpop.trf.xlu0
        %v731 = vpop.trf.xlu0
        %v732 = vpop.trf.xlu0
        %v733 = vpop.trf.xlu0
        %v734 = vpop.trf.xlu0
        %vm735 = vcmask 523264
        %v737 = vsel %vm735, %v719, 0
        %v740 = vsel %vm735, %v720, 0
        %742 = vmatpush.msra.mxu0 0.0
        %743 = vmatpush.msra.mxu0 0.0
        %744 = vmatpush.msra.mxu0 0.0
        %745 = vmatpush.msra.mxu0 0.0
        %746 = vmatpush.msra.mxu0 0.0
        %747 = vmatpush.msra.mxu0 0.0
        %748 = vmatpush.msra.mxu0 0.0
        %749 = vmatpush.msra.mxu0 0.0
        %750 = vmatpush.msra.mxu0 %v684
        %751 = vmatpush.msra.mxu0 %v683
        %752 = vmatpush.msra.mxu0 %v682
        %753 = vmatpush.msra.mxu0 %v681
        %754 = vmatpush.msra.mxu0 %v680
        %755 = vmatpush.msra.mxu0 %v679
        %756 = vmatpush.msra.mxu0 %v678
        %757 = vmatpush.msra.mxu0 %v677
        %758 = vmatmul.f32.gmra.mxu0 %v737
        %v759 = vpop.f32.mrf.mxu0
        %v760 = vadd.f32 0.0, %v759
        %761 = vmatmul.f32.gmra.mxu0 %v740
        %v762 = vpop.f32.mrf.mxu0
        %v763 = vadd.f32 0.0, %v762
        %764 = vdwg.mxu0
        %v765 = vadd.f32 %v685, %v760
        %v766 = vadd.f32 %v686, %v763
        %767 = vst.msk [vmem:[#allocation2] sm:$0xff] %vm735, %v765
        %768 = vst.msk [vmem:[#allocation2 + $0x8] sm:$0xff] %vm735, %v766
      $region64: #{mamba2_forward.12} parent=55 // pred_fallthru
        _
      %p769 = scmp.eq.s32.totalorder %s26, 1
      // Predicated region
      $region65: #{mamba2_forward.12} parent=55 // pred_check
        %p770 = pneg %p769
      $region66: #{mamba2_forward.12} parent=55 // pred_check_branch
        %772 = sbr.rel (%p770) target = $region68
      $region67: #{mamba2_forward.12} parent=55 // pred_region
        %v773 = vld [vmem:[%s519] sm:$0xf]
        %v774 = vld [vmem:[%s519 + $0x4] sm:$0xf]
        %v775 = vld [vmem:[%s519 + $0x8] sm:$0xf]
        %v776 = vld [vmem:[%s519 + $0xc] sm:$0xf]
        %v777 = vld [vmem:[%s519 + $0x10] sm:$0xf]
        %v778 = vld [vmem:[%s519 + $0x14] sm:$0xf]
        %v779 = vld [vmem:[%s519 + $0x18] sm:$0xf]
        %v780 = vld [vmem:[%s519 + $0x1c] sm:$0xf]
        %v781 = vunpack.c.l.bf16 %v773
        %v782 = vunpack.c.l.bf16 %v774
        %v783 = vunpack.c.l.bf16 %v775
        %v784 = vunpack.c.l.bf16 %v776
        %v785 = vunpack.c.l.bf16 %v777
        %v786 = vunpack.c.l.bf16 %v778
        %v787 = vunpack.c.l.bf16 %v779
        %v788 = vunpack.c.l.bf16 %v780
        %v789 = vld [vmem:[#allocation2] sm:$0xff]
        %v790 = vld [vmem:[#allocation2 + $0x8] sm:$0xff]
        %v791 = vld [vmem:[%s530] sm:$0xf]
        %v792 = vld [vmem:[%s530 + $0x4] sm:$0xf]
        %v793 = vld [vmem:[%s530 + $0x8] sm:$0xf]
        %v794 = vld [vmem:[%s530 + $0xc] sm:$0xf]
        %v795 = vld [vmem:[%s530 + $0x10] sm:$0xf]
        %v796 = vld [vmem:[%s530 + $0x14] sm:$0xf]
        %v797 = vld [vmem:[%s530 + $0x18] sm:$0xf]
        %v798 = vld [vmem:[%s530 + $0x1c] sm:$0xf]
        %v799 = vunpack.c.l.bf16 %v791
        %v800 = vunpack.c.l.bf16 %v792
        %v801 = vunpack.c.l.bf16 %v793
        %v802 = vunpack.c.l.bf16 %v794
        %v803 = vunpack.c.l.bf16 %v795
        %v804 = vunpack.c.l.bf16 %v796
        %v805 = vunpack.c.l.bf16 %v797
        %v806 = vunpack.c.l.bf16 %v798
        %v807 = vld [vmem:[%s6] sm:$0x1]
        %v809 = vperm.slane %v807, 0
        %v811 = vmul.f32 %v799, %v809
        %v812 = vmul.f32 %v800, %v809
        %v813 = vmul.f32 %v801, %v809
        %v814 = vmul.f32 %v802, %v809
        %v815 = vmul.f32 %v803, %v809
        %v816 = vmul.f32 %v804, %v809
        %v817 = vmul.f32 %v805, %v809
        %v818 = vmul.f32 %v806, %v809
        %vm819 = vcmask 130048
        %v821 = vsel %vm819, %v781, 0
        %v824 = vsel %vm819, %v782, 0
        %v827 = vsel %vm819, %v783, 0
        %v830 = vsel %vm819, %v784, 0
        %v833 = vsel %vm819, %v785, 0
        %v836 = vsel %vm819, %v786, 0
        %v839 = vsel %vm819, %v787, 0
        %v842 = vsel %vm819, %v788, 0
        %844 = vmatpush.msra.mxu0 0.0
        %845 = vmatpush.msra.mxu0 0.0
        %846 = vmatpush.msra.mxu0 0.0
        %847 = vmatpush.msra.mxu0 0.0
        %848 = vmatpush.msra.mxu0 0.0
        %849 = vmatpush.msra.mxu0 0.0
        %850 = vmatpush.msra.mxu0 0.0
        %851 = vmatpush.msra.mxu0 0.0
        %852 = vmatpush.msra.mxu0 0.0
        %853 = vmatpush.msra.mxu0 0.0
        %854 = vmatpush.msra.mxu0 0.0
        %855 = vmatpush.msra.mxu0 0.0
        %856 = vmatpush.msra.mxu0 0.0
        %857 = vmatpush.msra.mxu0 0.0
        %858 = vmatpush.msra.mxu0 %v790
        %859 = vmatpush.msra.mxu0 %v789
        %860 = vmatmul.f32.gmra.mxu0 %v821
        %v861 = vpop.f32.mrf.mxu0
        %v862 = vadd.f32 %v811, %v861
        %863 = vmatmul.f32.gmra.mxu0 %v824
        %v864 = vpop.f32.mrf.mxu0
        %v865 = vadd.f32 %v812, %v864
        %866 = vmatmul.f32.gmra.mxu0 %v827
        %v867 = vpop.f32.mrf.mxu0
        %v868 = vadd.f32 %v813, %v867
        %869 = vmatmul.f32.gmra.mxu0 %v830
        %v870 = vpop.f32.mrf.mxu0
        %v871 = vadd.f32 %v814, %v870
        %872 = vmatmul.f32.gmra.mxu0 %v833
        %v873 = vpop.f32.mrf.mxu0
        %v874 = vadd.f32 %v815, %v873
        %875 = vmatmul.f32.gmra.mxu0 %v836
        %v876 = vpop.f32.mrf.mxu0
        %v877 = vadd.f32 %v816, %v876
        %878 = vmatmul.f32.gmra.mxu0 %v839
        %v879 = vpop.f32.mrf.mxu0
        %v880 = vadd.f32 %v817, %v879
        %881 = vmatmul.f32.gmra.mxu0 %v842
        %v882 = vpop.f32.mrf.mxu0
        %v883 = vadd.f32 %v818, %v882
        %884 = vdwg.mxu0
        %vm885 = vcmask 523264
        %v886 = vsel %vm885, %v862, 0.0
        %887 = vadd.xlane.f32.xlu0 %v886
        %v888 = vpop.xlane.xlu0 %887
        %v889 = vsel %vm885, %v865, 0.0
        %890 = vadd.xlane.f32.xlu0 %v889
        %v891 = vpop.xlane.xlu0 %890
        %v892 = vsel %vm885, %v868, 0.0
        %893 = vadd.xlane.f32.xlu0 %v892
        %v894 = vpop.xlane.xlu0 %893
        %v895 = vsel %vm885, %v871, 0.0
        %896 = vadd.xlane.f32.xlu0 %v895
        %v897 = vpop.xlane.xlu0 %896
        %v898 = vsel %vm885, %v874, 0.0
        %899 = vadd.xlane.f32.xlu0 %v898
        %v900 = vpop.xlane.xlu0 %899
        %v901 = vsel %vm885, %v877, 0.0
        %902 = vadd.xlane.f32.xlu0 %v901
        %v903 = vpop.xlane.xlu0 %902
        %v904 = vsel %vm885, %v880, 0.0
        %905 = vadd.xlane.f32.xlu0 %v904
        %v906 = vpop.xlane.xlu0 %905
        %v907 = vsel %vm885, %v883, 0.0
        %908 = vadd.xlane.f32.xlu0 %v907
        %v909 = vpop.xlane.xlu0 %908
        %v910 = vrcp.pop 64.0
        %v911 = vmul.f32 64.0, %v910
        %v912 = vsub.f32 1.0, %v911
        %v913 = vmul.f32 %v910, %v912
        %v914 = vadd.f32 %v910, %v913
        %vm915 = vweird.f32 %v910
        %v916 = vsel %vm915, %v910, %v914
        %v917 = vmul.f32 %v888, %v916
        %v918 = vmul.f32 %v891, %v916
        %v919 = vmul.f32 %v894, %v916
        %v920 = vmul.f32 %v897, %v916
        %v921 = vmul.f32 %v900, %v916
        %v922 = vmul.f32 %v903, %v916
        %v923 = vmul.f32 %v906, %v916
        %v924 = vmul.f32 %v909, %v916
        %v925 = vsub.f32 %v862, %v917
        %v926 = vsub.f32 %v865, %v918
        %v927 = vsub.f32 %v868, %v919
        %v928 = vsub.f32 %v871, %v920
        %v929 = vsub.f32 %v874, %v921
        %v930 = vsub.f32 %v877, %v922
        %v931 = vsub.f32 %v880, %v923
        %v932 = vsub.f32 %v883, %v924
        %v933 = vmul.f32 %v925, %v925
        %v934 = vmul.f32 %v926, %v926
        %v935 = vmul.f32 %v927, %v927
        %v936 = vmul.f32 %v928, %v928
        %v937 = vmul.f32 %v929, %v929
        %v938 = vmul.f32 %v930, %v930
        %v939 = vmul.f32 %v931, %v931
        %v940 = vmul.f32 %v932, %v932
        %v941 = vsel %vm885, %v933, 0.0
        %942 = vadd.xlane.f32.xlu0 %v941
        %v943 = vpop.xlane.xlu0 %942
        %v944 = vsel %vm885, %v934, 0.0
        %945 = vadd.xlane.f32.xlu0 %v944
        %v946 = vpop.xlane.xlu0 %945
        %v947 = vsel %vm885, %v935, 0.0
        %948 = vadd.xlane.f32.xlu0 %v947
        %v949 = vpop.xlane.xlu0 %948
        %v950 = vsel %vm885, %v936, 0.0
        %951 = vadd.xlane.f32.xlu0 %v950
        %v952 = vpop.xlane.xlu0 %951
        %v953 = vsel %vm885, %v937, 0.0
        %954 = vadd.xlane.f32.xlu0 %v953
        %v955 = vpop.xlane.xlu0 %954
        %v956 = vsel %vm885, %v938, 0.0
        %957 = vadd.xlane.f32.xlu0 %v956
        %v958 = vpop.xlane.xlu0 %957
        %v959 = vsel %vm885, %v939, 0.0
        %960 = vadd.xlane.f32.xlu0 %v959
        %v961 = vpop.xlane.xlu0 %960
        %v962 = vsel %vm885, %v940, 0.0
        %963 = vadd.xlane.f32.xlu0 %v962
        %v964 = vpop.xlane.xlu0 %963
        %v965 = vmul.f32 %v943, %v916
        %v966 = vmul.f32 %v946, %v916
        %v967 = vmul.f32 %v949, %v916
        %v968 = vmul.f32 %v952, %v916
        %v969 = vmul.f32 %v955, %v916
        %v970 = vmul.f32 %v958, %v916
        %v971 = vmul.f32 %v961, %v916
        %v972 = vmul.f32 %v964, %v916
        %v973 = vadd.f32 %v965, 1e-05
        %v974 = vadd.f32 %v966, 1e-05
        %v975 = vadd.f32 %v967, 1e-05
        %v976 = vadd.f32 %v968, 1e-05
        %v977 = vadd.f32 %v969, 1e-05
        %v978 = vadd.f32 %v970, 1e-05
        %v979 = vadd.f32 %v971, 1e-05
        %v980 = vadd.f32 %v972, 1e-05
        %v981 = vrsqrt.pop %v973
        %v982 = vmul.f32 %v981, %v973
        %v983 = vmul.f32 %v982, %v981
        %v984 = vmul.f32 0.5, %v983
        %v985 = vsub.f32 1.5, %v984
        %v986 = vmul.f32 %v981, %v985
        %vm987 = vweird.f32 %v973
        %vm988 = vweird.f32 %v981
        %vm989 = vmor %vm987, %vm988
        %v990 = vsel %vm989, %v981, %v986
        %v991 = vrsqrt.pop %v974
        %v992 = vmul.f32 %v991, %v974
        %v993 = vmul.f32 %v992, %v991
        %v994 = vmul.f32 0.5, %v993
        %v995 = vsub.f32 1.5, %v994
        %v996 = vmul.f32 %v991, %v995
        %vm997 = vweird.f32 %v974
        %vm998 = vweird.f32 %v991
        %vm999 = vmor %vm997, %vm998
        %v1000 = vsel %vm999, %v991, %v996
        %v1001 = vrsqrt.pop %v975
        %v1002 = vmul.f32 %v1001, %v975
        %v1003 = vmul.f32 %v1002, %v1001
        %v1004 = vmul.f32 0.5, %v1003
        %v1005 = vsub.f32 1.5, %v1004
        %v1006 = vmul.f32 %v1001, %v1005
        %vm1007 = vweird.f32 %v975
        %vm1008 = vweird.f32 %v1001
        %vm1009 = vmor %vm1007, %vm1008
        %v1010 = vsel %vm1009, %v1001, %v1006
        %v1011 = vrsqrt.pop %v976
        %v1012 = vmul.f32 %v1011, %v976
        %v1013 = vmul.f32 %v1012, %v1011
        %v1014 = vmul.f32 0.5, %v1013
        %v1015 = vsub.f32 1.5, %v1014
        %v1016 = vmul.f32 %v1011, %v1015
        %vm1017 = vweird.f32 %v976
        %vm1018 = vweird.f32 %v1011
        %vm1019 = vmor %vm1017, %vm1018
        %v1020 = vsel %vm1019, %v1011, %v1016
        %v1021 = vrsqrt.pop %v977
        %v1022 = vmul.f32 %v1021, %v977
        %v1023 = vmul.f32 %v1022, %v1021
        %v1024 = vmul.f32 0.5, %v1023
        %v1025 = vsub.f32 1.5, %v1024
        %v1026 = vmul.f32 %v1021, %v1025
        %vm1027 = vweird.f32 %v977
        %vm1028 = vweird.f32 %v1021
        %vm1029 = vmor %vm1027, %vm1028
        %v1030 = vsel %vm1029, %v1021, %v1026
        %v1031 = vrsqrt.pop %v978
        %v1032 = vmul.f32 %v1031, %v978
        %v1033 = vmul.f32 %v1032, %v1031
        %v1034 = vmul.f32 0.5, %v1033
        %v1035 = vsub.f32 1.5, %v1034
        %v1036 = vmul.f32 %v1031, %v1035
        %vm1037 = vweird.f32 %v978
        %vm1038 = vweird.f32 %v1031
        %vm1039 = vmor %vm1037, %vm1038
        %v1040 = vsel %vm1039, %v1031, %v1036
        %v1041 = vrsqrt.pop %v979
        %v1042 = vmul.f32 %v1041, %v979
        %v1043 = vmul.f32 %v1042, %v1041
        %v1044 = vmul.f32 0.5, %v1043
        %v1045 = vsub.f32 1.5, %v1044
        %v1046 = vmul.f32 %v1041, %v1045
        %vm1047 = vweird.f32 %v979
        %vm1048 = vweird.f32 %v1041
        %vm1049 = vmor %vm1047, %vm1048
        %v1050 = vsel %vm1049, %v1041, %v1046
        %v1051 = vrsqrt.pop %v980
        %v1052 = vmul.f32 %v1051, %v980
        %v1053 = vmul.f32 %v1052, %v1051
        %v1054 = vmul.f32 0.5, %v1053
        %v1055 = vsub.f32 1.5, %v1054
        %v1056 = vmul.f32 %v1051, %v1055
        %vm1057 = vweird.f32 %v980
        %vm1058 = vweird.f32 %v1051
        %vm1059 = vmor %vm1057, %vm1058
        %v1060 = vsel %vm1059, %v1051, %v1056
        %v1061 = vmul.f32 %v925, %v990
        %v1062 = vmul.f32 %v926, %v1000
        %v1063 = vmul.f32 %v927, %v1010
        %v1064 = vmul.f32 %v928, %v1020
        %v1065 = vmul.f32 %v929, %v1030
        %v1066 = vmul.f32 %v930, %v1040
        %v1067 = vmul.f32 %v931, %v1050
        %v1068 = vmul.f32 %v932, %v1060
        %v1069 = vld [vmem:[%s7] sm:$0x1]
        %v1071 = vperm.slane %v1069, 0
        %v1073 = vmul.f32 %v1061, %v1071
        %v1074 = vmul.f32 %v1062, %v1071
        %v1075 = vmul.f32 %v1063, %v1071
        %v1076 = vmul.f32 %v1064, %v1071
        %v1077 = vmul.f32 %v1065, %v1071
        %v1078 = vmul.f32 %v1066, %v1071
        %v1079 = vmul.f32 %v1067, %v1071
        %v1080 = vmul.f32 %v1068, %v1071
        %v1081 = vld [vmem:[%s8] sm:$0x1]
        %v1083 = vperm.slane %v1081, 0
        %v1085 = vadd.f32 %v1073, %v1083
        %v1086 = vadd.f32 %v1074, %v1083
        %v1087 = vadd.f32 %v1075, %v1083
        %v1088 = vadd.f32 %v1076, %v1083
        %v1089 = vadd.f32 %v1077, %v1083
        %v1090 = vadd.f32 %v1078, %v1083
        %v1091 = vadd.f32 %v1079, %v1083
        %v1092 = vadd.f32 %v1080, %v1083
        %v1093 = vld [vmem:[%s555] sm:$0xf]
        %v1094 = vld [vmem:[%s555 + $0x4] sm:$0xf]
        %v1095 = vld [vmem:[%s555 + $0x8] sm:$0xf]
        %v1096 = vld [vmem:[%s555 + $0xc] sm:$0xf]
        %v1097 = vld [vmem:[%s555 + $0x10] sm:$0xf]
        %v1098 = vld [vmem:[%s555 + $0x14] sm:$0xf]
        %v1099 = vld [vmem:[%s555 + $0x18] sm:$0xf]
        %v1100 = vld [vmem:[%s555 + $0x1c] sm:$0xf]
        %v1101 = vunpack.c.l.bf16 %v1093
        %v1102 = vunpack.c.l.bf16 %v1094
        %v1103 = vunpack.c.l.bf16 %v1095
        %v1104 = vunpack.c.l.bf16 %v1096
        %v1105 = vunpack.c.l.bf16 %v1097
        %v1106 = vunpack.c.l.bf16 %v1098
        %v1107 = vunpack.c.l.bf16 %v1099
        %v1108 = vunpack.c.l.bf16 %v1100
        %v1109 = vmul.f32 %v1085, %v1101
        %v1110 = vmul.f32 %v1086, %v1102
        %v1111 = vmul.f32 %v1087, %v1103
        %v1112 = vmul.f32 %v1088, %v1104
        %v1113 = vmul.f32 %v1089, %v1105
        %v1114 = vmul.f32 %v1090, %v1106
        %v1115 = vmul.f32 %v1091, %v1107
        %v1116 = vmul.f32 %v1092, %v1108
        %v1117 = vpack.c.bf16 %v1109, %v1109
        %v1118 = vpack.c.bf16 %v1110, %v1110
        %v1119 = vpack.c.bf16 %v1111, %v1111
        %v1120 = vpack.c.bf16 %v1112, %v1112
        %v1121 = vpack.c.bf16 %v1113, %v1113
        %v1122 = vpack.c.bf16 %v1114, %v1114
        %v1123 = vpack.c.bf16 %v1115, %v1115
        %v1124 = vpack.c.bf16 %v1116, %v1116
        %vm1125 = vcmask 519168
        %1126 = vst.msk [vmem:[%s567] sm:$0xf] %vm1125, %v1117
        %1127 = vst.msk [vmem:[%s567 + $0x4] sm:$0xf] %vm1125, %v1118
        %1128 = vst.msk [vmem:[%s567 + $0x8] sm:$0xf] %vm1125, %v1119
        %1129 = vst.msk [vmem:[%s567 + $0xc] sm:$0xf] %vm1125, %v1120
        %1130 = vst.msk [vmem:[%s567 + $0x10] sm:$0xf] %vm1125, %v1121
        %1131 = vst.msk [vmem:[%s567 + $0x14] sm:$0xf] %vm1125, %v1122
        %1132 = vst.msk [vmem:[%s567 + $0x18] sm:$0xf] %vm1125, %v1123
        %1133 = vst.msk [vmem:[%s567 + $0x1c] sm:$0xf] %vm1125, %v1124
      $region68: #{mamba2_forward.12} parent=55 // pred_fallthru
        _
      %s1134 = smul.u32 %s27, %s26
      %s1135 = smul.u32 8, %s1134
      %p1136 = scmp.lt.s32.totalorder %s25, 0
      %s1137 = scalar_select %p1136, %s25, 0
      %p1138 = scmp.lt.s32.totalorder %s1135, 7
      %s1139 = scalar_select %p1138, %s1135, 7
      %s1140 = smul.addr %s1137, 8
      %s1141 = sadd.s32 %s1139, %s1140
      %s1142 = smul.addr %s1141, 4
      %s1143 = scalar_lea.vmem %s9, %s1142
      // Predicated region
      $region69: #{mamba2_forward.12} parent=55 // pred_check
        %p1144 = pneg %p297
      $region70: #{mamba2_forward.12} parent=55 // pred_check_branch
        %1146 = sbr.rel (%p1144) target = $region72
      $region71: #{mamba2_forward.12} parent=55 // pred_region
        %s1147 = smul.u32 %s27, %s26
        %s1148 = smul.u32 8, %s1147
      $region72: #{mamba2_forward.12} parent=55 // pred_fallthru
        _
    $region56: #{mamba2_forward.12} parent=5 // pred_fallthru
      _
    %p1149 = scmp.le.s32.totalorder 2, %s15
    // Predicated region
    $region73: #{mamba2_forward.12} parent=5 // pred_check
      %p1150 = pneg %p1149
    $region74: #{mamba2_forward.12} parent=5 // pred_check_branch
      %1152 = sbr.rel (%p1150) target = $region76
    $region75: #{mamba2_forward.12} parent=5 // pred_region
      %s1153 = ssub.s32 %s15, 2
      // Predicated region
      $region77: #{mamba2_forward.12} parent=75 // pred_check
        %p1154 = pneg %p303
      $region78: #{mamba2_forward.12} parent=75 // pred_check_branch
        %1156 = sbr.rel (%p1154) target = $region80
      $region79: #{mamba2_forward.12} parent=75 // pred_region
        %s1157 = smul.u32 %s30, %s29
        %s1158 = smul.u32 8, %s1157
        %p1159 = scmp.lt.s32.totalorder %s28, 0
        %s1160 = scalar_select %p1159, %s28, 0
        %p1161 = scmp.lt.s32.totalorder %s1158, 7
        %s1162 = scalar_select %p1161, %s1158, 7
        %s1163 = smul.addr %s1160, 8
        %s1164 = sadd.s32 %s1162, %s1163
        %s1165 = smul.addr %s1164, 4
        %s1166 = scalar_lea.vmem %s9, %s1165
      $region80: #{mamba2_forward.12} parent=75 // pred_fallthru
        _
    $region76: #{mamba2_forward.12} parent=5 // pred_fallthru
      _
  $region6: #{mamba2_forward.12} parent=0 // loop_footer
    %s19 = sadd.s32 1, %s15
  $region7: #{mamba2_forward.12} parent=0 // loop_footer_branch
    %14 = sbr.rel target = $region3
  $region8: #{mamba2_forward.12} parent=0 // loop_exit
    _

// kernel: mamba2_forward.15
$region0: #{mamba2_forward.15}
  #allocation0 [shape = 'u32[]', space=smem, size = 0x4, offset = 0x4, fixed_abs, tag = 'smem constant byte address 0x4 - core index']
  #allocation1 [shape = 'u32[72,128]{1,0:T(1,128)}', space=vmem, size = 0x9000, scoped, tag = 'internal scratch']
  %s0 = inlined_call_operand.vmem [shape: bf16[2,8,8,96], index: 0, kind: input, shape index: {}]
  %s1 = inlined_call_operand.vmem [shape: bf16[2,1,8,96], index: 1, kind: input, shape index: {}, may-alias: {1,2}]
  %s2 = inlined_call_operand.vmem [shape: bf16[2,1,8,96], index: 2, kind: input, shape index: {}, may-alias: {1,2}]
  %s3 = inlined_call_operand.vmem [shape: f32[9,96], index: 3, kind: input, shape index: {}]
  %s4 = inlined_call_operand.vmem [shape: f32[1,96], index: 4, kind: input, shape index: {}]
  %s5 = inlined_call_operand.vmem [shape: bf16[2,8,8,96], index: 5, kind: output, shape index: {}]
  %s6 = sld [smem:[#allocation0]]
  $region53: #{mamba2_forward.15} parent=0
    _
  %s8 = ssub.s32 1, %s6
  %s9 = scalar_select 0, %s8, %s6
  loop: start=0, step=1, limit=4
  $region2: #{mamba2_forward.15} parent=0 // loop_pre_header
    _
  $region3: #{mamba2_forward.15} parent=0 // loop_header
    %s11 = sphi 0, %s15
    %p12 = scmp.ge.s32.totalorder %s11, 4
    %s18 = sphi 0, %s30
    %s19 = sphi 0, %s26
    %s20 = sphi 0, %s18
    %s21 = sphi 0, %s19
    %s22 = sphi 0, %s20
    %s23 = sphi 0, %s21
    %s35 = sphi 0, %s37
    %s38 = sphi 0, %s35
    %s39 = sphi 0, %s38
    %s55 = sphi 0, %s39
    %s63 = sphi 0, %s65
    %s66 = sphi 0, %s63
    %s67 = sphi 0, %s66
    %s83 = sphi 0, %s67
    %s91 = sphi 0, %s93
    %s94 = sphi 0, %s91
    %s95 = sphi 0, %s94
    %s111 = sphi 0, %s95
    %s115 = sphi 0, %s115
    %s117 = sphi 0, %s115
    %s118 = sphi 0, %s117
    %s132 = sphi 0, %s118
    %s136 = sphi 0, %s136
    %s138 = sphi 0, %s136
    %s139 = sphi 0, %s138
    %s153 = sphi 0, %s139
    %s161 = sphi 0, %s163
    %s164 = sphi 0, %s161
    %s165 = sphi 0, %s164
    %s181 = sphi 0, %s165
  $region4: #{mamba2_forward.15} parent=0 // loop_header_branch
    %14 = sbr.rel (%p12) target = $region8
  $region5: #{mamba2_forward.15} parent=0 // loop_body
    %s16 = ssub.s32 %s11, 1
    %s17 = ssub.s32 %s11, 2
    %s24 = sadd.s32 1, %s19
    %p25 = scmp.ge.s32.totalorder %s24, 1
    %s26 = scalar_select %p25, 0, %s24
    %s27 = sadd.s32 1, %s18
    %s28 = scalar_select %p25, %s27, %s18
    %p29 = scmp.ge.s32.totalorder %s28, 2
    %s30 = scalar_select %p29, 0, %s28
    %s31 = ssub.s32 %s18, %s30
    %s32 = ssub.s32 %s19, %s26
    %s33 = sor.u32 %s31, %s32
    %p34 = scmp.eq.s32.totalorder %s33, 0
    %s36 = sadd.s32 %s35, 1
    %s37 = scalar_select %p34, %s35, %s36
    %p40 = pneg %p34
    %p41 = scmp.eq.s32.totalorder %s11, 1
    %p42 = por %p40, %p41
    %p43 = scmp.ne.s32.totalorder %s35, %s38
    %p44 = scmp.eq.s32.totalorder %s11, 0
    %p45 = por %p43, %p44
    %p46 = scmp.ne.s32.totalorder %s35, %s38
    %p47 = scmp.eq.s32.totalorder %s16, 1
    %p48 = por %p46, %p47
    %p49 = scmp.ne.s32.totalorder %s38, %s39
    %p50 = scmp.eq.s32.totalorder %s16, 0
    %p51 = por %p49, %p50
    %p52 = scmp.ne.s32.totalorder %s38, %s39
    %p53 = scmp.eq.s32.totalorder %s17, 1
    %p54 = por %p52, %p53
    %p56 = scmp.ne.s32.totalorder %s39, %s55
    %p57 = scmp.eq.s32.totalorder %s17, 0
    %p58 = por %p56, %p57
    %s59 = ssub.s32 %s18, %s30
    %s60 = ssub.s32 %s19, %s26
    %s61 = sor.u32 %s59, %s60
    %p62 = scmp.eq.s32.totalorder %s61, 0
    %s64 = sadd.s32 %s63, 1
    %s65 = scalar_select %p62, %s63, %s64
    %p68 = pneg %p62
    %p69 = scmp.eq.s32.totalorder %s11, 1
    %p70 = por %p68, %p69
    %p71 = scmp.ne.s32.totalorder %s63, %s66
    %p72 = scmp.eq.s32.totalorder %s11, 0
    %p73 = por %p71, %p72
    %p74 = scmp.ne.s32.totalorder %s63, %s66
    %p75 = scmp.eq.s32.totalorder %s16, 1
    %p76 = por %p74, %p75
    %p77 = scmp.ne.s32.totalorder %s66, %s67
    %p78 = scmp.eq.s32.totalorder %s16, 0
    %p79 = por %p77, %p78
    %p80 = scmp.ne.s32.totalorder %s66, %s67
    %p81 = scmp.eq.s32.totalorder %s17, 1
    %p82 = por %p80, %p81
    %p84 = scmp.ne.s32.totalorder %s67, %s83
    %p85 = scmp.eq.s32.totalorder %s17, 0
    %p86 = por %p84, %p85
    %s87 = ssub.s32 %s18, %s30
    %s88 = ssub.s32 %s19, %s26
    %s89 = sor.u32 %s87, %s88
    %p90 = scmp.eq.s32.totalorder %s89, 0
    %s92 = sadd.s32 %s91, 1
    %s93 = scalar_select %p90, %s91, %s92
    %p96 = pneg %p90
    %p97 = scmp.eq.s32.totalorder %s11, 1
    %p98 = por %p96, %p97
    %p99 = scmp.ne.s32.totalorder %s91, %s94
    %p100 = scmp.eq.s32.totalorder %s11, 0
    %p101 = por %p99, %p100
    %p102 = scmp.ne.s32.totalorder %s91, %s94
    %p103 = scmp.eq.s32.totalorder %s16, 1
    %p104 = por %p102, %p103
    %p105 = scmp.ne.s32.totalorder %s94, %s95
    %p106 = scmp.eq.s32.totalorder %s16, 0
    %p107 = por %p105, %p106
    %p108 = scmp.ne.s32.totalorder %s94, %s95
    %p109 = scmp.eq.s32.totalorder %s17, 1
    %p110 = por %p108, %p109
    %p112 = scmp.ne.s32.totalorder %s95, %s111
    %p113 = scmp.eq.s32.totalorder %s17, 0
    %p114 = por %p112, %p113
    %s116 = sadd.s32 %s115, 1
    %p119 = scmp.eq.s32.totalorder %s11, 1
    %p120 = scmp.ne.s32.totalorder %s115, %s117
    %p121 = scmp.eq.s32.totalorder %s11, 0
    %p122 = por %p120, %p121
    %p123 = scmp.ne.s32.totalorder %s115, %s117
    %p124 = scmp.eq.s32.totalorder %s16, 1
    %p125 = por %p123, %p124
    %p126 = scmp.ne.s32.totalorder %s117, %s118
    %p127 = scmp.eq.s32.totalorder %s16, 0
    %p128 = por %p126, %p127
    %p129 = scmp.ne.s32.totalorder %s117, %s118
    %p130 = scmp.eq.s32.totalorder %s17, 1
    %p131 = por %p129, %p130
    %p133 = scmp.ne.s32.totalorder %s118, %s132
    %p134 = scmp.eq.s32.totalorder %s17, 0
    %p135 = por %p133, %p134
    %s137 = sadd.s32 %s136, 1
    %p140 = scmp.eq.s32.totalorder %s11, 1
    %p141 = scmp.ne.s32.totalorder %s136, %s138
    %p142 = scmp.eq.s32.totalorder %s11, 0
    %p143 = por %p141, %p142
    %p144 = scmp.ne.s32.totalorder %s136, %s138
    %p145 = scmp.eq.s32.totalorder %s16, 1
    %p146 = por %p144, %p145
    %p147 = scmp.ne.s32.totalorder %s138, %s139
    %p148 = scmp.eq.s32.totalorder %s16, 0
    %p149 = por %p147, %p148
    %p150 = scmp.ne.s32.totalorder %s138, %s139
    %p151 = scmp.eq.s32.totalorder %s17, 1
    %p152 = por %p150, %p151
    %p154 = scmp.ne.s32.totalorder %s139, %s153
    %p155 = scmp.eq.s32.totalorder %s17, 0
    %p156 = por %p154, %p155
    %s157 = ssub.s32 %s18, %s30
    %s158 = ssub.s32 %s19, %s26
    %s159 = sor.u32 %s157, %s158
    %p160 = scmp.eq.s32.totalorder %s159, 0
    %s162 = sadd.s32 %s161, 1
    %s163 = scalar_select %p160, %s161, %s162
    %p166 = pneg %p160
    %p167 = scmp.eq.s32.totalorder %s11, 1
    %p168 = por %p166, %p167
    %p169 = scmp.ne.s32.totalorder %s161, %s164
    %p170 = scmp.eq.s32.totalorder %s11, 0
    %p171 = por %p169, %p170
    %p172 = scmp.ne.s32.totalorder %s161, %s164
    %p173 = scmp.eq.s32.totalorder %s16, 1
    %p174 = por %p172, %p173
    %p175 = scmp.ne.s32.totalorder %s164, %s165
    %p176 = scmp.eq.s32.totalorder %s16, 0
    %p177 = por %p175, %p176
    %p178 = scmp.ne.s32.totalorder %s164, %s165
    %p179 = scmp.eq.s32.totalorder %s17, 1
    %p180 = por %p178, %p179
    %p182 = scmp.ne.s32.totalorder %s165, %s181
    %p183 = scmp.eq.s32.totalorder %s17, 0
    %p184 = por %p182, %p183
    %p185 = scmp.le.s32.totalorder 1, %s11
    %p186 = scmp.lt.s32.totalorder %s11, 3
    %p187 = pnand %p185, %p186
    %p188 = pneg %p187
    // Predicated region
    $region9: #{mamba2_forward.15} parent=5 // pred_check
      _
    $region10: #{mamba2_forward.15} parent=5 // pred_check_branch
      %190 = sbr.rel (%p187) target = $region12
    $region11: #{mamba2_forward.15} parent=5 // pred_region
      %s191 = ssub.s32 %s11, 1
      // Predicated region
      $region13: #{mamba2_forward.15} parent=11 // pred_check
        %p192 = pneg %p128
      $region14: #{mamba2_forward.15} parent=11 // pred_check_branch
        %194 = sbr.rel (%p192) target = $region16
      $region15: #{mamba2_forward.15} parent=11 // pred_region
        _
      $region16: #{mamba2_forward.15} parent=11 // pred_fallthru
        _
      // Predicated region
      $region17: #{mamba2_forward.15} parent=11 // pred_check
        %p195 = pneg %p149
      $region18: #{mamba2_forward.15} parent=11 // pred_check_branch
        %197 = sbr.rel (%p195) target = $region20
      $region19: #{mamba2_forward.15} parent=11 // pred_region
        _
      $region20: #{mamba2_forward.15} parent=11 // pred_fallthru
        _
    $region12: #{mamba2_forward.15} parent=5 // pred_fallthru
      _
    %p198 = scmp.lt.s32.totalorder %s11, 2
    // Predicated region
    $region21: #{mamba2_forward.15} parent=5 // pred_check
      %p199 = pneg %p198
    $region22: #{mamba2_forward.15} parent=5 // pred_check_branch
      %201 = sbr.rel (%p199) target = $region24
    $region23: #{mamba2_forward.15} parent=5 // pred_region
      // Predicated region
      $region25: #{mamba2_forward.15} parent=23 // pred_check
        %p202 = pneg %p45
      $region26: #{mamba2_forward.15} parent=23 // pred_check_branch
        %204 = sbr.rel (%p202) target = $region28
      $region27: #{mamba2_forward.15} parent=23 // pred_region
        %s205 = smul.u32 8, %s19
        %p206 = scmp.lt.s32.totalorder %s18, 1
        %s207 = scalar_select %p206, %s18, 1
        %p208 = scmp.lt.s32.totalorder %s205, 7
        %s209 = scalar_select %p208, %s205, 7
        %s210 = smul.addr %s207, 8
        %s211 = sadd.s32 %s209, %s210
        %s212 = smul.addr %s211, 4
        %s213 = scalar_lea.vmem %s0, %s212
        %s214 = smul.u32 8, %s19
      $region28: #{mamba2_forward.15} parent=23 // pred_fallthru
        _
      // Predicated region
      $region29: #{mamba2_forward.15} parent=23 // pred_check
        %p215 = pneg %p73
      $region30: #{mamba2_forward.15} parent=23 // pred_check_branch
        %217 = sbr.rel (%p215) target = $region32
      $region31: #{mamba2_forward.15} parent=23 // pred_region
        %p218 = scmp.lt.s32.totalorder %s18, 1
        %s219 = scalar_select %p218, %s18, 1
        %p220 = scmp.lt.s32.totalorder %s19, 0
        %s221 = scalar_select %p220, %s19, 0
        %s222 = sadd.s32 %s221, %s219
        %s223 = smul.addr %s222, 4
        %s224 = scalar_lea.vmem %s1, %s223
      $region32: #{mamba2_forward.15} parent=23 // pred_fallthru
        _
      // Predicated region
      $region33: #{mamba2_forward.15} parent=23 // pred_check
        %p225 = pneg %p101
      $region34: #{mamba2_forward.15} parent=23 // pred_check_branch
        %227 = sbr.rel (%p225) target = $region36
      $region35: #{mamba2_forward.15} parent=23 // pred_region
        %p228 = scmp.lt.s32.totalorder %s18, 1
        %s229 = scalar_select %p228, %s18, 1
        %p230 = scmp.lt.s32.totalorder %s19, 0
        %s231 = scalar_select %p230, %s19, 0
        %s232 = sadd.s32 %s231, %s229
        %s233 = smul.addr %s232, 4
        %s234 = scalar_lea.vmem %s2, %s233
      $region36: #{mamba2_forward.15} parent=23 // pred_fallthru
        _
    $region24: #{mamba2_forward.15} parent=5 // pred_fallthru
      _
    %p235 = scmp.le.s32.totalorder 1, %s11
    %p236 = scmp.lt.s32.totalorder %s11, 3
    %p237 = pnand %p235, %p236
    %p238 = pneg %p237
    // Predicated region
    $region37: #{mamba2_forward.15} parent=5 // pred_check
      _
    $region38: #{mamba2_forward.15} parent=5 // pred_check_branch
      %240 = sbr.rel (%p237) target = $region40
    $region39: #{mamba2_forward.15} parent=5 // pred_region
      %s241 = ssub.s32 %s11, 1
      %s242 = smul.u32 8, %s21
      %p243 = scmp.lt.s32.totalorder %s20, 1
      %s244 = scalar_select %p243, %s20, 1
      %p245 = scmp.lt.s32.totalorder %s242, 7
      %s246 = scalar_select %p245, %s242, 7
      %s247 = smul.addr %s244, 8
      %s248 = sadd.s32 %s246, %s247
      %s249 = smul.addr %s248, 4
      %s250 = scalar_lea.vmem %s0, %s249
      %p251 = pneg %p51
      %p252 = pneg %p48
      %p253 = scmp.lt.s32.totalorder %s20, 1
      %s254 = scalar_select %p253, %s20, 1
      %p255 = scmp.lt.s32.totalorder %s21, 0
      %s256 = scalar_select %p255, %s21, 0
      %s257 = sadd.s32 %s256, %s254
      %s258 = smul.addr %s257, 4
      %s259 = scalar_lea.vmem %s1, %s258
      %p260 = pneg %p79
      %p261 = pneg %p76
      %p262 = scmp.lt.s32.totalorder %s20, 1
      %s263 = scalar_select %p262, %s20, 1
      %p264 = scmp.lt.s32.totalorder %s21, 0
      %s265 = scalar_select %p264, %s21, 0
      %s266 = sadd.s32 %s265, %s263
      %s267 = smul.addr %s266, 4
      %s268 = scalar_lea.vmem %s2, %s267
      %p269 = pneg %p107
      %p270 = pneg %p104
      %p271 = pneg %p128
      %p272 = pneg %p125
      %p273 = pneg %p149
      %p274 = pneg %p146
      %p275 = pneg %p177
      %p276 = pneg %p174
      %s277 = smul.u32 8, %s21
      %p278 = scmp.lt.s32.totalorder %s20, 1
      %s279 = scalar_select %p278, %s20, 1
      %p280 = scmp.lt.s32.totalorder %s277, 7
      %s281 = scalar_select %p280, %s277, 7
      %s282 = smul.addr %s279, 8
      %s283 = sadd.s32 %s281, %s282
      %s284 = smul.addr %s283, 4
      %s285 = scalar_lea.vmem %s5, %s284
      %s286 = smul.u32 8, %s21
      %p287 = scmp.lt.s32.totalorder %s20, 1
      %s288 = scalar_select %p287, %s20, 1
      %p289 = scmp.lt.s32.totalorder %s286, 7
      %s290 = scalar_select %p289, %s286, 7
      %s291 = smul.addr %s288, 8
      %s292 = sadd.s32 %s290, %s291
      %s293 = smul.addr %s292, 4
      %s294 = scalar_lea.vmem %s0, %s293
      %s295 = smul.u32 8, %s21
      %p296 = scmp.lt.s32.totalorder %s20, 1
      %s297 = scalar_select %p296, %s20, 1
      %p298 = scmp.lt.s32.totalorder %s21, 0
      %s299 = scalar_select %p298, %s21, 0
      %s300 = sadd.s32 %s299, %s297
      %s301 = smul.addr %s300, 4
      %s302 = scalar_lea.vmem %s1, %s301
      %p303 = scmp.lt.s32.totalorder %s20, 1
      %s304 = scalar_select %p303, %s20, 1
      %p305 = scmp.lt.s32.totalorder %s21, 0
      %s306 = scalar_select %p305, %s21, 0
      %s307 = sadd.s32 %s306, %s304
      %s308 = smul.addr %s307, 4
      %s309 = scalar_lea.vmem %s2, %s308
      %s310 = smul.u32 8, %s21
      %p311 = scmp.lt.s32.totalorder %s20, 1
      %s312 = scalar_select %p311, %s20, 1
      %p313 = scmp.lt.s32.totalorder %s310, 7
      %s314 = scalar_select %p313, %s310, 7
      %s315 = smul.addr %s312, 8
      %s316 = sadd.s32 %s314, %s315
      %s317 = smul.addr %s316, 4
      %s318 = scalar_lea.vmem %s5, %s317
      %s319 = smul.u32 8, %s21
      %v320 = vld [vmem:[%s294] sm:$0xf]
      %v321 = vld [vmem:[%s294 + $0x4] sm:$0xf]
      %v322 = vld [vmem:[%s294 + $0x8] sm:$0xf]
      %v323 = vld [vmem:[%s294 + $0xc] sm:$0xf]
      %v324 = vld [vmem:[%s294 + $0x10] sm:$0xf]
      %v325 = vld [vmem:[%s294 + $0x14] sm:$0xf]
      %v326 = vld [vmem:[%s294 + $0x18] sm:$0xf]
      %v327 = vld [vmem:[%s294 + $0x1c] sm:$0xf]
      %v328 = vld [vmem:[%s302] sm:$0xf]
      %v329 = vld [vmem:[%s309] sm:$0xf]
      %v330 = vld [vmem:[%s3] sm:$0xff]
      %v331 = vld [vmem:[%s3 + $0x8] sm:$0x1]
      %v332 = vlaneseq
      %v333 = vshrl.u32 %v332, 7
      %vm334 = vcmp.gt.s32.totalorder %v333, 0
      %vm335 = vcmp.lt.s32.totalorder %v333, 7
      %v336 = vunpack.c.l.bf16 %v328
      %v337 = vunpack.c.l.bf16 %v320
      %v338 = vunpack.c.l.bf16 %v321
      %v339 = vunpack.c.l.bf16 %v322
      %v340 = vunpack.c.l.bf16 %v323
      %v341 = vunpack.c.l.bf16 %v324
      %v342 = vunpack.c.l.bf16 %v325
      %v343 = vunpack.c.l.bf16 %v326
      %v344 = vperm.slane %v330, 1
      %v345 = vmul.f32 %v336, %v344
      %v346 = vmul.f32 %v337, %v344
      %v347 = vmul.f32 %v338, %v344
      %v348 = vmul.f32 %v339, %v344
      %v349 = vmul.f32 %v340, %v344
      %v350 = vmul.f32 %v341, %v344
      %v351 = vmul.f32 %v342, %v344
      %v352 = vmul.f32 %v343, %v344
      %v353 = vadd.f32 %v345, 0.0
      %v354 = vadd.f32 %v346, 0.0
      %v355 = vadd.f32 %v347, 0.0
      %v356 = vadd.f32 %v348, 0.0
      %v357 = vadd.f32 %v349, 0.0
      %v358 = vadd.f32 %v350, 0.0
      %v359 = vadd.f32 %v351, 0.0
      %v360 = vadd.f32 %v352, 0.0
      %v361 = vrot.slane %v336, 7
      %v362 = vrot.slane %v337, 7
      %v363 = vrot.slane %v338, 7
      %v364 = vrot.slane %v339, 7
      %v365 = vrot.slane %v340, 7
      %v366 = vrot.slane %v341, 7
      %v367 = vrot.slane %v342, 7
      %v368 = vrot.slane %v343, 7
      %v369 = vsel %vm334, %v361, 0.0
      %v370 = vsel %vm334, %v362, 0.0
      %v371 = vsel %vm334, %v363, 0.0
      %v372 = vsel %vm334, %v364, 0.0
      %v373 = vsel %vm334, %v365, 0.0
      %v374 = vsel %vm334, %v366, 0.0
      %v375 = vsel %vm334, %v367, 0.0
      %v376 = vsel %vm334, %v368, 0.0
      %v377 = vperm.slane %v330, 0
      %v378 = vmul.f32 %v369, %v377
      %v379 = vmul.f32 %v370, %v377
      %v380 = vmul.f32 %v371, %v377
      %v381 = vmul.f32 %v372, %v377
      %v382 = vmul.f32 %v373, %v377
      %v383 = vmul.f32 %v374, %v377
      %v384 = vmul.f32 %v375, %v377
      %v385 = vmul.f32 %v376, %v377
      %v386 = vadd.f32 %v353, %v378
      %v387 = vadd.f32 %v354, %v379
      %v388 = vadd.f32 %v355, %v380
      %v389 = vadd.f32 %v356, %v381
      %v390 = vadd.f32 %v357, %v382
      %v391 = vadd.f32 %v358, %v383
      %v392 = vadd.f32 %v359, %v384
      %v393 = vadd.f32 %v360, %v385
      %v394 = vrot.slane %v336, 1
      %v395 = vrot.slane %v337, 1
      %v396 = vrot.slane %v338, 1
      %v397 = vrot.slane %v339, 1
      %v398 = vrot.slane %v340, 1
      %v399 = vrot.slane %v341, 1
      %v400 = vrot.slane %v342, 1
      %v401 = vrot.slane %v343, 1
      %v402 = vsel %vm335, %v394, 0.0
      %v403 = vsel %vm335, %v395, 0.0
      %v404 = vsel %vm335, %v396, 0.0
      %v405 = vsel %vm335, %v397, 0.0
      %v406 = vsel %vm335, %v398, 0.0
      %v407 = vsel %vm335, %v399, 0.0
      %v408 = vsel %vm335, %v400, 0.0
      %v409 = vsel %vm335, %v401, 0.0
      %v410 = vperm.slane %v330, 2
      %v411 = vmul.f32 %v402, %v410
      %v412 = vmul.f32 %v403, %v410
      %v413 = vmul.f32 %v404, %v410
      %v414 = vmul.f32 %v405, %v410
      %v415 = vmul.f32 %v406, %v410
      %v416 = vmul.f32 %v407, %v410
      %v417 = vmul.f32 %v408, %v410
      %v418 = vmul.f32 %v409, %v410
      %v419 = vadd.f32 %v386, %v411
      %v420 = vadd.f32 %v387, %v412
      %v421 = vadd.f32 %v388, %v413
      %v422 = vadd.f32 %v389, %v414
      %v423 = vadd.f32 %v390, %v415
      %v424 = vadd.f32 %v391, %v416
      %v425 = vadd.f32 %v392, %v417
      %v426 = vadd.f32 %v393, %v418
      %v427 = vunpack.c.l.bf16 %v327
      %v428 = vperm.slane %v330, 4
      %v429 = vmul.f32 %v337, %v428
      %v430 = vmul.f32 %v338, %v428
      %v431 = vmul.f32 %v339, %v428
      %v432 = vmul.f32 %v340, %v428
      %v433 = vmul.f32 %v341, %v428
      %v434 = vmul.f32 %v342, %v428
      %v435 = vmul.f32 %v343, %v428
      %v436 = vmul.f32 %v427, %v428
      %v437 = vadd.f32 %v419, %v429
      %v438 = vadd.f32 %v420, %v430
      %v439 = vadd.f32 %v421, %v431
      %v440 = vadd.f32 %v422, %v432
      %v441 = vadd.f32 %v423, %v433
      %v442 = vadd.f32 %v424, %v434
      %v443 = vadd.f32 %v425, %v435
      %v444 = vadd.f32 %v426, %v436
      %v445 = vrot.slane %v427, 7
      %v446 = vsel %vm334, %v445, 0.0
      %v447 = vperm.slane %v330, 3
      %v448 = vmul.f32 %v370, %v447
      %v449 = vmul.f32 %v371, %v447
      %v450 = vmul.f32 %v372, %v447
      %v451 = vmul.f32 %v373, %v447
      %v452 = vmul.f32 %v374, %v447
      %v453 = vmul.f32 %v375, %v447
      %v454 = vmul.f32 %v376, %v447
      %v455 = vmul.f32 %v446, %v447
      %v456 = vadd.f32 %v437, %v448
      %v457 = vadd.f32 %v438, %v449
      %v458 = vadd.f32 %v439, %v450
      %v459 = vadd.f32 %v440, %v451
      %v460 = vadd.f32 %v441, %v452
      %v461 = vadd.f32 %v442, %v453
      %v462 = vadd.f32 %v443, %v454
      %v463 = vadd.f32 %v444, %v455
      %v464 = vrot.slane %v427, 1
      %v465 = vsel %vm335, %v464, 0.0
      %v466 = vperm.slane %v330, 5
      %v467 = vmul.f32 %v403, %v466
      %v468 = vmul.f32 %v404, %v466
      %v469 = vmul.f32 %v405, %v466
      %v470 = vmul.f32 %v406, %v466
      %v471 = vmul.f32 %v407, %v466
      %v472 = vmul.f32 %v408, %v466
      %v473 = vmul.f32 %v409, %v466
      %v474 = vmul.f32 %v465, %v466
      %v475 = vadd.f32 %v456, %v467
      %v476 = vadd.f32 %v457, %v468
      %v477 = vadd.f32 %v458, %v469
      %v478 = vadd.f32 %v459, %v470
      %v479 = vadd.f32 %v460, %v471
      %v480 = vadd.f32 %v461, %v472
      %v481 = vadd.f32 %v462, %v473
      %v482 = vadd.f32 %v463, %v474
      %v483 = vunpack.c.l.bf16 %v329
      %v484 = vperm.slane %v330, 7
      %v485 = vmul.f32 %v338, %v484
      %v486 = vmul.f32 %v339, %v484
      %v487 = vmul.f32 %v340, %v484
      %v488 = vmul.f32 %v341, %v484
      %v489 = vmul.f32 %v342, %v484
      %v490 = vmul.f32 %v343, %v484
      %v491 = vmul.f32 %v427, %v484
      %v492 = vmul.f32 %v483, %v484
      %v493 = vadd.f32 %v475, %v485
      %v494 = vadd.f32 %v476, %v486
      %v495 = vadd.f32 %v477, %v487
      %v496 = vadd.f32 %v478, %v488
      %v497 = vadd.f32 %v479, %v489
      %v498 = vadd.f32 %v480, %v490
      %v499 = vadd.f32 %v481, %v491
      %v500 = vadd.f32 %v482, %v492
      %v501 = vrot.slane %v483, 7
      %v502 = vsel %vm334, %v501, 0.0
      %v503 = vperm.slane %v330, 6
      %v504 = vmul.f32 %v371, %v503
      %v505 = vmul.f32 %v372, %v503
      %v506 = vmul.f32 %v373, %v503
      %v507 = vmul.f32 %v374, %v503
      %v508 = vmul.f32 %v375, %v503
      %v509 = vmul.f32 %v376, %v503
      %v510 = vmul.f32 %v446, %v503
      %v511 = vmul.f32 %v502, %v503
      %v512 = vadd.f32 %v493, %v504
      %v513 = vadd.f32 %v494, %v505
      %v514 = vadd.f32 %v495, %v506
      %v515 = vadd.f32 %v496, %v507
      %v516 = vadd.f32 %v497, %v508
      %v517 = vadd.f32 %v498, %v509
      %v518 = vadd.f32 %v499, %v510
      %v519 = vadd.f32 %v500, %v511
      %v520 = vrot.slane %v483, 1
      %v521 = vsel %vm335, %v520, 0.0
      %v522 = vperm.slane %v331, 0
      %v523 = vmul.f32 %v404, %v522
      %v524 = vmul.f32 %v405, %v522
      %v525 = vmul.f32 %v406, %v522
      %v526 = vmul.f32 %v407, %v522
      %v527 = vmul.f32 %v408, %v522
      %v528 = vmul.f32 %v409, %v522
      %v529 = vmul.f32 %v465, %v522
      %v530 = vmul.f32 %v521, %v522
      %v531 = vadd.f32 %v512, %v523
      %v532 = vadd.f32 %v513, %v524
      %v533 = vadd.f32 %v514, %v525
      %v534 = vadd.f32 %v515, %v526
      %v535 = vadd.f32 %v516, %v527
      %v536 = vadd.f32 %v517, %v528
      %v537 = vadd.f32 %v518, %v529
      %v538 = vadd.f32 %v519, %v530
      %v539 = vld [vmem:[%s4] sm:$0x1]
      %v541 = vperm.slane %v539, 0
      %v543 = vadd.f32 %v531, %v541
      %v544 = vadd.f32 %v532, %v541
      %v545 = vadd.f32 %v533, %v541
      %v546 = vadd.f32 %v534, %v541
      %v547 = vadd.f32 %v535, %v541
      %v548 = vadd.f32 %v536, %v541
      %v549 = vadd.f32 %v537, %v541
      %v550 = vadd.f32 %v538, %v541
      %v551 = vxor.u32 %v543, 2147483648
      %v552 = vxor.u32 %v544, 2147483648
      %v553 = vxor.u32 %v545, 2147483648
      %v554 = vxor.u32 %v546, 2147483648
      %v555 = vxor.u32 %v547, 2147483648
      %v556 = vxor.u32 %v548, 2147483648
      %v557 = vxor.u32 %v549, 2147483648
      %v558 = vxor.u32 %v550, 2147483648
      %v559 = vmul.f32 %v551, 1.442695
      %v560 = vpow.pop %v559
      %v561 = vmul.f32 %v552, 1.442695
      %v562 = vpow.pop %v561
      %v563 = vmul.f32 %v553, 1.442695
      %v564 = vpow.pop %v563
      %v565 = vmul.f32 %v554, 1.442695
      %v566 = vpow.pop %v565
      %v567 = vmul.f32 %v555, 1.442695
      %v568 = vpow.pop %v567
      %v569 = vmul.f32 %v556, 1.442695
      %v570 = vpow.pop %v569
      %v571 = vmul.f32 %v557, 1.442695
      %v572 = vpow.pop %v571
      %v573 = vmul.f32 %v558, 1.442695
      %v574 = vpow.pop %v573
      %v575 = vadd.f32 %v560, 1.0
      %v576 = vadd.f32 %v562, 1.0
      %v577 = vadd.f32 %v564, 1.0
      %v578 = vadd.f32 %v566, 1.0
      %v579 = vadd.f32 %v568, 1.0
      %v580 = vadd.f32 %v570, 1.0
      %v581 = vadd.f32 %v572, 1.0
      %v582 = vadd.f32 %v574, 1.0
      %v583 = vrcp.pop %v575
      %v584 = vmul.f32 %v575, %v583
      %v585 = vsub.f32 1.0, %v584
      %v586 = vmul.f32 %v583, %v585
      %v587 = vadd.f32 %v583, %v586
      %vm588 = vweird.f32 %v575
      %vm589 = vweird.f32 %v583
      %vm590 = vmor %vm588, %vm589
      %v591 = vsel %vm590, %v583, %v587
      %v592 = vand.u32 2147483647, %v575
      %vm593 = vcmp.eq.f32.partialorder %v592, 8.507059e+37
      %v594 = vand.u32 %v575, 2147483648
      %v595 = vor.u32 1.1754944e-38, %v594
      %v596 = vsel %vm593, %v595, %v591
      %v597 = vmul.f32 1.0, %v596
      %v598 = vrcp.pop %v576
      %v599 = vmul.f32 %v576, %v598
      %v600 = vsub.f32 1.0, %v599
      %v601 = vmul.f32 %v598, %v600
      %v602 = vadd.f32 %v598, %v601
      %vm603 = vweird.f32 %v576
      %vm604 = vweird.f32 %v598
      %vm605 = vmor %vm603, %vm604
      %v606 = vsel %vm605, %v598, %v602
      %v607 = vand.u32 2147483647, %v576
      %vm608 = vcmp.eq.f32.partialorder %v607, 8.507059e+37
      %v609 = vand.u32 %v576, 2147483648
      %v610 = vor.u32 1.1754944e-38, %v609
      %v611 = vsel %vm608, %v610, %v606
      %v612 = vmul.f32 1.0, %v611
      %v613 = vrcp.pop %v577
      %v614 = vmul.f32 %v577, %v613
      %v615 = vsub.f32 1.0, %v614
      %v616 = vmul.f32 %v613, %v615
      %v617 = vadd.f32 %v613, %v616
      %vm618 = vweird.f32 %v577
      %vm619 = vweird.f32 %v613
      %vm620 = vmor %vm618, %vm619
      %v621 = vsel %vm620, %v613, %v617
      %v622 = vand.u32 2147483647, %v577
      %vm623 = vcmp.eq.f32.partialorder %v622, 8.507059e+37
      %v624 = vand.u32 %v577, 2147483648
      %v625 = vor.u32 1.1754944e-38, %v624
      %v626 = vsel %vm623, %v625, %v621
      %v627 = vmul.f32 1.0, %v626
      %v628 = vrcp.pop %v578
      %v629 = vmul.f32 %v578, %v628
      %v630 = vsub.f32 1.0, %v629
      %v631 = vmul.f32 %v628, %v630
      %v632 = vadd.f32 %v628, %v631
      %vm633 = vweird.f32 %v578
      %vm634 = vweird.f32 %v628
      %vm635 = vmor %vm633, %vm634
      %v636 = vsel %vm635, %v628, %v632
      %v637 = vand.u32 2147483647, %v578
      %vm638 = vcmp.eq.f32.partialorder %v637, 8.507059e+37
      %v639 = vand.u32 %v578, 2147483648
      %v640 = vor.u32 1.1754944e-38, %v639
      %v641 = vsel %vm638, %v640, %v636
      %v642 = vmul.f32 1.0, %v641
      %v643 = vrcp.pop %v579
      %v644 = vmul.f32 %v579, %v643
      %v645 = vsub.f32 1.0, %v644
      %v646 = vmul.f32 %v643, %v645
      %v647 = vadd.f32 %v643, %v646
      %vm648 = vweird.f32 %v579
      %vm649 = vweird.f32 %v643
      %vm650 = vmor %vm648, %vm649
      %v651 = vsel %vm650, %v643, %v647
      %v652 = vand.u32 2147483647, %v579
      %vm653 = vcmp.eq.f32.partialorder %v652, 8.507059e+37
      %v654 = vand.u32 %v579, 2147483648
      %v655 = vor.u32 1.1754944e-38, %v654
      %v656 = vsel %vm653, %v655, %v651
      %v657 = vmul.f32 1.0, %v656
      %v658 = vrcp.pop %v580
      %v659 = vmul.f32 %v580, %v658
      %v660 = vsub.f32 1.0, %v659
      %v661 = vmul.f32 %v658, %v660
      %v662 = vadd.f32 %v658, %v661
      %vm663 = vweird.f32 %v580
      %vm664 = vweird.f32 %v658
      %vm665 = vmor %vm663, %vm664
      %v666 = vsel %vm665, %v658, %v662
      %v667 = vand.u32 2147483647, %v580
      %vm668 = vcmp.eq.f32.partialorder %v667, 8.507059e+37
      %v669 = vand.u32 %v580, 2147483648
      %v670 = vor.u32 1.1754944e-38, %v669
      %v671 = vsel %vm668, %v670, %v666
      %v672 = vmul.f32 1.0, %v671
      %v673 = vrcp.pop %v581
      %v674 = vmul.f32 %v581, %v673
      %v675 = vsub.f32 1.0, %v674
      %v676 = vmul.f32 %v673, %v675
      %v677 = vadd.f32 %v673, %v676
      %vm678 = vweird.f32 %v581
      %vm679 = vweird.f32 %v673
      %vm680 = vmor %vm678, %vm679
      %v681 = vsel %vm680, %v673, %v677
      %v682 = vand.u32 2147483647, %v581
      %vm683 = vcmp.eq.f32.partialorder %v682, 8.507059e+37
      %v684 = vand.u32 %v581, 2147483648
      %v685 = vor.u32 1.1754944e-38, %v684
      %v686 = vsel %vm683, %v685, %v681
      %v687 = vmul.f32 1.0, %v686
      %v688 = vrcp.pop %v582
      %v689 = vmul.f32 %v582, %v688
      %v690 = vsub.f32 1.0, %v689
      %v691 = vmul.f32 %v688, %v690
      %v692 = vadd.f32 %v688, %v691
      %vm693 = vweird.f32 %v582
      %vm694 = vweird.f32 %v688
      %vm695 = vmor %vm693, %vm694
      %v696 = vsel %vm695, %v688, %v692
      %v697 = vand.u32 2147483647, %v582
      %vm698 = vcmp.eq.f32.partialorder %v697, 8.507059e+37
      %v699 = vand.u32 %v582, 2147483648
      %v700 = vor.u32 1.1754944e-38, %v699
      %v701 = vsel %vm698, %v700, %v696
      %v702 = vmul.f32 1.0, %v701
      %v703 = vmul.f32 %v543, %v597
      %v704 = vmul.f32 %v544, %v612
      %v705 = vmul.f32 %v545, %v627
      %v706 = vmul.f32 %v546, %v642
      %v707 = vmul.f32 %v547, %v657
      %v708 = vmul.f32 %v548, %v672
      %v709 = vmul.f32 %v549, %v687
      %v710 = vmul.f32 %v550, %v702
      %v711 = vpack.c.bf16 %v703, %v703
      %v712 = vpack.c.bf16 %v704, %v704
      %v713 = vpack.c.bf16 %v705, %v705
      %v714 = vpack.c.bf16 %v706, %v706
      %v715 = vpack.c.bf16 %v707, %v707
      %v716 = vpack.c.bf16 %v708, %v708
      %v717 = vpack.c.bf16 %v709, %v709
      %v718 = vpack.c.bf16 %v710, %v710
      %vm719 = vcmask 781312
      %720 = vst.msk [vmem:[%s318] sm:$0xf] %vm719, %v711
      %721 = vst.msk [vmem:[%s318 + $0x4] sm:$0xf] %vm719, %v712
      %722 = vst.msk [vmem:[%s318 + $0x8] sm:$0xf] %vm719, %v713
      %723 = vst.msk [vmem:[%s318 + $0xc] sm:$0xf] %vm719, %v714
      %724 = vst.msk [vmem:[%s318 + $0x10] sm:$0xf] %vm719, %v715
      %725 = vst.msk [vmem:[%s318 + $0x14] sm:$0xf] %vm719, %v716
      %726 = vst.msk [vmem:[%s318 + $0x18] sm:$0xf] %vm719, %v717
      %727 = vst.msk [vmem:[%s318 + $0x1c] sm:$0xf] %vm719, %v718
      %s728 = smul.u32 8, %s21
      %p729 = scmp.lt.s32.totalorder %s20, 1
      %s730 = scalar_select %p729, %s20, 1
      %p731 = scmp.lt.s32.totalorder %s728, 7
      %s732 = scalar_select %p731, %s728, 7
      %s733 = smul.addr %s730, 8
      %s734 = sadd.s32 %s732, %s733
      %s735 = smul.addr %s734, 4
      %s736 = scalar_lea.vmem %s5, %s735
      // Predicated region
      $region41: #{mamba2_forward.15} parent=39 // pred_check
        %p737 = pneg %p174
      $region42: #{mamba2_forward.15} parent=39 // pred_check_branch
        %739 = sbr.rel (%p737) target = $region44
      $region43: #{mamba2_forward.15} parent=39 // pred_region
        %s740 = smul.u32 8, %s21
      $region44: #{mamba2_forward.15} parent=39 // pred_fallthru
        _
    $region40: #{mamba2_forward.15} parent=5 // pred_fallthru
      _
    %p741 = scmp.le.s32.totalorder 2, %s11
    // Predicated region
    $region45: #{mamba2_forward.15} parent=5 // pred_check
      %p742 = pneg %p741
    $region46: #{mamba2_forward.15} parent=5 // pred_check_branch
      %744 = sbr.rel (%p742) target = $region48
    $region47: #{mamba2_forward.15} parent=5 // pred_region
      %s745 = ssub.s32 %s11, 2
      // Predicated region
      $region49: #{mamba2_forward.15} parent=47 // pred_check
        %p746 = pneg %p180
      $region50: #{mamba2_forward.15} parent=47 // pred_check_branch
        %748 = sbr.rel (%p746) target = $region52
      $region51: #{mamba2_forward.15} parent=47 // pred_region
        %s749 = smul.u32 8, %s23
        %p750 = scmp.lt.s32.totalorder %s22, 1
        %s751 = scalar_select %p750, %s22, 1
        %p752 = scmp.lt.s32.totalorder %s749, 7
        %s753 = scalar_select %p752, %s749, 7
        %s754 = smul.addr %s751, 8
        %s755 = sadd.s32 %s753, %s754
        %s756 = smul.addr %s755, 4
        %s757 = scalar_lea.vmem %s5, %s756
      $region52: #{mamba2_forward.15} parent=47 // pred_fallthru
        _
    $region48: #{mamba2_forward.15} parent=5 // pred_fallthru
      _
  $region6: #{mamba2_forward.15} parent=0 // loop_footer
    %s15 = sadd.s32 1, %s11
  $region7: #{mamba2_forward.15} parent=0 // loop_footer_branch
    %10 = sbr.rel target = $region3
  $region8: #{mamba2_forward.15} parent=0 // loop_exit
    _

// kernel: mamba2_forward.14
$region0: #{mamba2_forward.14}
  #allocation0 [shape = 'u32[]', space=smem, size = 0x4, offset = 0x4, fixed_abs, tag = 'smem constant byte address 0x4 - core index']
  #allocation1 [shape = 'u32[72,128]{1,0:T(1,128)}', space=vmem, size = 0x9000, scoped, tag = 'internal scratch']
  #allocation2 [shape = 'f32[128,164]{1,0:T(8,128)}', space=vmem, size = 0x20000, scoped, tag = 'scratch operand']
  %s0 = inlined_call_operand.vmem [shape: bf16[128,64], index: 0, kind: input, shape index: {}]
  %s1 = inlined_call_operand.vmem [shape: bf16[64,164], index: 1, kind: input, shape index: {}]
  %s2 = inlined_call_operand.vmem [shape: bf16[128,164], index: 2, kind: output, shape index: {}]
  %s3 = sld [smem:[#allocation0]]
  $region26: #{mamba2_forward.14} parent=0
    _
  %s5 = ssub.s32 1, %s3
  %s6 = scalar_select 0, %s5, %s3
  // Predicated region
  $region2: #{mamba2_forward.14} parent=0 // pred_check
    _
  $region3: #{mamba2_forward.14} parent=0 // pred_check_branch
    %8 = sbr.rel (0) target = $region5
  $region4: #{mamba2_forward.14} parent=0 // pred_region
    _
  $region5: #{mamba2_forward.14} parent=0 // pred_fallthru
    _
  // Predicated region
  $region6: #{mamba2_forward.14} parent=0 // pred_check
    _
  $region7: #{mamba2_forward.14} parent=0 // pred_check_branch
    %10 = sbr.rel (0) target = $region9
  $region8: #{mamba2_forward.14} parent=0 // pred_region
    _
  $region9: #{mamba2_forward.14} parent=0 // pred_fallthru
    _
  %p12 = scmp.eq.s32.totalorder 0, 0
  // Predicated region
  $region10: #{mamba2_forward.14} parent=0 // pred_check
    %p13 = pneg %p12
  $region11: #{mamba2_forward.14} parent=0 // pred_check_branch
    %15 = sbr.rel (%p13) target = $region13
  $region12: #{mamba2_forward.14} parent=0 // pred_region
    %16 = vst [vmem:[#allocation2] sm:$0xff] 0.0
    %vm17 = vcmask 293888
    %18 = vst.msk [vmem:[#allocation2 + $0x8] sm:$0xff] %vm17, 0.0
    %19 = vst [vmem:[#allocation2 + $0x10] sm:$0xff] 0.0
    %20 = vst.msk [vmem:[#allocation2 + $0x18] sm:$0xff] %vm17, 0.0
    %21 = vst [vmem:[#allocation2 + $0x20] sm:$0xff] 0.0
    %22 = vst.msk [vmem:[#allocation2 + $0x28] sm:$0xff] %vm17, 0.0
    %23 = vst [vmem:[#allocation2 + $0x30] sm:$0xff] 0.0
    %24 = vst.msk [vmem:[#allocation2 + $0x38] sm:$0xff] %vm17, 0.0
    %25 = vst [vmem:[#allocation2 + $0x40] sm:$0xff] 0.0
    %26 = vst.msk [vmem:[#allocation2 + $0x48] sm:$0xff] %vm17, 0.0
    %27 = vst [vmem:[#allocation2 + $0x50] sm:$0xff] 0.0
    %28 = vst.msk [vmem:[#allocation2 + $0x58] sm:$0xff] %vm17, 0.0
    %29 = vst [vmem:[#allocation2 + $0x60] sm:$0xff] 0.0
    %30 = vst.msk [vmem:[#allocation2 + $0x68] sm:$0xff] %vm17, 0.0
    %31 = vst [vmem:[#allocation2 + $0x70] sm:$0xff] 0.0
    %32 = vst.msk [vmem:[#allocation2 + $0x78] sm:$0xff] %vm17, 0.0
    %33 = vst [vmem:[#allocation2 + $0x80] sm:$0xff] 0.0
    %34 = vst.msk [vmem:[#allocation2 + $0x88] sm:$0xff] %vm17, 0.0
    %35 = vst [vmem:[#allocation2 + $0x90] sm:$0xff] 0.0
    %36 = vst.msk [vmem:[#allocation2 + $0x98] sm:$0xff] %vm17, 0.0
    %37 = vst [vmem:[#allocation2 + $0xa0] sm:$0xff] 0.0
    %38 = vst.msk [vmem:[#allocation2 + $0xa8] sm:$0xff] %vm17, 0.0
    %39 = vst [vmem:[#allocation2 + $0xb0] sm:$0xff] 0.0
    %40 = vst.msk [vmem:[#allocation2 + $0xb8] sm:$0xff] %vm17, 0.0
    %41 = vst [vmem:[#allocation2 + $0xc0] sm:$0xff] 0.0
    %42 = vst.msk [vmem:[#allocation2 + $0xc8] sm:$0xff] %vm17, 0.0
    %43 = vst [vmem:[#allocation2 + $0xd0] sm:$0xff] 0.0
    %44 = vst.msk [vmem:[#allocation2 + $0xd8] sm:$0xff] %vm17, 0.0
    %45 = vst [vmem:[#allocation2 + $0xe0] sm:$0xff] 0.0
    %46 = vst.msk [vmem:[#allocation2 + $0xe8] sm:$0xff] %vm17, 0.0
    %47 = vst [vmem:[#allocation2 + $0xf0] sm:$0xff] 0.0
    %48 = vst.msk [vmem:[#allocation2 + $0xf8] sm:$0xff] %vm17, 0.0
  $region13: #{mamba2_forward.14} parent=0 // pred_fallthru
    _
  %v49 = vld [vmem:[#allocation2] sm:$0xff]
  %v50 = vld [vmem:[#allocation2 + $0x8] sm:$0xff]
  %v51 = vld [vmem:[#allocation2 + $0x10] sm:$0xff]
  %v52 = vld [vmem:[#allocation2 + $0x18] sm:$0xff]
  %v53 = vld [vmem:[#allocation2 + $0x20] sm:$0xff]
  %v54 = vld [vmem:[#allocation2 + $0x28] sm:$0xff]
  %v55 = vld [vmem:[#allocation2 + $0x30] sm:$0xff]
  %v56 = vld [vmem:[#allocation2 + $0x38] sm:$0xff]
  %v57 = vld [vmem:[#allocation2 + $0x40] sm:$0xff]
  %v58 = vld [vmem:[#allocation2 + $0x48] sm:$0xff]
  %v59 = vld [vmem:[#allocation2 + $0x50] sm:$0xff]
  %v60 = vld [vmem:[#allocation2 + $0x58] sm:$0xff]
  %v61 = vld [vmem:[#allocation2 + $0x60] sm:$0xff]
  %v62 = vld [vmem:[#allocation2 + $0x68] sm:$0xff]
  %v63 = vld [vmem:[#allocation2 + $0x70] sm:$0xff]
  %v64 = vld [vmem:[#allocation2 + $0x78] sm:$0xff]
  %v65 = vld [vmem:[#allocation2 + $0x80] sm:$0xff]
  %v66 = vld [vmem:[#allocation2 + $0x88] sm:$0xff]
  %v67 = vld [vmem:[#allocation2 + $0x90] sm:$0xff]
  %v68 = vld [vmem:[#allocation2 + $0x98] sm:$0xff]
  %v69 = vld [vmem:[#allocation2 + $0xa0] sm:$0xff]
  %v70 = vld [vmem:[#allocation2 + $0xa8] sm:$0xff]
  %v71 = vld [vmem:[#allocation2 + $0xb0] sm:$0xff]
  %v72 = vld [vmem:[#allocation2 + $0xb8] sm:$0xff]
  %v73 = vld [vmem:[#allocation2 + $0xc0] sm:$0xff]
  %v74 = vld [vmem:[#allocation2 + $0xc8] sm:$0xff]
  %v75 = vld [vmem:[#allocation2 + $0xd0] sm:$0xff]
  %v76 = vld [vmem:[#allocation2 + $0xd8] sm:$0xff]
  %v77 = vld [vmem:[#allocation2 + $0xe0] sm:$0xff]
  %v78 = vld [vmem:[#allocation2 + $0xe8] sm:$0xff]
  %v79 = vld [vmem:[#allocation2 + $0xf0] sm:$0xff]
  %v80 = vld [vmem:[#allocation2 + $0xf8] sm:$0xff]
  %v81 = vld [vmem:[%s0] sm:$0xf]
  %v82 = vld [vmem:[%s0 + $0x4] sm:$0xf]
  %v83 = vld [vmem:[%s0 + $0x8] sm:$0xf]
  %v84 = vld [vmem:[%s0 + $0xc] sm:$0xf]
  %v85 = vld [vmem:[%s0 + $0x10] sm:$0xf]
  %v86 = vld [vmem:[%s0 + $0x14] sm:$0xf]
  %v87 = vld [vmem:[%s0 + $0x18] sm:$0xf]
  %v88 = vld [vmem:[%s0 + $0x1c] sm:$0xf]
  %v89 = vld [vmem:[%s0 + $0x20] sm:$0xf]
  %v90 = vld [vmem:[%s0 + $0x24] sm:$0xf]
  %v91 = vld [vmem:[%s0 + $0x28] sm:$0xf]
  %v92 = vld [vmem:[%s0 + $0x2c] sm:$0xf]
  %v93 = vld [vmem:[%s0 + $0x30] sm:$0xf]
  %v94 = vld [vmem:[%s0 + $0x34] sm:$0xf]
  %v95 = vld [vmem:[%s0 + $0x38] sm:$0xf]
  %v96 = vld [vmem:[%s0 + $0x3c] sm:$0xf]
  %v97 = vld [vmem:[%s1] sm:$0xff]
  %v98 = vld [vmem:[%s1 + $0x8] sm:$0xff]
  %v99 = vld [vmem:[%s1 + $0x10] sm:$0xff]
  %v100 = vld [vmem:[%s1 + $0x18] sm:$0xff]
  %v101 = vld [vmem:[%s1 + $0x20] sm:$0xff]
  %v102 = vld [vmem:[%s1 + $0x28] sm:$0xff]
  %v103 = vld [vmem:[%s1 + $0x30] sm:$0xff]
  %v104 = vld [vmem:[%s1 + $0x38] sm:$0xff]
  %v121 = vunpack.c.l.b16 %v81
  %v122 = vunpack.c.l.b16 %v82
  %v123 = vunpack.c.l.b16 %v83
  %v124 = vunpack.c.l.b16 %v84
  %v125 = vunpack.c.l.b16 %v85
  %v126 = vunpack.c.l.b16 %v86
  %v127 = vunpack.c.l.b16 %v87
  %v128 = vunpack.c.l.b16 %v88
  %v129 = vunpack.c.l.b16 %v89
  %v130 = vunpack.c.l.b16 %v90
  %v131 = vunpack.c.l.b16 %v91
  %v132 = vunpack.c.l.b16 %v92
  %v133 = vunpack.c.l.b16 %v93
  %v134 = vunpack.c.l.b16 %v94
  %v135 = vunpack.c.l.b16 %v95
  %v136 = vunpack.c.l.b16 %v96
  %v137 = vpack.c.b16 %v122, %v121
  %v138 = vpack.c.b16 %v124, %v123
  %v139 = vpack.c.b16 %v126, %v125
  %v140 = vpack.c.b16 %v128, %v127
  %v141 = vpack.c.b16 %v130, %v129
  %v142 = vpack.c.b16 %v132, %v131
  %v143 = vpack.c.b16 %v134, %v133
  %v144 = vpack.c.b16 %v136, %v135
  %v153 = vunpack.c.l.b16 %v97
  %v154 = vunpack.c.h.b16 %v97
  %v155 = vunpack.c.l.b16 %v98
  %v156 = vunpack.c.h.b16 %v98
  %v157 = vunpack.c.l.b16 %v99
  %v158 = vunpack.c.h.b16 %v99
  %v159 = vunpack.c.l.b16 %v100
  %v160 = vunpack.c.h.b16 %v100
  %v161 = vunpack.c.l.b16 %v101
  %v162 = vunpack.c.h.b16 %v101
  %v163 = vunpack.c.l.b16 %v102
  %v164 = vunpack.c.h.b16 %v102
  %v165 = vunpack.c.l.b16 %v103
  %v166 = vunpack.c.h.b16 %v103
  %v167 = vunpack.c.l.b16 %v104
  %v168 = vunpack.c.h.b16 %v104
  %v169 = vpack.c.b16 %v155, %v153
  %v170 = vpack.c.b16 %v156, %v154
  %v171 = vpack.c.b16 %v159, %v157
  %v172 = vpack.c.b16 %v160, %v158
  %v173 = vpack.c.b16 %v163, %v161
  %v174 = vpack.c.b16 %v164, %v162
  %v175 = vpack.c.b16 %v167, %v165
  %v176 = vpack.c.b16 %v168, %v166
  %vm185 = vcmask 523264
  %v187 = vsel %vm185, %v137, 0
  %v190 = vsel %vm185, %v138, 0
  %v193 = vsel %vm185, %v139, 0
  %v196 = vsel %vm185, %v140, 0
  %v199 = vsel %vm185, %v141, 0
  %v202 = vsel %vm185, %v142, 0
  %v205 = vsel %vm185, %v143, 0
  %v208 = vsel %vm185, %v144, 0
  %210 = vmatpush.bf16.msra.mxu0 0
  %211 = vmatpush.bf16.msra.mxu0 0
  %212 = vmatpush.bf16.msra.mxu0 0
  %213 = vmatpush.bf16.msra.mxu0 0
  %214 = vmatpush.bf16.msra.mxu0 %v175
  %215 = vmatpush.bf16.msra.mxu0 %v173
  %216 = vmatpush.bf16.msra.mxu0 %v171
  %217 = vmatpush.bf16.msra.mxu0 %v169
  %218 = vmatmul.bf16.gmra.mxu0 %v187
  %v219 = vpop.f32.mrf.mxu0
  %v220 = vadd.f32 0.0, %v219
  %v221 = vpop.f32.mrf.mxu0
  %v222 = vadd.f32 0.0, %v221
  %223 = vmatmul.bf16.gmra.mxu0 %v190
  %v224 = vpop.f32.mrf.mxu0
  %v225 = vadd.f32 0.0, %v224
  %v226 = vpop.f32.mrf.mxu0
  %v227 = vadd.f32 0.0, %v226
  %228 = vmatmul.bf16.gmra.mxu0 %v193
  %v229 = vpop.f32.mrf.mxu0
  %v230 = vadd.f32 0.0, %v229
  %v231 = vpop.f32.mrf.mxu0
  %v232 = vadd.f32 0.0, %v231
  %233 = vmatmul.bf16.gmra.mxu0 %v196
  %v234 = vpop.f32.mrf.mxu0
  %v235 = vadd.f32 0.0, %v234
  %v236 = vpop.f32.mrf.mxu0
  %v237 = vadd.f32 0.0, %v236
  %238 = vmatmul.bf16.gmra.mxu0 %v199
  %v239 = vpop.f32.mrf.mxu0
  %v240 = vadd.f32 0.0, %v239
  %v241 = vpop.f32.mrf.mxu0
  %v242 = vadd.f32 0.0, %v241
  %243 = vmatmul.bf16.gmra.mxu0 %v202
  %v244 = vpop.f32.mrf.mxu0
  %v245 = vadd.f32 0.0, %v244
  %v246 = vpop.f32.mrf.mxu0
  %v247 = vadd.f32 0.0, %v246
  %248 = vmatmul.bf16.gmra.mxu0 %v205
  %v249 = vpop.f32.mrf.mxu0
  %v250 = vadd.f32 0.0, %v249
  %v251 = vpop.f32.mrf.mxu0
  %v252 = vadd.f32 0.0, %v251
  %253 = vmatmul.bf16.gmra.mxu0 %v208
  %v254 = vpop.f32.mrf.mxu0
  %v255 = vadd.f32 0.0, %v254
  %v256 = vpop.f32.mrf.mxu0
  %v257 = vadd.f32 0.0, %v256
  %258 = vdwg.mxu0
  %259 = vmatpush.bf16.msra.mxu0 0
  %260 = vmatpush.bf16.msra.mxu0 0
  %261 = vmatpush.bf16.msra.mxu0 0
  %262 = vmatpush.bf16.msra.mxu0 0
  %263 = vmatpush.bf16.msra.mxu0 %v176
  %264 = vmatpush.bf16.msra.mxu0 %v174
  %265 = vmatpush.bf16.msra.mxu0 %v172
  %266 = vmatpush.bf16.msra.mxu0 %v170
  %267 = vmatmul.bf16.gmra.mxu0 %v187
  %v268 = vpop.f32.mrf.mxu0
  %v269 = vadd.f32 0.0, %v268
  %v270 = vpop.f32.mrf.mxu0
  %v271 = vadd.f32 0.0, %v270
  %272 = vmatmul.bf16.gmra.mxu0 %v190
  %v273 = vpop.f32.mrf.mxu0
  %v274 = vadd.f32 0.0, %v273
  %v275 = vpop.f32.mrf.mxu0
  %v276 = vadd.f32 0.0, %v275
  %277 = vmatmul.bf16.gmra.mxu0 %v193
  %v278 = vpop.f32.mrf.mxu0
  %v279 = vadd.f32 0.0, %v278
  %v280 = vpop.f32.mrf.mxu0
  %v281 = vadd.f32 0.0, %v280
  %282 = vmatmul.bf16.gmra.mxu0 %v196
  %v283 = vpop.f32.mrf.mxu0
  %v284 = vadd.f32 0.0, %v283
  %v285 = vpop.f32.mrf.mxu0
  %v286 = vadd.f32 0.0, %v285
  %287 = vmatmul.bf16.gmra.mxu0 %v199
  %v288 = vpop.f32.mrf.mxu0
  %v289 = vadd.f32 0.0, %v288
  %v290 = vpop.f32.mrf.mxu0
  %v291 = vadd.f32 0.0, %v290
  %292 = vmatmul.bf16.gmra.mxu0 %v202
  %v293 = vpop.f32.mrf.mxu0
  %v294 = vadd.f32 0.0, %v293
  %v295 = vpop.f32.mrf.mxu0
  %v296 = vadd.f32 0.0, %v295
  %297 = vmatmul.bf16.gmra.mxu0 %v205
  %v298 = vpop.f32.mrf.mxu0
  %v299 = vadd.f32 0.0, %v298
  %v300 = vpop.f32.mrf.mxu0
  %v301 = vadd.f32 0.0, %v300
  %302 = vmatmul.bf16.gmra.mxu0 %v208
  %v303 = vpop.f32.mrf.mxu0
  %v304 = vadd.f32 0.0, %v303
  %v305 = vpop.f32.mrf.mxu0
  %v306 = vadd.f32 0.0, %v305
  %307 = vdwg.mxu0
  %v308 = vadd.f32 %v49, %v220
  %v309 = vadd.f32 %v50, %v269
  %v310 = vadd.f32 %v51, %v222
  %v311 = vadd.f32 %v52, %v271
  %v312 = vadd.f32 %v53, %v225
  %v313 = vadd.f32 %v54, %v274
  %v314 = vadd.f32 %v55, %v227
  %v315 = vadd.f32 %v56, %v276
  %v316 = vadd.f32 %v57, %v230
  %v317 = vadd.f32 %v58, %v279
  %v318 = vadd.f32 %v59, %v232
  %v319 = vadd.f32 %v60, %v281
  %v320 = vadd.f32 %v61, %v235
  %v321 = vadd.f32 %v62, %v284
  %v322 = vadd.f32 %v63, %v237
  %v323 = vadd.f32 %v64, %v286
  %v324 = vadd.f32 %v65, %v240
  %v325 = vadd.f32 %v66, %v289
  %v326 = vadd.f32 %v67, %v242
  %v327 = vadd.f32 %v68, %v291
  %v328 = vadd.f32 %v69, %v245
  %v329 = vadd.f32 %v70, %v294
  %v330 = vadd.f32 %v71, %v247
  %v331 = vadd.f32 %v72, %v296
  %v332 = vadd.f32 %v73, %v250
  %v333 = vadd.f32 %v74, %v299
  %v334 = vadd.f32 %v75, %v252
  %v335 = vadd.f32 %v76, %v301
  %v336 = vadd.f32 %v77, %v255
  %v337 = vadd.f32 %v78, %v304
  %v338 = vadd.f32 %v79, %v257
  %v339 = vadd.f32 %v80, %v306
  %340 = vst [vmem:[#allocation2] sm:$0xff] %v308
  %vm341 = vcmask 293888
  %342 = vst.msk [vmem:[#allocation2 + $0x8] sm:$0xff] %vm341, %v309
  %343 = vst [vmem:[#allocation2 + $0x10] sm:$0xff] %v310
  %344 = vst.msk [vmem:[#allocation2 + $0x18] sm:$0xff] %vm341, %v311
  %345 = vst [vmem:[#allocation2 + $0x20] sm:$0xff] %v312
  %346 = vst.msk [vmem:[#allocation2 + $0x28] sm:$0xff] %vm341, %v313
  %347 = vst [vmem:[#allocation2 + $0x30] sm:$0xff] %v314
  %348 = vst.msk [vmem:[#allocation2 + $0x38] sm:$0xff] %vm341, %v315
  %349 = vst [vmem:[#allocation2 + $0x40] sm:$0xff] %v316
  %350 = vst.msk [vmem:[#allocation2 + $0x48] sm:$0xff] %vm341, %v317
  %351 = vst [vmem:[#allocation2 + $0x50] sm:$0xff] %v318
  %352 = vst.msk [vmem:[#allocation2 + $0x58] sm:$0xff] %vm341, %v319
  %353 = vst [vmem:[#allocation2 + $0x60] sm:$0xff] %v320
  %354 = vst.msk [vmem:[#allocation2 + $0x68] sm:$0xff] %vm341, %v321
  %355 = vst [vmem:[#allocation2 + $0x70] sm:$0xff] %v322
  %356 = vst.msk [vmem:[#allocation2 + $0x78] sm:$0xff] %vm341, %v323
  %357 = vst [vmem:[#allocation2 + $0x80] sm:$0xff] %v324
  %358 = vst.msk [vmem:[#allocation2 + $0x88] sm:$0xff] %vm341, %v325
  %359 = vst [vmem:[#allocation2 + $0x90] sm:$0xff] %v326
  %360 = vst.msk [vmem:[#allocation2 + $0x98] sm:$0xff] %vm341, %v327
  %361 = vst [vmem:[#allocation2 + $0xa0] sm:$0xff] %v328
  %362 = vst.msk [vmem:[#allocation2 + $0xa8] sm:$0xff] %vm341, %v329
  %363 = vst [vmem:[#allocation2 + $0xb0] sm:$0xff] %v330
  %364 = vst.msk [vmem:[#allocation2 + $0xb8] sm:$0xff] %vm341, %v331
  %365 = vst [vmem:[#allocation2 + $0xc0] sm:$0xff] %v332
  %366 = vst.msk [vmem:[#allocation2 + $0xc8] sm:$0xff] %vm341, %v333
  %367 = vst [vmem:[#allocation2 + $0xd0] sm:$0xff] %v334
  %368 = vst.msk [vmem:[#allocation2 + $0xd8] sm:$0xff] %vm341, %v335
  %369 = vst [vmem:[#allocation2 + $0xe0] sm:$0xff] %v336
  %370 = vst.msk [vmem:[#allocation2 + $0xe8] sm:$0xff] %vm341, %v337
  %371 = vst [vmem:[#allocation2 + $0xf0] sm:$0xff] %v338
  %372 = vst.msk [vmem:[#allocation2 + $0xf8] sm:$0xff] %vm341, %v339
  // Predicated region
  $region14: #{mamba2_forward.14} parent=0 // pred_check
    %p373 = pneg %p12
  $region15: #{mamba2_forward.14} parent=0 // pred_check_branch
    %375 = sbr.rel (%p373) target = $region17
  $region16: #{mamba2_forward.14} parent=0 // pred_region
    %v376 = vld [vmem:[#allocation2] sm:$0xff]
    %v377 = vld [vmem:[#allocation2 + $0x8] sm:$0xff]
    %v378 = vld [vmem:[#allocation2 + $0x10] sm:$0xff]
    %v379 = vld [vmem:[#allocation2 + $0x18] sm:$0xff]
    %v380 = vld [vmem:[#allocation2 + $0x20] sm:$0xff]
    %v381 = vld [vmem:[#allocation2 + $0x28] sm:$0xff]
    %v382 = vld [vmem:[#allocation2 + $0x30] sm:$0xff]
    %v383 = vld [vmem:[#allocation2 + $0x38] sm:$0xff]
    %v384 = vld [vmem:[#allocation2 + $0x40] sm:$0xff]
    %v385 = vld [vmem:[#allocation2 + $0x48] sm:$0xff]
    %v386 = vld [vmem:[#allocation2 + $0x50] sm:$0xff]
    %v387 = vld [vmem:[#allocation2 + $0x58] sm:$0xff]
    %v388 = vld [vmem:[#allocation2 + $0x60] sm:$0xff]
    %v389 = vld [vmem:[#allocation2 + $0x68] sm:$0xff]
    %v390 = vld [vmem:[#allocation2 + $0x70] sm:$0xff]
    %v391 = vld [vmem:[#allocation2 + $0x78] sm:$0xff]
    %v392 = vld [vmem:[#allocation2 + $0x80] sm:$0xff]
    %v393 = vld [vmem:[#allocation2 + $0x88] sm:$0xff]
    %v394 = vld [vmem:[#allocation2 + $0x90] sm:$0xff]
    %v395 = vld [vmem:[#allocation2 + $0x98] sm:$0xff]
    %v396 = vld [vmem:[#allocation2 + $0xa0] sm:$0xff]
    %v397 = vld [vmem:[#allocation2 + $0xa8] sm:$0xff]
    %v398 = vld [vmem:[#allocation2 + $0xb0] sm:$0xff]
    %v399 = vld [vmem:[#allocation2 + $0xb8] sm:$0xff]
    %v400 = vld [vmem:[#allocation2 + $0xc0] sm:$0xff]
    %v401 = vld [vmem:[#allocation2 + $0xc8] sm:$0xff]
    %v402 = vld [vmem:[#allocation2 + $0xd0] sm:$0xff]
    %v403 = vld [vmem:[#allocation2 + $0xd8] sm:$0xff]
    %v404 = vld [vmem:[#allocation2 + $0xe0] sm:$0xff]
    %v405 = vld [vmem:[#allocation2 + $0xe8] sm:$0xff]
    %v406 = vld [vmem:[#allocation2 + $0xf0] sm:$0xff]
    %v407 = vld [vmem:[#allocation2 + $0xf8] sm:$0xff]
    %v408 = vpack.c.bf16 %v377, %v376
    %v409 = vpack.c.bf16 %v379, %v378
    %v410 = vpack.c.bf16 %v381, %v380
    %v411 = vpack.c.bf16 %v383, %v382
    %v412 = vpack.c.bf16 %v385, %v384
    %v413 = vpack.c.bf16 %v387, %v386
    %v414 = vpack.c.bf16 %v389, %v388
    %v415 = vpack.c.bf16 %v391, %v390
    %v416 = vpack.c.bf16 %v393, %v392
    %v417 = vpack.c.bf16 %v395, %v394
    %v418 = vpack.c.bf16 %v397, %v396
    %v419 = vpack.c.bf16 %v399, %v398
    %v420 = vpack.c.bf16 %v401, %v400
    %v421 = vpack.c.bf16 %v403, %v402
    %v422 = vpack.c.bf16 %v405, %v404
    %v423 = vpack.c.bf16 %v407, %v406
    %vm424 = vcmask 1043456
    %vm425 = vcmask 293892
    %vm426 = vmor %vm425, %vm424
    %427 = vst.msk [vmem:[%s2] sm:$0xff] %vm426, %v408
    %428 = vst.msk [vmem:[%s2 + $0x8] sm:$0xff] %vm426, %v409
    %429 = vst.msk [vmem:[%s2 + $0x10] sm:$0xff] %vm426, %v410
    %430 = vst.msk [vmem:[%s2 + $0x18] sm:$0xff] %vm426, %v411
    %431 = vst.msk [vmem:[%s2 + $0x20] sm:$0xff] %vm426, %v412
    %432 = vst.msk [vmem:[%s2 + $0x28] sm:$0xff] %vm426, %v413
    %433 = vst.msk [vmem:[%s2 + $0x30] sm:$0xff] %vm426, %v414
    %434 = vst.msk [vmem:[%s2 + $0x38] sm:$0xff] %vm426, %v415
    %435 = vst.msk [vmem:[%s2 + $0x40] sm:$0xff] %vm426, %v416
    %436 = vst.msk [vmem:[%s2 + $0x48] sm:$0xff] %vm426, %v417
    %437 = vst.msk [vmem:[%s2 + $0x50] sm:$0xff] %vm426, %v418
    %438 = vst.msk [vmem:[%s2 + $0x58] sm:$0xff] %vm426, %v419
    %439 = vst.msk [vmem:[%s2 + $0x60] sm:$0xff] %vm426, %v420
    %440 = vst.msk [vmem:[%s2 + $0x68] sm:$0xff] %vm426, %v421
    %441 = vst.msk [vmem:[%s2 + $0x70] sm:$0xff] %vm426, %v422
    %442 = vst.msk [vmem:[%s2 + $0x78] sm:$0xff] %vm426, %v423
  $region17: #{mamba2_forward.14} parent=0 // pred_fallthru
    _
  // Predicated region
  $region18: #{mamba2_forward.14} parent=0 // pred_check
    _
  $region19: #{mamba2_forward.14} parent=0 // pred_check_branch
    %444 = sbr.rel (0) target = $region21
  $region20: #{mamba2_forward.14} parent=0 // pred_region
    _
  $region21: #{mamba2_forward.14} parent=0 // pred_fallthru
    _
  // Predicated region
  $region22: #{mamba2_forward.14} parent=0 // pred_check
    _
  $region23: #{mamba2_forward.14} parent=0 // pred_check_branch
    %446 = sbr.rel (0) target = $region25
  $region24: #{mamba2_forward.14} parent=0 // pred_region
    _
  $region25: #{mamba2_forward.14} parent=0 // pred_fallthru
    _

// kernel: mamba2_forward.16
$region0: #{mamba2_forward.16}
  #allocation0 [shape = 'u32[]', space=smem, size = 0x4, offset = 0x4, fixed_abs, tag = 'smem constant byte address 0x4 - core index']
  #allocation1 [shape = 'u32[72,128]{1,0:T(1,128)}', space=vmem, size = 0x9000, scoped, tag = 'internal scratch']
  #allocation2 [shape = 'f32[16,64]{1,0:T(8,128)}', space=vmem, size = 0x2000, scoped, tag = 'scratch operand']
  %s0 = inlined_call_operand.vmem [shape: bf16[2,64,16], index: 0, kind: input, shape index: {}]
  %s1 = inlined_call_operand.vmem [shape: bf16[2,64,16], index: 1, kind: input, shape index: {}]
  %s2 = inlined_call_operand.vmem [shape: bf16[2,64,64], index: 2, kind: input, shape index: {}]
  %s3 = inlined_call_operand.vmem [shape: f32[2,64,4], index: 3, kind: input, shape index: {}]
  %s4 = inlined_call_operand.vmem [shape: bf16[2,64,64], index: 4, kind: input, shape index: {}]
  %s5 = inlined_call_operand.vmem [shape: f32[4,64], index: 5, kind: input, shape index: {}]
  %s6 = inlined_call_operand.vmem [shape: f32[1,64], index: 6, kind: input, shape index: {}]
  %s7 = inlined_call_operand.vmem [shape: f32[1,64], index: 7, kind: input, shape index: {}]
  %s8 = inlined_call_operand.vmem [shape: f32[1,64], index: 8, kind: input, shape index: {}]
  %s9 = inlined_call_operand.vmem [shape: bf16[2,64,64], index: 9, kind: output, shape index: {}]
  %s10 = sld [smem:[#allocation0]]
  $region81: #{mamba2_forward.16} parent=0
    _
  %s12 = ssub.s32 1, %s10
  %s13 = scalar_select 0, %s12, %s10
  loop: start=0, step=1, limit=6
  $region2: #{mamba2_forward.16} parent=0 // loop_pre_header
    _
  $region3: #{mamba2_forward.16} parent=0 // loop_header
    %s15 = sphi 0, %s19
    %p16 = scmp.ge.s32.totalorder %s15, 6
    %s22 = sphi 0, %s41
    %s23 = sphi 0, %s37
    %s24 = sphi 0, %s33
    %s25 = sphi 0, %s22
    %s26 = sphi 0, %s23
    %s27 = sphi 0, %s24
    %s28 = sphi 0, %s25
    %s29 = sphi 0, %s26
    %s30 = sphi 0, %s27
    %s50 = sphi 0, %s52
    %s53 = sphi 0, %s50
    %s54 = sphi 0, %s53
    %s70 = sphi 0, %s54
    %s80 = sphi 0, %s82
    %s83 = sphi 0, %s80
    %s84 = sphi 0, %s83
    %s100 = sphi 0, %s84
    %s108 = sphi 0, %s110
    %s111 = sphi 0, %s108
    %s112 = sphi 0, %s111
    %s128 = sphi 0, %s112
    %s140 = sphi 0, %s142
    %s143 = sphi 0, %s140
    %s144 = sphi 0, %s143
    %s160 = sphi 0, %s144
    %s170 = sphi 0, %s172
    %s173 = sphi 0, %s170
    %s174 = sphi 0, %s173
    %s190 = sphi 0, %s174
    %s194 = sphi 0, %s194
    %s196 = sphi 0, %s194
    %s197 = sphi 0, %s196
    %s211 = sphi 0, %s197
    %s215 = sphi 0, %s215
    %s217 = sphi 0, %s215
    %s218 = sphi 0, %s217
    %s232 = sphi 0, %s218
    %s236 = sphi 0, %s236
    %s238 = sphi 0, %s236
    %s239 = sphi 0, %s238
    %s253 = sphi 0, %s239
    %s257 = sphi 0, %s257
    %s259 = sphi 0, %s257
    %s260 = sphi 0, %s259
    %s274 = sphi 0, %s260
    %s284 = sphi 0, %s286
    %s287 = sphi 0, %s284
    %s288 = sphi 0, %s287
    %s304 = sphi 0, %s288
  $region4: #{mamba2_forward.16} parent=0 // loop_header_branch
    %18 = sbr.rel (%p16) target = $region8
  $region5: #{mamba2_forward.16} parent=0 // loop_body
    %s20 = ssub.s32 %s15, 1
    %s21 = ssub.s32 %s15, 2
    %s31 = sadd.s32 1, %s24
    %p32 = scmp.ge.s32.totalorder %s31, 1
    %s33 = scalar_select %p32, 0, %s31
    %s34 = sadd.s32 1, %s23
    %s35 = scalar_select %p32, %s34, %s23
    %p36 = scmp.ge.s32.totalorder %s35, 2
    %s37 = scalar_select %p36, 0, %s35
    %s38 = sadd.s32 1, %s22
    %s39 = scalar_select %p36, %s38, %s22
    %p40 = scmp.ge.s32.totalorder %s39, 2
    %s41 = scalar_select %p40, 0, %s39
    %s42 = ssub.s32 1, %s23
    %s43 = smul.u32 %s24, %s42
    %s44 = ssub.s32 1, %s37
    %s45 = smul.u32 %s33, %s44
    %s46 = ssub.s32 %s22, %s41
    %s47 = ssub.s32 %s43, %s45
    %s48 = sor.u32 %s46, %s47
    %p49 = scmp.eq.s32.totalorder %s48, 0
    %s51 = sadd.s32 %s50, 1
    %s52 = scalar_select %p49, %s50, %s51
    %p55 = pneg %p49
    %p56 = scmp.eq.s32.totalorder %s15, 3
    %p57 = por %p55, %p56
    %p58 = scmp.ne.s32.totalorder %s50, %s53
    %p59 = scmp.eq.s32.totalorder %s15, 0
    %p60 = por %p58, %p59
    %p61 = scmp.ne.s32.totalorder %s50, %s53
    %p62 = scmp.eq.s32.totalorder %s20, 3
    %p63 = por %p61, %p62
    %p64 = scmp.ne.s32.totalorder %s53, %s54
    %p65 = scmp.eq.s32.totalorder %s20, 0
    %p66 = por %p64, %p65
    %p67 = scmp.ne.s32.totalorder %s53, %s54
    %p68 = scmp.eq.s32.totalorder %s21, 3
    %p69 = por %p67, %p68
    %p71 = scmp.ne.s32.totalorder %s54, %s70
    %p72 = scmp.eq.s32.totalorder %s21, 0
    %p73 = por %p71, %p72
    %s74 = smul.u32 %s24, %s23
    %s75 = smul.u32 %s33, %s37
    %s76 = ssub.s32 %s22, %s41
    %s77 = ssub.s32 %s74, %s75
    %s78 = sor.u32 %s76, %s77
    %p79 = scmp.eq.s32.totalorder %s78, 0
    %s81 = sadd.s32 %s80, 1
    %s82 = scalar_select %p79, %s80, %s81
    %p85 = pneg %p79
    %p86 = scmp.eq.s32.totalorder %s15, 3
    %p87 = por %p85, %p86
    %p88 = scmp.ne.s32.totalorder %s80, %s83
    %p89 = scmp.eq.s32.totalorder %s15, 0
    %p90 = por %p88, %p89
    %p91 = scmp.ne.s32.totalorder %s80, %s83
    %p92 = scmp.eq.s32.totalorder %s20, 3
    %p93 = por %p91, %p92
    %p94 = scmp.ne.s32.totalorder %s83, %s84
    %p95 = scmp.eq.s32.totalorder %s20, 0
    %p96 = por %p94, %p95
    %p97 = scmp.ne.s32.totalorder %s83, %s84
    %p98 = scmp.eq.s32.totalorder %s21, 3
    %p99 = por %p97, %p98
    %p101 = scmp.ne.s32.totalorder %s84, %s100
    %p102 = scmp.eq.s32.totalorder %s21, 0
    %p103 = por %p101, %p102
    %s104 = ssub.s32 %s22, %s41
    %s105 = ssub.s32 %s24, %s33
    %s106 = sor.u32 %s104, %s105
    %p107 = scmp.eq.s32.totalorder %s106, 0
    %s109 = sadd.s32 %s108, 1
    %s110 = scalar_select %p107, %s108, %s109
    %p113 = pneg %p107
    %p114 = scmp.eq.s32.totalorder %s15, 3
    %p115 = por %p113, %p114
    %p116 = scmp.ne.s32.totalorder %s108, %s111
    %p117 = scmp.eq.s32.totalorder %s15, 0
    %p118 = por %p116, %p117
    %p119 = scmp.ne.s32.totalorder %s108, %s111
    %p120 = scmp.eq.s32.totalorder %s20, 3
    %p121 = por %p119, %p120
    %p122 = scmp.ne.s32.totalorder %s111, %s112
    %p123 = scmp.eq.s32.totalorder %s20, 0
    %p124 = por %p122, %p123
    %p125 = scmp.ne.s32.totalorder %s111, %s112
    %p126 = scmp.eq.s32.totalorder %s21, 3
    %p127 = por %p125, %p126
    %p129 = scmp.ne.s32.totalorder %s112, %s128
    %p130 = scmp.eq.s32.totalorder %s21, 0
    %p131 = por %p129, %p130
    %s132 = ssub.s32 1, %s23
    %s133 = smul.u32 %s24, %s132
    %s134 = ssub.s32 1, %s37
    %s135 = smul.u32 %s33, %s134
    %s136 = ssub.s32 %s22, %s41
    %s137 = ssub.s32 %s133, %s135
    %s138 = sor.u32 %s136, %s137
    %p139 = scmp.eq.s32.totalorder %s138, 0
    %s141 = sadd.s32 %s140, 1
    %s142 = scalar_select %p139, %s140, %s141
    %p145 = pneg %p139
    %p146 = scmp.eq.s32.totalorder %s15, 3
    %p147 = por %p145, %p146
    %p148 = scmp.ne.s32.totalorder %s140, %s143
    %p149 = scmp.eq.s32.totalorder %s15, 0
    %p150 = por %p148, %p149
    %p151 = scmp.ne.s32.totalorder %s140, %s143
    %p152 = scmp.eq.s32.totalorder %s20, 3
    %p153 = por %p151, %p152
    %p154 = scmp.ne.s32.totalorder %s143, %s144
    %p155 = scmp.eq.s32.totalorder %s20, 0
    %p156 = por %p154, %p155
    %p157 = scmp.ne.s32.totalorder %s143, %s144
    %p158 = scmp.eq.s32.totalorder %s21, 3
    %p159 = por %p157, %p158
    %p161 = scmp.ne.s32.totalorder %s144, %s160
    %p162 = scmp.eq.s32.totalorder %s21, 0
    %p163 = por %p161, %p162
    %s164 = smul.u32 %s24, %s23
    %s165 = smul.u32 %s33, %s37
    %s166 = ssub.s32 %s22, %s41
    %s167 = ssub.s32 %s164, %s165
    %s168 = sor.u32 %s166, %s167
    %p169 = scmp.eq.s32.totalorder %s168, 0
    %s171 = sadd.s32 %s170, 1
    %s172 = scalar_select %p169, %s170, %s171
    %p175 = pneg %p169
    %p176 = scmp.eq.s32.totalorder %s15, 3
    %p177 = por %p175, %p176
    %p178 = scmp.ne.s32.totalorder %s170, %s173
    %p179 = scmp.eq.s32.totalorder %s15, 0
    %p180 = por %p178, %p179
    %p181 = scmp.ne.s32.totalorder %s170, %s173
    %p182 = scmp.eq.s32.totalorder %s20, 3
    %p183 = por %p181, %p182
    %p184 = scmp.ne.s32.totalorder %s173, %s174
    %p185 = scmp.eq.s32.totalorder %s20, 0
    %p186 = por %p184, %p185
    %p187 = scmp.ne.s32.totalorder %s173, %s174
    %p188 = scmp.eq.s32.totalorder %s21, 3
    %p189 = por %p187, %p188
    %p191 = scmp.ne.s32.totalorder %s174, %s190
    %p192 = scmp.eq.s32.totalorder %s21, 0
    %p193 = por %p191, %p192
    %s195 = sadd.s32 %s194, 1
    %p198 = scmp.eq.s32.totalorder %s15, 3
    %p199 = scmp.ne.s32.totalorder %s194, %s196
    %p200 = scmp.eq.s32.totalorder %s15, 0
    %p201 = por %p199, %p200
    %p202 = scmp.ne.s32.totalorder %s194, %s196
    %p203 = scmp.eq.s32.totalorder %s20, 3
    %p204 = por %p202, %p203
    %p205 = scmp.ne.s32.totalorder %s196, %s197
    %p206 = scmp.eq.s32.totalorder %s20, 0
    %p207 = por %p205, %p206
    %p208 = scmp.ne.s32.totalorder %s196, %s197
    %p209 = scmp.eq.s32.totalorder %s21, 3
    %p210 = por %p208, %p209
    %p212 = scmp.ne.s32.totalorder %s197, %s211
    %p213 = scmp.eq.s32.totalorder %s21, 0
    %p214 = por %p212, %p213
    %s216 = sadd.s32 %s215, 1
    %p219 = scmp.eq.s32.totalorder %s15, 3
    %p220 = scmp.ne.s32.totalorder %s215, %s217
    %p221 = scmp.eq.s32.totalorder %s15, 0
    %p222 = por %p220, %p221
    %p223 = scmp.ne.s32.totalorder %s215, %s217
    %p224 = scmp.eq.s32.totalorder %s20, 3
    %p225 = por %p223, %p224
    %p226 = scmp.ne.s32.totalorder %s217, %s218
    %p227 = scmp.eq.s32.totalorder %s20, 0
    %p228 = por %p226, %p227
    %p229 = scmp.ne.s32.totalorder %s217, %s218
    %p230 = scmp.eq.s32.totalorder %s21, 3
    %p231 = por %p229, %p230
    %p233 = scmp.ne.s32.totalorder %s218, %s232
    %p234 = scmp.eq.s32.totalorder %s21, 0
    %p235 = por %p233, %p234
    %s237 = sadd.s32 %s236, 1
    %p240 = scmp.eq.s32.totalorder %s15, 3
    %p241 = scmp.ne.s32.totalorder %s236, %s238
    %p242 = scmp.eq.s32.totalorder %s15, 0
    %p243 = por %p241, %p242
    %p244 = scmp.ne.s32.totalorder %s236, %s238
    %p245 = scmp.eq.s32.totalorder %s20, 3
    %p246 = por %p244, %p245
    %p247 = scmp.ne.s32.totalorder %s238, %s239
    %p248 = scmp.eq.s32.totalorder %s20, 0
    %p249 = por %p247, %p248
    %p250 = scmp.ne.s32.totalorder %s238, %s239
    %p251 = scmp.eq.s32.totalorder %s21, 3
    %p252 = por %p250, %p251
    %p254 = scmp.ne.s32.totalorder %s239, %s253
    %p255 = scmp.eq.s32.totalorder %s21, 0
    %p256 = por %p254, %p255
    %s258 = sadd.s32 %s257, 1
    %p261 = scmp.eq.s32.totalorder %s15, 3
    %p262 = scmp.ne.s32.totalorder %s257, %s259
    %p263 = scmp.eq.s32.totalorder %s15, 0
    %p264 = por %p262, %p263
    %p265 = scmp.ne.s32.totalorder %s257, %s259
    %p266 = scmp.eq.s32.totalorder %s20, 3
    %p267 = por %p265, %p266
    %p268 = scmp.ne.s32.totalorder %s259, %s260
    %p269 = scmp.eq.s32.totalorder %s20, 0
    %p270 = por %p268, %p269
    %p271 = scmp.ne.s32.totalorder %s259, %s260
    %p272 = scmp.eq.s32.totalorder %s21, 3
    %p273 = por %p271, %p272
    %p275 = scmp.ne.s32.totalorder %s260, %s274
    %p276 = scmp.eq.s32.totalorder %s21, 0
    %p277 = por %p275, %p276
    %s278 = smul.u32 %s24, %s23
    %s279 = smul.u32 %s33, %s37
    %s280 = ssub.s32 %s22, %s41
    %s281 = ssub.s32 %s278, %s279
    %s282 = sor.u32 %s280, %s281
    %p283 = scmp.eq.s32.totalorder %s282, 0
    %s285 = sadd.s32 %s284, 1
    %s286 = scalar_select %p283, %s284, %s285
    %p289 = pneg %p283
    %p290 = scmp.eq.s32.totalorder %s15, 3
    %p291 = por %p289, %p290
    %p292 = scmp.ne.s32.totalorder %s284, %s287
    %p293 = scmp.eq.s32.totalorder %s15, 0
    %p294 = por %p292, %p293
    %p295 = scmp.ne.s32.totalorder %s284, %s287
    %p296 = scmp.eq.s32.totalorder %s20, 3
    %p297 = por %p295, %p296
    %p298 = scmp.ne.s32.totalorder %s287, %s288
    %p299 = scmp.eq.s32.totalorder %s20, 0
    %p300 = por %p298, %p299
    %p301 = scmp.ne.s32.totalorder %s287, %s288
    %p302 = scmp.eq.s32.totalorder %s21, 3
    %p303 = por %p301, %p302
    %p305 = scmp.ne.s32.totalorder %s288, %s304
    %p306 = scmp.eq.s32.totalorder %s21, 0
    %p307 = por %p305, %p306
    %p308 = scmp.le.s32.totalorder 1, %s15
    %p309 = scmp.lt.s32.totalorder %s15, 5
    %p310 = pnand %p308, %p309
    %p311 = pneg %p310
    // Predicated region
    $region9: #{mamba2_forward.16} parent=5 // pred_check
      _
    $region10: #{mamba2_forward.16} parent=5 // pred_check_branch
      %313 = sbr.rel (%p310) target = $region12
    $region11: #{mamba2_forward.16} parent=5 // pred_region
      %s314 = ssub.s32 %s15, 1
      // Predicated region
      $region13: #{mamba2_forward.16} parent=11 // pred_check
        %p315 = pneg %p207
      $region14: #{mamba2_forward.16} parent=11 // pred_check_branch
        %317 = sbr.rel (%p315) target = $region16
      $region15: #{mamba2_forward.16} parent=11 // pred_region
        _
      $region16: #{mamba2_forward.16} parent=11 // pred_fallthru
        _
      // Predicated region
      $region17: #{mamba2_forward.16} parent=11 // pred_check
        %p318 = pneg %p228
      $region18: #{mamba2_forward.16} parent=11 // pred_check_branch
        %320 = sbr.rel (%p318) target = $region20
      $region19: #{mamba2_forward.16} parent=11 // pred_region
        _
      $region20: #{mamba2_forward.16} parent=11 // pred_fallthru
        _
      // Predicated region
      $region21: #{mamba2_forward.16} parent=11 // pred_check
        %p321 = pneg %p249
      $region22: #{mamba2_forward.16} parent=11 // pred_check_branch
        %323 = sbr.rel (%p321) target = $region24
      $region23: #{mamba2_forward.16} parent=11 // pred_region
        _
      $region24: #{mamba2_forward.16} parent=11 // pred_fallthru
        _
      // Predicated region
      $region25: #{mamba2_forward.16} parent=11 // pred_check
        %p324 = pneg %p270
      $region26: #{mamba2_forward.16} parent=11 // pred_check_branch
        %326 = sbr.rel (%p324) target = $region28
      $region27: #{mamba2_forward.16} parent=11 // pred_region
        _
      $region28: #{mamba2_forward.16} parent=11 // pred_fallthru
        _
    $region12: #{mamba2_forward.16} parent=5 // pred_fallthru
      _
    %p327 = scmp.lt.s32.totalorder %s15, 4
    // Predicated region
    $region29: #{mamba2_forward.16} parent=5 // pred_check
      %p328 = pneg %p327
    $region30: #{mamba2_forward.16} parent=5 // pred_check_branch
      %330 = sbr.rel (%p328) target = $region32
    $region31: #{mamba2_forward.16} parent=5 // pred_region
      // Predicated region
      $region33: #{mamba2_forward.16} parent=31 // pred_check
        %p331 = pneg %p60
      $region34: #{mamba2_forward.16} parent=31 // pred_check_branch
        %333 = sbr.rel (%p331) target = $region36
      $region35: #{mamba2_forward.16} parent=31 // pred_region
        %s334 = ssub.s32 1, %s23
        %s335 = smul.u32 %s24, %s334
        %s336 = smul.u32 8, %s335
        %p337 = scmp.lt.s32.totalorder %s22, 1
        %s338 = scalar_select %p337, %s22, 1
        %p339 = scmp.lt.s32.totalorder %s336, 7
        %s340 = scalar_select %p339, %s336, 7
        %s341 = smul.addr %s338, 8
        %s342 = sadd.s32 %s340, %s341
        %s343 = smul.addr %s342, 4
        %s344 = scalar_lea.vmem %s0, %s343
        %s345 = ssub.s32 1, %s23
        %s346 = smul.u32 %s24, %s345
        %s347 = smul.u32 8, %s346
      $region36: #{mamba2_forward.16} parent=31 // pred_fallthru
        _
      // Predicated region
      $region37: #{mamba2_forward.16} parent=31 // pred_check
        %p348 = pneg %p90
      $region38: #{mamba2_forward.16} parent=31 // pred_check_branch
        %350 = sbr.rel (%p348) target = $region40
      $region39: #{mamba2_forward.16} parent=31 // pred_region
        %s351 = smul.u32 %s24, %s23
        %s352 = smul.u32 8, %s351
        %p353 = scmp.lt.s32.totalorder %s22, 1
        %s354 = scalar_select %p353, %s22, 1
        %p355 = scmp.lt.s32.totalorder %s352, 7
        %s356 = scalar_select %p355, %s352, 7
        %s357 = smul.addr %s354, 8
        %s358 = sadd.s32 %s356, %s357
        %s359 = smul.addr %s358, 4
        %s360 = scalar_lea.vmem %s1, %s359
        %s361 = smul.u32 %s24, %s23
        %s362 = smul.u32 8, %s361
      $region40: #{mamba2_forward.16} parent=31 // pred_fallthru
        _
      // Predicated region
      $region41: #{mamba2_forward.16} parent=31 // pred_check
        %p363 = pneg %p118
      $region42: #{mamba2_forward.16} parent=31 // pred_check_branch
        %365 = sbr.rel (%p363) target = $region44
      $region43: #{mamba2_forward.16} parent=31 // pred_region
        %s366 = smul.u32 8, %s24
        %p367 = scmp.lt.s32.totalorder %s22, 1
        %s368 = scalar_select %p367, %s22, 1
        %p369 = scmp.lt.s32.totalorder %s366, 7
        %s370 = scalar_select %p369, %s366, 7
        %s371 = smul.addr %s368, 8
        %s372 = sadd.s32 %s370, %s371
        %s373 = smul.addr %s372, 4
        %s374 = scalar_lea.vmem %s2, %s373
        %s375 = smul.u32 8, %s24
      $region44: #{mamba2_forward.16} parent=31 // pred_fallthru
        _
      // Predicated region
      $region45: #{mamba2_forward.16} parent=31 // pred_check
        %p376 = pneg %p150
      $region46: #{mamba2_forward.16} parent=31 // pred_check_branch
        %378 = sbr.rel (%p376) target = $region48
      $region47: #{mamba2_forward.16} parent=31 // pred_region
        %s379 = ssub.s32 1, %s23
        %s380 = smul.u32 %s24, %s379
        %s381 = smul.u32 8, %s380
        %p382 = scmp.lt.s32.totalorder %s22, 1
        %s383 = scalar_select %p382, %s22, 1
        %p384 = scmp.lt.s32.totalorder %s381, 7
        %s385 = scalar_select %p384, %s381, 7
        %s386 = smul.addr %s383, 8
        %s387 = sadd.s32 %s385, %s386
        %s388 = smul.addr %s387, 8
        %s389 = scalar_lea.vmem %s3, %s388
        %s390 = ssub.s32 1, %s23
        %s391 = smul.u32 %s24, %s390
        %s392 = smul.u32 8, %s391
      $region48: #{mamba2_forward.16} parent=31 // pred_fallthru
        _
      // Predicated region
      $region49: #{mamba2_forward.16} parent=31 // pred_check
        %p393 = pneg %p180
      $region50: #{mamba2_forward.16} parent=31 // pred_check_branch
        %395 = sbr.rel (%p393) target = $region52
      $region51: #{mamba2_forward.16} parent=31 // pred_region
        %s396 = smul.u32 %s24, %s23
        %s397 = smul.u32 8, %s396
        %p398 = scmp.lt.s32.totalorder %s22, 1
        %s399 = scalar_select %p398, %s22, 1
        %p400 = scmp.lt.s32.totalorder %s397, 7
        %s401 = scalar_select %p400, %s397, 7
        %s402 = smul.addr %s399, 8
        %s403 = sadd.s32 %s401, %s402
        %s404 = smul.addr %s403, 4
        %s405 = scalar_lea.vmem %s4, %s404
        %s406 = smul.u32 %s24, %s23
        %s407 = smul.u32 8, %s406
      $region52: #{mamba2_forward.16} parent=31 // pred_fallthru
        _
    $region32: #{mamba2_forward.16} parent=5 // pred_fallthru
      _
    %p408 = scmp.le.s32.totalorder 1, %s15
    %p409 = scmp.lt.s32.totalorder %s15, 5
    %p410 = pnand %p408, %p409
    %p411 = pneg %p410
    // Predicated region
    $region53: #{mamba2_forward.16} parent=5 // pred_check
      _
    $region54: #{mamba2_forward.16} parent=5 // pred_check_branch
      %413 = sbr.rel (%p410) target = $region56
    $region55: #{mamba2_forward.16} parent=5 // pred_region
      %s414 = ssub.s32 %s15, 1
      %s415 = ssub.s32 1, %s26
      %s416 = smul.u32 %s27, %s415
      %s417 = smul.u32 8, %s416
      %p418 = scmp.lt.s32.totalorder %s25, 1
      %s419 = scalar_select %p418, %s25, 1
      %p420 = scmp.lt.s32.totalorder %s417, 7
      %s421 = scalar_select %p420, %s417, 7
      %s422 = smul.addr %s419, 8
      %s423 = sadd.s32 %s421, %s422
      %s424 = smul.addr %s423, 4
      %s425 = scalar_lea.vmem %s0, %s424
      %p426 = pneg %p66
      %p427 = pneg %p63
      %s428 = smul.u32 %s27, %s26
      %s429 = smul.u32 8, %s428
      %p430 = scmp.lt.s32.totalorder %s25, 1
      %s431 = scalar_select %p430, %s25, 1
      %p432 = scmp.lt.s32.totalorder %s429, 7
      %s433 = scalar_select %p432, %s429, 7
      %s434 = smul.addr %s431, 8
      %s435 = sadd.s32 %s433, %s434
      %s436 = smul.addr %s435, 4
      %s437 = scalar_lea.vmem %s1, %s436
      %p438 = pneg %p96
      %p439 = pneg %p93
      %s440 = smul.u32 8, %s27
      %p441 = scmp.lt.s32.totalorder %s25, 1
      %s442 = scalar_select %p441, %s25, 1
      %p443 = scmp.lt.s32.totalorder %s440, 7
      %s444 = scalar_select %p443, %s440, 7
      %s445 = smul.addr %s442, 8
      %s446 = sadd.s32 %s444, %s445
      %s447 = smul.addr %s446, 4
      %s448 = scalar_lea.vmem %s2, %s447
      %p449 = pneg %p124
      %p450 = pneg %p121
      %s451 = ssub.s32 1, %s26
      %s452 = smul.u32 %s27, %s451
      %s453 = smul.u32 8, %s452
      %p454 = scmp.lt.s32.totalorder %s25, 1
      %s455 = scalar_select %p454, %s25, 1
      %p456 = scmp.lt.s32.totalorder %s453, 7
      %s457 = scalar_select %p456, %s453, 7
      %s458 = smul.addr %s455, 8
      %s459 = sadd.s32 %s457, %s458
      %s460 = smul.addr %s459, 8
      %s461 = scalar_lea.vmem %s3, %s460
      %p462 = pneg %p156
      %p463 = pneg %p153
      %s464 = smul.u32 %s27, %s26
      %s465 = smul.u32 8, %s464
      %p466 = scmp.lt.s32.totalorder %s25, 1
      %s467 = scalar_select %p466, %s25, 1
      %p468 = scmp.lt.s32.totalorder %s465, 7
      %s469 = scalar_select %p468, %s465, 7
      %s470 = smul.addr %s467, 8
      %s471 = sadd.s32 %s469, %s470
      %s472 = smul.addr %s471, 4
      %s473 = scalar_lea.vmem %s4, %s472
      %p474 = pneg %p186
      %p475 = pneg %p183
      %p476 = pneg %p207
      %p477 = pneg %p204
      %p478 = pneg %p228
      %p479 = pneg %p225
      %p480 = pneg %p249
      %p481 = pneg %p246
      %p482 = pneg %p270
      %p483 = pneg %p267
      %p484 = pneg %p300
      %p485 = pneg %p297
      %s486 = smul.u32 %s27, %s26
      %s487 = smul.u32 8, %s486
      %p488 = scmp.lt.s32.totalorder %s25, 1
      %s489 = scalar_select %p488, %s25, 1
      %p490 = scmp.lt.s32.totalorder %s487, 7
      %s491 = scalar_select %p490, %s487, 7
      %s492 = smul.addr %s489, 8
      %s493 = sadd.s32 %s491, %s492
      %s494 = smul.addr %s493, 4
      %s495 = scalar_lea.vmem %s9, %s494
      %s496 = ssub.s32 1, %s26
      %s497 = smul.u32 %s27, %s496
      %s498 = smul.u32 8, %s497
      %p499 = scmp.lt.s32.totalorder %s25, 1
      %s500 = scalar_select %p499, %s25, 1
      %p501 = scmp.lt.s32.totalorder %s498, 7
      %s502 = scalar_select %p501, %s498, 7
      %s503 = smul.addr %s500, 8
      %s504 = sadd.s32 %s502, %s503
      %s505 = smul.addr %s504, 4
      %s506 = scalar_lea.vmem %s0, %s505
      %s507 = ssub.s32 1, %s26
      %s508 = smul.u32 %s27, %s507
      %s509 = smul.u32 8, %s508
      %s510 = smul.u32 %s27, %s26
      %s511 = smul.u32 8, %s510
      %p512 = scmp.lt.s32.totalorder %s25, 1
      %s513 = scalar_select %p512, %s25, 1
      %p514 = scmp.lt.s32.totalorder %s511, 7
      %s515 = scalar_select %p514, %s511, 7
      %s516 = smul.addr %s513, 8
      %s517 = sadd.s32 %s515, %s516
      %s518 = smul.addr %s517, 4
      %s519 = scalar_lea.vmem %s1, %s518
      %s520 = smul.u32 %s27, %s26
      %s521 = smul.u32 8, %s520
      %s522 = smul.u32 8, %s27
      %p523 = scmp.lt.s32.totalorder %s25, 1
      %s524 = scalar_select %p523, %s25, 1
      %p525 = scmp.lt.s32.totalorder %s522, 7
      %s526 = scalar_select %p525, %s522, 7
      %s527 = smul.addr %s524, 8
      %s528 = sadd.s32 %s526, %s527
      %s529 = smul.addr %s528, 4
      %s530 = scalar_lea.vmem %s2, %s529
      %s531 = smul.u32 8, %s27
      %s532 = ssub.s32 1, %s26
      %s533 = smul.u32 %s27, %s532
      %s534 = smul.u32 8, %s533
      %p535 = scmp.lt.s32.totalorder %s25, 1
      %s536 = scalar_select %p535, %s25, 1
      %p537 = scmp.lt.s32.totalorder %s534, 7
      %s538 = scalar_select %p537, %s534, 7
      %s539 = smul.addr %s536, 8
      %s540 = sadd.s32 %s538, %s539
      %s541 = smul.addr %s540, 8
      %s542 = scalar_lea.vmem %s3, %s541
      %s543 = ssub.s32 1, %s26
      %s544 = smul.u32 %s27, %s543
      %s545 = smul.u32 8, %s544
      %s546 = smul.u32 %s27, %s26
      %s547 = smul.u32 8, %s546
      %p548 = scmp.lt.s32.totalorder %s25, 1
      %s549 = scalar_select %p548, %s25, 1
      %p550 = scmp.lt.s32.totalorder %s547, 7
      %s551 = scalar_select %p550, %s547, 7
      %s552 = smul.addr %s549, 8
      %s553 = sadd.s32 %s551, %s552
      %s554 = smul.addr %s553, 4
      %s555 = scalar_lea.vmem %s4, %s554
      %s556 = smul.u32 %s27, %s26
      %s557 = smul.u32 8, %s556
      %s558 = smul.u32 %s27, %s26
      %s559 = smul.u32 8, %s558
      %p560 = scmp.lt.s32.totalorder %s25, 1
      %s561 = scalar_select %p560, %s25, 1
      %p562 = scmp.lt.s32.totalorder %s559, 7
      %s563 = scalar_select %p562, %s559, 7
      %s564 = smul.addr %s561, 8
      %s565 = sadd.s32 %s563, %s564
      %s566 = smul.addr %s565, 4
      %s567 = scalar_lea.vmem %s9, %s566
      %s568 = smul.u32 %s27, %s26
      %s569 = smul.u32 8, %s568
      %p570 = scmp.eq.s32.totalorder %s26, 0
      %p571 = scmp.eq.s32.totalorder %s27, 0
      %p572 = pnand %p570, %p571
      %p573 = pneg %p572
      // Predicated region
      $region57: #{mamba2_forward.16} parent=55 // pred_check
        _
      $region58: #{mamba2_forward.16} parent=55 // pred_check_branch
        %575 = sbr.rel (%p572) target = $region60
      $region59: #{mamba2_forward.16} parent=55 // pred_region
        %vm576 = vcmask 523264
        %577 = vst.msk [vmem:[#allocation2] sm:$0xff] %vm576, 0.0
        %578 = vst.msk [vmem:[#allocation2 + $0x8] sm:$0xff] %vm576, 0.0
      $region60: #{mamba2_forward.16} parent=55 // pred_fallthru
        _
      // Predicated region
      $region61: #{mamba2_forward.16} parent=55 // pred_check
        %p579 = pneg %p570
      $region62: #{mamba2_forward.16} parent=55 // pred_check_branch
        %581 = sbr.rel (%p579) target = $region64
      $region63: #{mamba2_forward.16} parent=55 // pred_region
        %v582 = vld [vmem:[%s542] sm:$0xff]
        %v583 = vld [vmem:[%s542 + $0x8] sm:$0xff]
        %v584 = vld [vmem:[%s542 + $0x10] sm:$0xff]
        %v585 = vld [vmem:[%s542 + $0x18] sm:$0xff]
        %v586 = vld [vmem:[%s542 + $0x20] sm:$0xff]
        %v587 = vld [vmem:[%s542 + $0x28] sm:$0xff]
        %v588 = vld [vmem:[%s542 + $0x30] sm:$0xff]
        %v589 = vld [vmem:[%s542 + $0x38] sm:$0xff]
        %v590 = vld [vmem:[%s5] sm:$0xf]
        %vm591 = vcmask 31744
        %v593 = vsel %vm591, %v582, 0
        %v596 = vsel %vm591, %v583, 0
        %v599 = vsel %vm591, %v584, 0
        %v602 = vsel %vm591, %v585, 0
        %v605 = vsel %vm591, %v586, 0
        %v608 = vsel %vm591, %v587, 0
        %v611 = vsel %vm591, %v588, 0
        %v614 = vsel %vm591, %v589, 0
        %vm616 = vcmask 1043456
        %v618 = vsel %vm616, %v590, 0
        %620 = vmatpush.msra.mxu0 0.0
        %621 = vmatpush.msra.mxu0 0.0
        %622 = vmatpush.msra.mxu0 0.0
        %623 = vmatpush.msra.mxu0 0.0
        %624 = vmatpush.msra.mxu0 0.0
        %625 = vmatpush.msra.mxu0 0.0
        %626 = vmatpush.msra.mxu0 0.0
        %627 = vmatpush.msra.mxu0 0.0
        %628 = vmatpush.msra.mxu0 0.0
        %629 = vmatpush.msra.mxu0 0.0
        %630 = vmatpush.msra.mxu0 0.0
        %631 = vmatpush.msra.mxu0 0.0
        %632 = vmatpush.msra.mxu0 0.0
        %633 = vmatpush.msra.mxu0 0.0
        %634 = vmatpush.msra.mxu0 0.0
        %635 = vmatpush.msra.mxu0 %v618
        %636 = vmatmul.f32.gmra.mxu0 %v593
        %v637 = vpop.f32.mrf.mxu0
        %v638 = vadd.f32 0.0, %v637
        %639 = vmatmul.f32.gmra.mxu0 %v596
        %v640 = vpop.f32.mrf.mxu0
        %v641 = vadd.f32 0.0, %v640
        %642 = vmatmul.f32.gmra.mxu0 %v599
        %v643 = vpop.f32.mrf.mxu0
        %v644 = vadd.f32 0.0, %v643
        %645 = vmatmul.f32.gmra.mxu0 %v602
        %v646 = vpop.f32.mrf.mxu0
        %v647 = vadd.f32 0.0, %v646
        %648 = vmatmul.f32.gmra.mxu0 %v605
        %v649 = vpop.f32.mrf.mxu0
        %v650 = vadd.f32 0.0, %v649
        %651 = vmatmul.f32.gmra.mxu0 %v608
        %v652 = vpop.f32.mrf.mxu0
        %v653 = vadd.f32 0.0, %v652
        %654 = vmatmul.f32.gmra.mxu0 %v611
        %v655 = vpop.f32.mrf.mxu0
        %v656 = vadd.f32 0.0, %v655
        %657 = vmatmul.f32.gmra.mxu0 %v614
        %v658 = vpop.f32.mrf.mxu0
        %v659 = vadd.f32 0.0, %v658
        %660 = vdwg.mxu0
        %v661 = vld [vmem:[%s530] sm:$0xf]
        %v662 = vld [vmem:[%s530 + $0x4] sm:$0xf]
        %v663 = vld [vmem:[%s530 + $0x8] sm:$0xf]
        %v664 = vld [vmem:[%s530 + $0xc] sm:$0xf]
        %v665 = vld [vmem:[%s530 + $0x10] sm:$0xf]
        %v666 = vld [vmem:[%s530 + $0x14] sm:$0xf]
        %v667 = vld [vmem:[%s530 + $0x18] sm:$0xf]
        %v668 = vld [vmem:[%s530 + $0x1c] sm:$0xf]
        %v669 = vunpack.c.l.bf16 %v661
        %v670 = vunpack.c.l.bf16 %v662
        %v671 = vunpack.c.l.bf16 %v663
        %v672 = vunpack.c.l.bf16 %v664
        %v673 = vunpack.c.l.bf16 %v665
        %v674 = vunpack.c.l.bf16 %v666
        %v675 = vunpack.c.l.bf16 %v667
        %v676 = vunpack.c.l.bf16 %v668
        %v677 = vmul.f32 %v669, %v638
        %v678 = vmul.f32 %v670, %v641
        %v679 = vmul.f32 %v671, %v644
        %v680 = vmul.f32 %v672, %v647
        %v681 = vmul.f32 %v673, %v650
        %v682 = vmul.f32 %v674, %v653
        %v683 = vmul.f32 %v675, %v656
        %v684 = vmul.f32 %v676, %v659
        %v685 = vld [vmem:[#allocation2] sm:$0xff]
        %v686 = vld [vmem:[#allocation2 + $0x8] sm:$0xff]
        %v687 = vld [vmem:[%s506] sm:$0xf]
        %v688 = vld [vmem:[%s506 + $0x4] sm:$0xf]
        %v689 = vld [vmem:[%s506 + $0x8] sm:$0xf]
        %v690 = vld [vmem:[%s506 + $0xc] sm:$0xf]
        %v691 = vld [vmem:[%s506 + $0x10] sm:$0xf]
        %v692 = vld [vmem:[%s506 + $0x14] sm:$0xf]
        %v693 = vld [vmem:[%s506 + $0x18] sm:$0xf]
        %v694 = vld [vmem:[%s506 + $0x1c] sm:$0xf]
        %v695 = vunpack.c.l.bf16 %v687
        %v696 = vunpack.c.l.bf16 %v688
        %v697 = vunpack.c.l.bf16 %v689
        %v698 = vunpack.c.l.bf16 %v690
        %v699 = vunpack.c.l.bf16 %v691
        %v700 = vunpack.c.l.bf16 %v692
        %v701 = vunpack.c.l.bf16 %v693
        %v702 = vunpack.c.l.bf16 %v694
        %703 = vxpose.xlu0.b32.start [1/16] %v695, 128
        %704 = vxpose.xlu0.b32.cont [2/16] %v696, 128
        %705 = vxpose.xlu0.b32.cont [3/16] %v697, 128
        %706 = vxpose.xlu0.b32.cont [4/16] %v698, 128
        %707 = vxpose.xlu0.b32.cont [5/16] %v699, 128
        %708 = vxpose.xlu0.b32.cont [6/16] %v700, 128
        %709 = vxpose.xlu0.b32.cont [7/16] %v701, 128
        %710 = vxpose.xlu0.b32.cont [8/16] %v702, 128
        %711 = vxpose.xlu0.b32.cont [9/16] 0.0, 128
        %712 = vxpose.xlu0.b32.cont [10/16] 0.0, 128
        %713 = vxpose.xlu0.b32.cont [11/16] 0.0, 128
        %714 = vxpose.xlu0.b32.cont [12/16] 0.0, 128
        %715 = vxpose.xlu0.b32.cont [13/16] 0.0, 128
        %716 = vxpose.xlu0.b32.cont [14/16] 0.0, 128
        %717 = vxpose.xlu0.b32.cont [15/16] 0.0, 128
        %718 = vxpose.xlu0.b32.end [16/16] 0.0, 128
        %v719 = vpop.trf.xlu0
        %v720 = vpop.trf.xlu0
        %v721 = vpop.trf.xlu0
        %v722 = vpop.trf.xlu0
        %v723 = vpop.trf.xlu0
        %v724 = vpop.trf.xlu0
        %v725 = vpop.trf.xlu0
        %v726 = vpop.trf.xlu0
        %v727 = vpop.trf.xlu0
        %v728 = vpop.trf.xlu0
        %v729 = vpop.trf.xlu0
        %v730 = vpop.trf.xlu0
        %v731 = vpop.trf.xlu0
        %v732 = vpop.trf.xlu0
        %v733 = vpop.trf.xlu0
        %v734 = vpop.trf.xlu0
        %vm735 = vcmask 523264
        %v737 = vsel %vm735, %v719, 0
        %v740 = vsel %vm735, %v720, 0
        %742 = vmatpush.msra.mxu0 0.0
        %743 = vmatpush.msra.mxu0 0.0
        %744 = vmatpush.msra.mxu0 0.0
        %745 = vmatpush.msra.mxu0 0.0
        %746 = vmatpush.msra.mxu0 0.0
        %747 = vmatpush.msra.mxu0 0.0
        %748 = vmatpush.msra.mxu0 0.0
        %749 = vmatpush.msra.mxu0 0.0
        %750 = vmatpush.msra.mxu0 %v684
        %751 = vmatpush.msra.mxu0 %v683
        %752 = vmatpush.msra.mxu0 %v682
        %753 = vmatpush.msra.mxu0 %v681
        %754 = vmatpush.msra.mxu0 %v680
        %755 = vmatpush.msra.mxu0 %v679
        %756 = vmatpush.msra.mxu0 %v678
        %757 = vmatpush.msra.mxu0 %v677
        %758 = vmatmul.f32.gmra.mxu0 %v737
        %v759 = vpop.f32.mrf.mxu0
        %v760 = vadd.f32 0.0, %v759
        %761 = vmatmul.f32.gmra.mxu0 %v740
        %v762 = vpop.f32.mrf.mxu0
        %v763 = vadd.f32 0.0, %v762
        %764 = vdwg.mxu0
        %v765 = vadd.f32 %v685, %v760
        %v766 = vadd.f32 %v686, %v763
        %767 = vst.msk [vmem:[#allocation2] sm:$0xff] %vm735, %v765
        %768 = vst.msk [vmem:[#allocation2 + $0x8] sm:$0xff] %vm735, %v766
      $region64: #{mamba2_forward.16} parent=55 // pred_fallthru
        _
      %p769 = scmp.eq.s32.totalorder %s26, 1
      // Predicated region
      $region65: #{mamba2_forward.16} parent=55 // pred_check
        %p770 = pneg %p769
      $region66: #{mamba2_forward.16} parent=55 // pred_check_branch
        %772 = sbr.rel (%p770) target = $region68
      $region67: #{mamba2_forward.16} parent=55 // pred_region
        %v773 = vld [vmem:[%s519] sm:$0xf]
        %v774 = vld [vmem:[%s519 + $0x4] sm:$0xf]
        %v775 = vld [vmem:[%s519 + $0x8] sm:$0xf]
        %v776 = vld [vmem:[%s519 + $0xc] sm:$0xf]
        %v777 = vld [vmem:[%s519 + $0x10] sm:$0xf]
        %v778 = vld [vmem:[%s519 + $0x14] sm:$0xf]
        %v779 = vld [vmem:[%s519 + $0x18] sm:$0xf]
        %v780 = vld [vmem:[%s519 + $0x1c] sm:$0xf]
        %v781 = vunpack.c.l.bf16 %v773
        %v782 = vunpack.c.l.bf16 %v774
        %v783 = vunpack.c.l.bf16 %v775
        %v784 = vunpack.c.l.bf16 %v776
        %v785 = vunpack.c.l.bf16 %v777
        %v786 = vunpack.c.l.bf16 %v778
        %v787 = vunpack.c.l.bf16 %v779
        %v788 = vunpack.c.l.bf16 %v780
        %v789 = vld [vmem:[#allocation2] sm:$0xff]
        %v790 = vld [vmem:[#allocation2 + $0x8] sm:$0xff]
        %v791 = vld [vmem:[%s530] sm:$0xf]
        %v792 = vld [vmem:[%s530 + $0x4] sm:$0xf]
        %v793 = vld [vmem:[%s530 + $0x8] sm:$0xf]
        %v794 = vld [vmem:[%s530 + $0xc] sm:$0xf]
        %v795 = vld [vmem:[%s530 + $0x10] sm:$0xf]
        %v796 = vld [vmem:[%s530 + $0x14] sm:$0xf]
        %v797 = vld [vmem:[%s530 + $0x18] sm:$0xf]
        %v798 = vld [vmem:[%s530 + $0x1c] sm:$0xf]
        %v799 = vunpack.c.l.bf16 %v791
        %v800 = vunpack.c.l.bf16 %v792
        %v801 = vunpack.c.l.bf16 %v793
        %v802 = vunpack.c.l.bf16 %v794
        %v803 = vunpack.c.l.bf16 %v795
        %v804 = vunpack.c.l.bf16 %v796
        %v805 = vunpack.c.l.bf16 %v797
        %v806 = vunpack.c.l.bf16 %v798
        %v807 = vld [vmem:[%s6] sm:$0x1]
        %v809 = vperm.slane %v807, 0
        %v811 = vmul.f32 %v799, %v809
        %v812 = vmul.f32 %v800, %v809
        %v813 = vmul.f32 %v801, %v809
        %v814 = vmul.f32 %v802, %v809
        %v815 = vmul.f32 %v803, %v809
        %v816 = vmul.f32 %v804, %v809
        %v817 = vmul.f32 %v805, %v809
        %v818 = vmul.f32 %v806, %v809
        %vm819 = vcmask 130048
        %v821 = vsel %vm819, %v781, 0
        %v824 = vsel %vm819, %v782, 0
        %v827 = vsel %vm819, %v783, 0
        %v830 = vsel %vm819, %v784, 0
        %v833 = vsel %vm819, %v785, 0
        %v836 = vsel %vm819, %v786, 0
        %v839 = vsel %vm819, %v787, 0
        %v842 = vsel %vm819, %v788, 0
        %844 = vmatpush.msra.mxu0 0.0
        %845 = vmatpush.msra.mxu0 0.0
        %846 = vmatpush.msra.mxu0 0.0
        %847 = vmatpush.msra.mxu0 0.0
        %848 = vmatpush.msra.mxu0 0.0
        %849 = vmatpush.msra.mxu0 0.0
        %850 = vmatpush.msra.mxu0 0.0
        %851 = vmatpush.msra.mxu0 0.0
        %852 = vmatpush.msra.mxu0 0.0
        %853 = vmatpush.msra.mxu0 0.0
        %854 = vmatpush.msra.mxu0 0.0
        %855 = vmatpush.msra.mxu0 0.0
        %856 = vmatpush.msra.mxu0 0.0
        %857 = vmatpush.msra.mxu0 0.0
        %858 = vmatpush.msra.mxu0 %v790
        %859 = vmatpush.msra.mxu0 %v789
        %860 = vmatmul.f32.gmra.mxu0 %v821
        %v861 = vpop.f32.mrf.mxu0
        %v862 = vadd.f32 %v811, %v861
        %863 = vmatmul.f32.gmra.mxu0 %v824
        %v864 = vpop.f32.mrf.mxu0
        %v865 = vadd.f32 %v812, %v864
        %866 = vmatmul.f32.gmra.mxu0 %v827
        %v867 = vpop.f32.mrf.mxu0
        %v868 = vadd.f32 %v813, %v867
        %869 = vmatmul.f32.gmra.mxu0 %v830
        %v870 = vpop.f32.mrf.mxu0
        %v871 = vadd.f32 %v814, %v870
        %872 = vmatmul.f32.gmra.mxu0 %v833
        %v873 = vpop.f32.mrf.mxu0
        %v874 = vadd.f32 %v815, %v873
        %875 = vmatmul.f32.gmra.mxu0 %v836
        %v876 = vpop.f32.mrf.mxu0
        %v877 = vadd.f32 %v816, %v876
        %878 = vmatmul.f32.gmra.mxu0 %v839
        %v879 = vpop.f32.mrf.mxu0
        %v880 = vadd.f32 %v817, %v879
        %881 = vmatmul.f32.gmra.mxu0 %v842
        %v882 = vpop.f32.mrf.mxu0
        %v883 = vadd.f32 %v818, %v882
        %884 = vdwg.mxu0
        %vm885 = vcmask 523264
        %v886 = vsel %vm885, %v862, 0.0
        %887 = vadd.xlane.f32.xlu0 %v886
        %v888 = vpop.xlane.xlu0 %887
        %v889 = vsel %vm885, %v865, 0.0
        %890 = vadd.xlane.f32.xlu0 %v889
        %v891 = vpop.xlane.xlu0 %890
        %v892 = vsel %vm885, %v868, 0.0
        %893 = vadd.xlane.f32.xlu0 %v892
        %v894 = vpop.xlane.xlu0 %893
        %v895 = vsel %vm885, %v871, 0.0
        %896 = vadd.xlane.f32.xlu0 %v895
        %v897 = vpop.xlane.xlu0 %896
        %v898 = vsel %vm885, %v874, 0.0
        %899 = vadd.xlane.f32.xlu0 %v898
        %v900 = vpop.xlane.xlu0 %899
        %v901 = vsel %vm885, %v877, 0.0
        %902 = vadd.xlane.f32.xlu0 %v901
        %v903 = vpop.xlane.xlu0 %902
        %v904 = vsel %vm885, %v880, 0.0
        %905 = vadd.xlane.f32.xlu0 %v904
        %v906 = vpop.xlane.xlu0 %905
        %v907 = vsel %vm885, %v883, 0.0
        %908 = vadd.xlane.f32.xlu0 %v907
        %v909 = vpop.xlane.xlu0 %908
        %v910 = vrcp.pop 64.0
        %v911 = vmul.f32 64.0, %v910
        %v912 = vsub.f32 1.0, %v911
        %v913 = vmul.f32 %v910, %v912
        %v914 = vadd.f32 %v910, %v913
        %vm915 = vweird.f32 %v910
        %v916 = vsel %vm915, %v910, %v914
        %v917 = vmul.f32 %v888, %v916
        %v918 = vmul.f32 %v891, %v916
        %v919 = vmul.f32 %v894, %v916
        %v920 = vmul.f32 %v897, %v916
        %v921 = vmul.f32 %v900, %v916
        %v922 = vmul.f32 %v903, %v916
        %v923 = vmul.f32 %v906, %v916
        %v924 = vmul.f32 %v909, %v916
        %v925 = vsub.f32 %v862, %v917
        %v926 = vsub.f32 %v865, %v918
        %v927 = vsub.f32 %v868, %v919
        %v928 = vsub.f32 %v871, %v920
        %v929 = vsub.f32 %v874, %v921
        %v930 = vsub.f32 %v877, %v922
        %v931 = vsub.f32 %v880, %v923
        %v932 = vsub.f32 %v883, %v924
        %v933 = vmul.f32 %v925, %v925
        %v934 = vmul.f32 %v926, %v926
        %v935 = vmul.f32 %v927, %v927
        %v936 = vmul.f32 %v928, %v928
        %v937 = vmul.f32 %v929, %v929
        %v938 = vmul.f32 %v930, %v930
        %v939 = vmul.f32 %v931, %v931
        %v940 = vmul.f32 %v932, %v932
        %v941 = vsel %vm885, %v933, 0.0
        %942 = vadd.xlane.f32.xlu0 %v941
        %v943 = vpop.xlane.xlu0 %942
        %v944 = vsel %vm885, %v934, 0.0
        %945 = vadd.xlane.f32.xlu0 %v944
        %v946 = vpop.xlane.xlu0 %945
        %v947 = vsel %vm885, %v935, 0.0
        %948 = vadd.xlane.f32.xlu0 %v947
        %v949 = vpop.xlane.xlu0 %948
        %v950 = vsel %vm885, %v936, 0.0
        %951 = vadd.xlane.f32.xlu0 %v950
        %v952 = vpop.xlane.xlu0 %951
        %v953 = vsel %vm885, %v937, 0.0
        %954 = vadd.xlane.f32.xlu0 %v953
        %v955 = vpop.xlane.xlu0 %954
        %v956 = vsel %vm885, %v938, 0.0
        %957 = vadd.xlane.f32.xlu0 %v956
        %v958 = vpop.xlane.xlu0 %957
        %v959 = vsel %vm885, %v939, 0.0
        %960 = vadd.xlane.f32.xlu0 %v959
        %v961 = vpop.xlane.xlu0 %960
        %v962 = vsel %vm885, %v940, 0.0
        %963 = vadd.xlane.f32.xlu0 %v962
        %v964 = vpop.xlane.xlu0 %963
        %v965 = vmul.f32 %v943, %v916
        %v966 = vmul.f32 %v946, %v916
        %v967 = vmul.f32 %v949, %v916
        %v968 = vmul.f32 %v952, %v916
        %v969 = vmul.f32 %v955, %v916
        %v970 = vmul.f32 %v958, %v916
        %v971 = vmul.f32 %v961, %v916
        %v972 = vmul.f32 %v964, %v916
        %v973 = vadd.f32 %v965, 1e-05
        %v974 = vadd.f32 %v966, 1e-05
        %v975 = vadd.f32 %v967, 1e-05
        %v976 = vadd.f32 %v968, 1e-05
        %v977 = vadd.f32 %v969, 1e-05
        %v978 = vadd.f32 %v970, 1e-05
        %v979 = vadd.f32 %v971, 1e-05
        %v980 = vadd.f32 %v972, 1e-05
        %v981 = vrsqrt.pop %v973
        %v982 = vmul.f32 %v981, %v973
        %v983 = vmul.f32 %v982, %v981
        %v984 = vmul.f32 0.5, %v983
        %v985 = vsub.f32 1.5, %v984
        %v986 = vmul.f32 %v981, %v985
        %vm987 = vweird.f32 %v973
        %vm988 = vweird.f32 %v981
        %vm989 = vmor %vm987, %vm988
        %v990 = vsel %vm989, %v981, %v986
        %v991 = vrsqrt.pop %v974
        %v992 = vmul.f32 %v991, %v974
        %v993 = vmul.f32 %v992, %v991
        %v994 = vmul.f32 0.5, %v993
        %v995 = vsub.f32 1.5, %v994
        %v996 = vmul.f32 %v991, %v995
        %vm997 = vweird.f32 %v974
        %vm998 = vweird.f32 %v991
        %vm999 = vmor %vm997, %vm998
        %v1000 = vsel %vm999, %v991, %v996
        %v1001 = vrsqrt.pop %v975
        %v1002 = vmul.f32 %v1001, %v975
        %v1003 = vmul.f32 %v1002, %v1001
        %v1004 = vmul.f32 0.5, %v1003
        %v1005 = vsub.f32 1.5, %v1004
        %v1006 = vmul.f32 %v1001, %v1005
        %vm1007 = vweird.f32 %v975
        %vm1008 = vweird.f32 %v1001
        %vm1009 = vmor %vm1007, %vm1008
        %v1010 = vsel %vm1009, %v1001, %v1006
        %v1011 = vrsqrt.pop %v976
        %v1012 = vmul.f32 %v1011, %v976
        %v1013 = vmul.f32 %v1012, %v1011
        %v1014 = vmul.f32 0.5, %v1013
        %v1015 = vsub.f32 1.5, %v1014
        %v1016 = vmul.f32 %v1011, %v1015
        %vm1017 = vweird.f32 %v976
        %vm1018 = vweird.f32 %v1011
        %vm1019 = vmor %vm1017, %vm1018
        %v1020 = vsel %vm1019, %v1011, %v1016
        %v1021 = vrsqrt.pop %v977
        %v1022 = vmul.f32 %v1021, %v977
        %v1023 = vmul.f32 %v1022, %v1021
        %v1024 = vmul.f32 0.5, %v1023
        %v1025 = vsub.f32 1.5, %v1024
        %v1026 = vmul.f32 %v1021, %v1025
        %vm1027 = vweird.f32 %v977
        %vm1028 = vweird.f32 %v1021
        %vm1029 = vmor %vm1027, %vm1028
        %v1030 = vsel %vm1029, %v1021, %v1026
        %v1031 = vrsqrt.pop %v978
        %v1032 = vmul.f32 %v1031, %v978
        %v1033 = vmul.f32 %v1032, %v1031
        %v1034 = vmul.f32 0.5, %v1033
        %v1035 = vsub.f32 1.5, %v1034
        %v1036 = vmul.f32 %v1031, %v1035
        %vm1037 = vweird.f32 %v978
        %vm1038 = vweird.f32 %v1031
        %vm1039 = vmor %vm1037, %vm1038
        %v1040 = vsel %vm1039, %v1031, %v1036
        %v1041 = vrsqrt.pop %v979
        %v1042 = vmul.f32 %v1041, %v979
        %v1043 = vmul.f32 %v1042, %v1041
        %v1044 = vmul.f32 0.5, %v1043
        %v1045 = vsub.f32 1.5, %v1044
        %v1046 = vmul.f32 %v1041, %v1045
        %vm1047 = vweird.f32 %v979
        %vm1048 = vweird.f32 %v1041
        %vm1049 = vmor %vm1047, %vm1048
        %v1050 = vsel %vm1049, %v1041, %v1046
        %v1051 = vrsqrt.pop %v980
        %v1052 = vmul.f32 %v1051, %v980
        %v1053 = vmul.f32 %v1052, %v1051
        %v1054 = vmul.f32 0.5, %v1053
        %v1055 = vsub.f32 1.5, %v1054
        %v1056 = vmul.f32 %v1051, %v1055
        %vm1057 = vweird.f32 %v980
        %vm1058 = vweird.f32 %v1051
        %vm1059 = vmor %vm1057, %vm1058
        %v1060 = vsel %vm1059, %v1051, %v1056
        %v1061 = vmul.f32 %v925, %v990
        %v1062 = vmul.f32 %v926, %v1000
        %v1063 = vmul.f32 %v927, %v1010
        %v1064 = vmul.f32 %v928, %v1020
        %v1065 = vmul.f32 %v929, %v1030
        %v1066 = vmul.f32 %v930, %v1040
        %v1067 = vmul.f32 %v931, %v1050
        %v1068 = vmul.f32 %v932, %v1060
        %v1069 = vld [vmem:[%s7] sm:$0x1]
        %v1071 = vperm.slane %v1069, 0
        %v1073 = vmul.f32 %v1061, %v1071
        %v1074 = vmul.f32 %v1062, %v1071
        %v1075 = vmul.f32 %v1063, %v1071
        %v1076 = vmul.f32 %v1064, %v1071
        %v1077 = vmul.f32 %v1065, %v1071
        %v1078 = vmul.f32 %v1066, %v1071
        %v1079 = vmul.f32 %v1067, %v1071
        %v1080 = vmul.f32 %v1068, %v1071
        %v1081 = vld [vmem:[%s8] sm:$0x1]
        %v1083 = vperm.slane %v1081, 0
        %v1085 = vadd.f32 %v1073, %v1083
        %v1086 = vadd.f32 %v1074, %v1083
        %v1087 = vadd.f32 %v1075, %v1083
        %v1088 = vadd.f32 %v1076, %v1083
        %v1089 = vadd.f32 %v1077, %v1083
        %v1090 = vadd.f32 %v1078, %v1083
        %v1091 = vadd.f32 %v1079, %v1083
        %v1092 = vadd.f32 %v1080, %v1083
        %v1093 = vld [vmem:[%s555] sm:$0xf]
        %v1094 = vld [vmem:[%s555 + $0x4] sm:$0xf]
        %v1095 = vld [vmem:[%s555 + $0x8] sm:$0xf]
        %v1096 = vld [vmem:[%s555 + $0xc] sm:$0xf]
        %v1097 = vld [vmem:[%s555 + $0x10] sm:$0xf]
        %v1098 = vld [vmem:[%s555 + $0x14] sm:$0xf]
        %v1099 = vld [vmem:[%s555 + $0x18] sm:$0xf]
        %v1100 = vld [vmem:[%s555 + $0x1c] sm:$0xf]
        %v1101 = vunpack.c.l.bf16 %v1093
        %v1102 = vunpack.c.l.bf16 %v1094
        %v1103 = vunpack.c.l.bf16 %v1095
        %v1104 = vunpack.c.l.bf16 %v1096
        %v1105 = vunpack.c.l.bf16 %v1097
        %v1106 = vunpack.c.l.bf16 %v1098
        %v1107 = vunpack.c.l.bf16 %v1099
        %v1108 = vunpack.c.l.bf16 %v1100
        %v1109 = vmul.f32 %v1085, %v1101
        %v1110 = vmul.f32 %v1086, %v1102
        %v1111 = vmul.f32 %v1087, %v1103
        %v1112 = vmul.f32 %v1088, %v1104
        %v1113 = vmul.f32 %v1089, %v1105
        %v1114 = vmul.f32 %v1090, %v1106
        %v1115 = vmul.f32 %v1091, %v1107
        %v1116 = vmul.f32 %v1092, %v1108
        %v1117 = vpack.c.bf16 %v1109, %v1109
        %v1118 = vpack.c.bf16 %v1110, %v1110
        %v1119 = vpack.c.bf16 %v1111, %v1111
        %v1120 = vpack.c.bf16 %v1112, %v1112
        %v1121 = vpack.c.bf16 %v1113, %v1113
        %v1122 = vpack.c.bf16 %v1114, %v1114
        %v1123 = vpack.c.bf16 %v1115, %v1115
        %v1124 = vpack.c.bf16 %v1116, %v1116
        %vm1125 = vcmask 519168
        %1126 = vst.msk [vmem:[%s567] sm:$0xf] %vm1125, %v1117
        %1127 = vst.msk [vmem:[%s567 + $0x4] sm:$0xf] %vm1125, %v1118
        %1128 = vst.msk [vmem:[%s567 + $0x8] sm:$0xf] %vm1125, %v1119
        %1129 = vst.msk [vmem:[%s567 + $0xc] sm:$0xf] %vm1125, %v1120
        %1130 = vst.msk [vmem:[%s567 + $0x10] sm:$0xf] %vm1125, %v1121
        %1131 = vst.msk [vmem:[%s567 + $0x14] sm:$0xf] %vm1125, %v1122
        %1132 = vst.msk [vmem:[%s567 + $0x18] sm:$0xf] %vm1125, %v1123
        %1133 = vst.msk [vmem:[%s567 + $0x1c] sm:$0xf] %vm1125, %v1124
      $region68: #{mamba2_forward.16} parent=55 // pred_fallthru
        _
      %s1134 = smul.u32 %s27, %s26
      %s1135 = smul.u32 8, %s1134
      %p1136 = scmp.lt.s32.totalorder %s25, 1
      %s1137 = scalar_select %p1136, %s25, 1
      %p1138 = scmp.lt.s32.totalorder %s1135, 7
      %s1139 = scalar_select %p1138, %s1135, 7
      %s1140 = smul.addr %s1137, 8
      %s1141 = sadd.s32 %s1139, %s1140
      %s1142 = smul.addr %s1141, 4
      %s1143 = scalar_lea.vmem %s9, %s1142
      // Predicated region
      $region69: #{mamba2_forward.16} parent=55 // pred_check
        %p1144 = pneg %p297
      $region70: #{mamba2_forward.16} parent=55 // pred_check_branch
        %1146 = sbr.rel (%p1144) target = $region72
      $region71: #{mamba2_forward.16} parent=55 // pred_region
        %s1147 = smul.u32 %s27, %s26
        %s1148 = smul.u32 8, %s1147
      $region72: #{mamba2_forward.16} parent=55 // pred_fallthru
        _
    $region56: #{mamba2_forward.16} parent=5 // pred_fallthru
      _
    %p1149 = scmp.le.s32.totalorder 2, %s15
    // Predicated region
    $region73: #{mamba2_forward.16} parent=5 // pred_check
      %p1150 = pneg %p1149
    $region74: #{mamba2_forward.16} parent=5 // pred_check_branch
      %1152 = sbr.rel (%p1150) target = $region76
    $region75: #{mamba2_forward.16} parent=5 // pred_region
      %s1153 = ssub.s32 %s15, 2
      // Predicated region
      $region77: #{mamba2_forward.16} parent=75 // pred_check
        %p1154 = pneg %p303
      $region78: #{mamba2_forward.16} parent=75 // pred_check_branch
        %1156 = sbr.rel (%p1154) target = $region80
      $region79: #{mamba2_forward.16} parent=75 // pred_region
        %s1157 = smul.u32 %s30, %s29
        %s1158 = smul.u32 8, %s1157
        %p1159 = scmp.lt.s32.totalorder %s28, 1
        %s1160 = scalar_select %p1159, %s28, 1
        %p1161 = scmp.lt.s32.totalorder %s1158, 7
        %s1162 = scalar_select %p1161, %s1158, 7
        %s1163 = smul.addr %s1160, 8
        %s1164 = sadd.s32 %s1162, %s1163
        %s1165 = smul.addr %s1164, 4
        %s1166 = scalar_lea.vmem %s9, %s1165
      $region80: #{mamba2_forward.16} parent=75 // pred_fallthru
        _
    $region76: #{mamba2_forward.16} parent=5 // pred_fallthru
      _
  $region6: #{mamba2_forward.16} parent=0 // loop_footer
    %s19 = sadd.s32 1, %s15
  $region7: #{mamba2_forward.16} parent=0 // loop_footer_branch
    %14 = sbr.rel target = $region3
  $region8: #{mamba2_forward.16} parent=0 // loop_exit
    _

// kernel: mamba2_forward.17
$region0: #{mamba2_forward.17}
  #allocation0 [shape = 'u32[]', space=smem, size = 0x4, offset = 0x4, fixed_abs, tag = 'smem constant byte address 0x4 - core index']
  #allocation1 [shape = 'u32[72,128]{1,0:T(1,128)}', space=vmem, size = 0x9000, scoped, tag = 'internal scratch']
  #allocation2 [shape = 'f32[128,32]{1,0:T(8,128)}', space=vmem, size = 0x10000, scoped, tag = 'scratch operand']
  %s0 = inlined_call_operand.vmem [shape: bf16[128,64], index: 0, kind: input, shape index: {}]
  %s1 = inlined_call_operand.vmem [shape: bf16[64,32], index: 1, kind: input, shape index: {}]
  %s2 = inlined_call_operand.vmem [shape: f32[128,32], index: 2, kind: output, shape index: {}]
  %s3 = sld [smem:[#allocation0]]
  $region26: #{mamba2_forward.17} parent=0
    _
  %s5 = ssub.s32 1, %s3
  %s6 = scalar_select 0, %s5, %s3
  // Predicated region
  $region2: #{mamba2_forward.17} parent=0 // pred_check
    _
  $region3: #{mamba2_forward.17} parent=0 // pred_check_branch
    %8 = sbr.rel (0) target = $region5
  $region4: #{mamba2_forward.17} parent=0 // pred_region
    _
  $region5: #{mamba2_forward.17} parent=0 // pred_fallthru
    _
  // Predicated region
  $region6: #{mamba2_forward.17} parent=0 // pred_check
    _
  $region7: #{mamba2_forward.17} parent=0 // pred_check_branch
    %10 = sbr.rel (0) target = $region9
  $region8: #{mamba2_forward.17} parent=0 // pred_region
    _
  $region9: #{mamba2_forward.17} parent=0 // pred_fallthru
    _
  %p12 = scmp.eq.s32.totalorder 0, 0
  // Predicated region
  $region10: #{mamba2_forward.17} parent=0 // pred_check
    %p13 = pneg %p12
  $region11: #{mamba2_forward.17} parent=0 // pred_check_branch
    %15 = sbr.rel (%p13) target = $region13
  $region12: #{mamba2_forward.17} parent=0 // pred_region
    %vm16 = vcmask 261120
    %17 = vst.msk [vmem:[#allocation2] sm:$0xff] %vm16, 0.0
    %18 = vst.msk [vmem:[#allocation2 + $0x8] sm:$0xff] %vm16, 0.0
    %19 = vst.msk [vmem:[#allocation2 + $0x10] sm:$0xff] %vm16, 0.0
    %20 = vst.msk [vmem:[#allocation2 + $0x18] sm:$0xff] %vm16, 0.0
    %21 = vst.msk [vmem:[#allocation2 + $0x20] sm:$0xff] %vm16, 0.0
    %22 = vst.msk [vmem:[#allocation2 + $0x28] sm:$0xff] %vm16, 0.0
    %23 = vst.msk [vmem:[#allocation2 + $0x30] sm:$0xff] %vm16, 0.0
    %24 = vst.msk [vmem:[#allocation2 + $0x38] sm:$0xff] %vm16, 0.0
    %25 = vst.msk [vmem:[#allocation2 + $0x40] sm:$0xff] %vm16, 0.0
    %26 = vst.msk [vmem:[#allocation2 + $0x48] sm:$0xff] %vm16, 0.0
    %27 = vst.msk [vmem:[#allocation2 + $0x50] sm:$0xff] %vm16, 0.0
    %28 = vst.msk [vmem:[#allocation2 + $0x58] sm:$0xff] %vm16, 0.0
    %29 = vst.msk [vmem:[#allocation2 + $0x60] sm:$0xff] %vm16, 0.0
    %30 = vst.msk [vmem:[#allocation2 + $0x68] sm:$0xff] %vm16, 0.0
    %31 = vst.msk [vmem:[#allocation2 + $0x70] sm:$0xff] %vm16, 0.0
    %32 = vst.msk [vmem:[#allocation2 + $0x78] sm:$0xff] %vm16, 0.0
  $region13: #{mamba2_forward.17} parent=0 // pred_fallthru
    _
  %v33 = vld [vmem:[#allocation2] sm:$0xff]
  %v34 = vld [vmem:[#allocation2 + $0x8] sm:$0xff]
  %v35 = vld [vmem:[#allocation2 + $0x10] sm:$0xff]
  %v36 = vld [vmem:[#allocation2 + $0x18] sm:$0xff]
  %v37 = vld [vmem:[#allocation2 + $0x20] sm:$0xff]
  %v38 = vld [vmem:[#allocation2 + $0x28] sm:$0xff]
  %v39 = vld [vmem:[#allocation2 + $0x30] sm:$0xff]
  %v40 = vld [vmem:[#allocation2 + $0x38] sm:$0xff]
  %v41 = vld [vmem:[#allocation2 + $0x40] sm:$0xff]
  %v42 = vld [vmem:[#allocation2 + $0x48] sm:$0xff]
  %v43 = vld [vmem:[#allocation2 + $0x50] sm:$0xff]
  %v44 = vld [vmem:[#allocation2 + $0x58] sm:$0xff]
  %v45 = vld [vmem:[#allocation2 + $0x60] sm:$0xff]
  %v46 = vld [vmem:[#allocation2 + $0x68] sm:$0xff]
  %v47 = vld [vmem:[#allocation2 + $0x70] sm:$0xff]
  %v48 = vld [vmem:[#allocation2 + $0x78] sm:$0xff]
  %v49 = vld [vmem:[%s0] sm:$0xf]
  %v50 = vld [vmem:[%s0 + $0x4] sm:$0xf]
  %v51 = vld [vmem:[%s0 + $0x8] sm:$0xf]
  %v52 = vld [vmem:[%s0 + $0xc] sm:$0xf]
  %v53 = vld [vmem:[%s0 + $0x10] sm:$0xf]
  %v54 = vld [vmem:[%s0 + $0x14] sm:$0xf]
  %v55 = vld [vmem:[%s0 + $0x18] sm:$0xf]
  %v56 = vld [vmem:[%s0 + $0x1c] sm:$0xf]
  %v57 = vld [vmem:[%s0 + $0x20] sm:$0xf]
  %v58 = vld [vmem:[%s0 + $0x24] sm:$0xf]
  %v59 = vld [vmem:[%s0 + $0x28] sm:$0xf]
  %v60 = vld [vmem:[%s0 + $0x2c] sm:$0xf]
  %v61 = vld [vmem:[%s0 + $0x30] sm:$0xf]
  %v62 = vld [vmem:[%s0 + $0x34] sm:$0xf]
  %v63 = vld [vmem:[%s0 + $0x38] sm:$0xf]
  %v64 = vld [vmem:[%s0 + $0x3c] sm:$0xf]
  %v65 = vld [vmem:[%s1] sm:$0xf]
  %v66 = vld [vmem:[%s1 + $0x4] sm:$0xf]
  %v67 = vld [vmem:[%s1 + $0x8] sm:$0xf]
  %v68 = vld [vmem:[%s1 + $0xc] sm:$0xf]
  %v69 = vld [vmem:[%s1 + $0x10] sm:$0xf]
  %v70 = vld [vmem:[%s1 + $0x14] sm:$0xf]
  %v71 = vld [vmem:[%s1 + $0x18] sm:$0xf]
  %v72 = vld [vmem:[%s1 + $0x1c] sm:$0xf]
  %v89 = vunpack.c.l.b16 %v49
  %v90 = vunpack.c.l.b16 %v50
  %v91 = vunpack.c.l.b16 %v51
  %v92 = vunpack.c.l.b16 %v52
  %v93 = vunpack.c.l.b16 %v53
  %v94 = vunpack.c.l.b16 %v54
  %v95 = vunpack.c.l.b16 %v55
  %v96 = vunpack.c.l.b16 %v56
  %v97 = vunpack.c.l.b16 %v57
  %v98 = vunpack.c.l.b16 %v58
  %v99 = vunpack.c.l.b16 %v59
  %v100 = vunpack.c.l.b16 %v60
  %v101 = vunpack.c.l.b16 %v61
  %v102 = vunpack.c.l.b16 %v62
  %v103 = vunpack.c.l.b16 %v63
  %v104 = vunpack.c.l.b16 %v64
  %v105 = vpack.c.b16 %v90, %v89
  %v106 = vpack.c.b16 %v92, %v91
  %v107 = vpack.c.b16 %v94, %v93
  %v108 = vpack.c.b16 %v96, %v95
  %v109 = vpack.c.b16 %v98, %v97
  %v110 = vpack.c.b16 %v100, %v99
  %v111 = vpack.c.b16 %v102, %v101
  %v112 = vpack.c.b16 %v104, %v103
  %v121 = vunpack.c.l.b16 %v65
  %v122 = vunpack.c.l.b16 %v66
  %v123 = vunpack.c.l.b16 %v67
  %v124 = vunpack.c.l.b16 %v68
  %v125 = vunpack.c.l.b16 %v69
  %v126 = vunpack.c.l.b16 %v70
  %v127 = vunpack.c.l.b16 %v71
  %v128 = vunpack.c.l.b16 %v72
  %v129 = vpack.c.b16 %v122, %v121
  %v130 = vpack.c.b16 %v124, %v123
  %v131 = vpack.c.b16 %v126, %v125
  %v132 = vpack.c.b16 %v128, %v127
  %vm137 = vcmask 523264
  %v139 = vsel %vm137, %v105, 0
  %v142 = vsel %vm137, %v106, 0
  %v145 = vsel %vm137, %v107, 0
  %v148 = vsel %vm137, %v108, 0
  %v151 = vsel %vm137, %v109, 0
  %v154 = vsel %vm137, %v110, 0
  %v157 = vsel %vm137, %v111, 0
  %v160 = vsel %vm137, %v112, 0
  %162 = vmatpush.bf16.msra.mxu0 0
  %163 = vmatpush.bf16.msra.mxu0 0
  %164 = vmatpush.bf16.msra.mxu0 0
  %165 = vmatpush.bf16.msra.mxu0 0
  %166 = vmatpush.bf16.msra.mxu0 %v132
  %167 = vmatpush.bf16.msra.mxu0 %v131
  %168 = vmatpush.bf16.msra.mxu0 %v130
  %169 = vmatpush.bf16.msra.mxu0 %v129
  %170 = vmatmul.bf16.gmra.mxu0 %v139
  %v171 = vpop.f32.mrf.mxu0
  %v172 = vadd.f32 0.0, %v171
  %v173 = vpop.f32.mrf.mxu0
  %v174 = vadd.f32 0.0, %v173
  %175 = vmatmul.bf16.gmra.mxu0 %v142
  %v176 = vpop.f32.mrf.mxu0
  %v177 = vadd.f32 0.0, %v176
  %v178 = vpop.f32.mrf.mxu0
  %v179 = vadd.f32 0.0, %v178
  %180 = vmatmul.bf16.gmra.mxu0 %v145
  %v181 = vpop.f32.mrf.mxu0
  %v182 = vadd.f32 0.0, %v181
  %v183 = vpop.f32.mrf.mxu0
  %v184 = vadd.f32 0.0, %v183
  %185 = vmatmul.bf16.gmra.mxu0 %v148
  %v186 = vpop.f32.mrf.mxu0
  %v187 = vadd.f32 0.0, %v186
  %v188 = vpop.f32.mrf.mxu0
  %v189 = vadd.f32 0.0, %v188
  %190 = vmatmul.bf16.gmra.mxu0 %v151
  %v191 = vpop.f32.mrf.mxu0
  %v192 = vadd.f32 0.0, %v191
  %v193 = vpop.f32.mrf.mxu0
  %v194 = vadd.f32 0.0, %v193
  %195 = vmatmul.bf16.gmra.mxu0 %v154
  %v196 = vpop.f32.mrf.mxu0
  %v197 = vadd.f32 0.0, %v196
  %v198 = vpop.f32.mrf.mxu0
  %v199 = vadd.f32 0.0, %v198
  %200 = vmatmul.bf16.gmra.mxu0 %v157
  %v201 = vpop.f32.mrf.mxu0
  %v202 = vadd.f32 0.0, %v201
  %v203 = vpop.f32.mrf.mxu0
  %v204 = vadd.f32 0.0, %v203
  %205 = vmatmul.bf16.gmra.mxu0 %v160
  %v206 = vpop.f32.mrf.mxu0
  %v207 = vadd.f32 0.0, %v206
  %v208 = vpop.f32.mrf.mxu0
  %v209 = vadd.f32 0.0, %v208
  %210 = vdwg.mxu0
  %v211 = vadd.f32 %v33, %v172
  %v212 = vadd.f32 %v34, %v174
  %v213 = vadd.f32 %v35, %v177
  %v214 = vadd.f32 %v36, %v179
  %v215 = vadd.f32 %v37, %v182
  %v216 = vadd.f32 %v38, %v184
  %v217 = vadd.f32 %v39, %v187
  %v218 = vadd.f32 %v40, %v189
  %v219 = vadd.f32 %v41, %v192
  %v220 = vadd.f32 %v42, %v194
  %v221 = vadd.f32 %v43, %v197
  %v222 = vadd.f32 %v44, %v199
  %v223 = vadd.f32 %v45, %v202
  %v224 = vadd.f32 %v46, %v204
  %v225 = vadd.f32 %v47, %v207
  %v226 = vadd.f32 %v48, %v209
  %vm227 = vcmask 261120
  %228 = vst.msk [vmem:[#allocation2] sm:$0xff] %vm227, %v211
  %229 = vst.msk [vmem:[#allocation2 + $0x8] sm:$0xff] %vm227, %v212
  %230 = vst.msk [vmem:[#allocation2 + $0x10] sm:$0xff] %vm227, %v213
  %231 = vst.msk [vmem:[#allocation2 + $0x18] sm:$0xff] %vm227, %v214
  %232 = vst.msk [vmem:[#allocation2 + $0x20] sm:$0xff] %vm227, %v215
  %233 = vst.msk [vmem:[#allocation2 + $0x28] sm:$0xff] %vm227, %v216
  %234 = vst.msk [vmem:[#allocation2 + $0x30] sm:$0xff] %vm227, %v217
  %235 = vst.msk [vmem:[#allocation2 + $0x38] sm:$0xff] %vm227, %v218
  %236 = vst.msk [vmem:[#allocation2 + $0x40] sm:$0xff] %vm227, %v219
  %237 = vst.msk [vmem:[#allocation2 + $0x48] sm:$0xff] %vm227, %v220
  %238 = vst.msk [vmem:[#allocation2 + $0x50] sm:$0xff] %vm227, %v221
  %239 = vst.msk [vmem:[#allocation2 + $0x58] sm:$0xff] %vm227, %v222
  %240 = vst.msk [vmem:[#allocation2 + $0x60] sm:$0xff] %vm227, %v223
  %241 = vst.msk [vmem:[#allocation2 + $0x68] sm:$0xff] %vm227, %v224
  %242 = vst.msk [vmem:[#allocation2 + $0x70] sm:$0xff] %vm227, %v225
  %243 = vst.msk [vmem:[#allocation2 + $0x78] sm:$0xff] %vm227, %v226
  // Predicated region
  $region14: #{mamba2_forward.17} parent=0 // pred_check
    %p244 = pneg %p12
  $region15: #{mamba2_forward.17} parent=0 // pred_check_branch
    %246 = sbr.rel (%p244) target = $region17
  $region16: #{mamba2_forward.17} parent=0 // pred_region
    %v247 = vld [vmem:[#allocation2] sm:$0xff]
    %v248 = vld [vmem:[#allocation2 + $0x8] sm:$0xff]
    %v249 = vld [vmem:[#allocation2 + $0x10] sm:$0xff]
    %v250 = vld [vmem:[#allocation2 + $0x18] sm:$0xff]
    %v251 = vld [vmem:[#allocation2 + $0x20] sm:$0xff]
    %v252 = vld [vmem:[#allocation2 + $0x28] sm:$0xff]
    %v253 = vld [vmem:[#allocation2 + $0x30] sm:$0xff]
    %v254 = vld [vmem:[#allocation2 + $0x38] sm:$0xff]
    %v255 = vld [vmem:[#allocation2 + $0x40] sm:$0xff]
    %v256 = vld [vmem:[#allocation2 + $0x48] sm:$0xff]
    %v257 = vld [vmem:[#allocation2 + $0x50] sm:$0xff]
    %v258 = vld [vmem:[#allocation2 + $0x58] sm:$0xff]
    %v259 = vld [vmem:[#allocation2 + $0x60] sm:$0xff]
    %v260 = vld [vmem:[#allocation2 + $0x68] sm:$0xff]
    %v261 = vld [vmem:[#allocation2 + $0x70] sm:$0xff]
    %v262 = vld [vmem:[#allocation2 + $0x78] sm:$0xff]
    %263 = vst.msk [vmem:[%s2] sm:$0xff] %vm227, %v247
    %264 = vst.msk [vmem:[%s2 + $0x8] sm:$0xff] %vm227, %v248
    %265 = vst.msk [vmem:[%s2 + $0x10] sm:$0xff] %vm227, %v249
    %266 = vst.msk [vmem:[%s2 + $0x18] sm:$0xff] %vm227, %v250
    %267 = vst.msk [vmem:[%s2 + $0x20] sm:$0xff] %vm227, %v251
    %268 = vst.msk [vmem:[%s2 + $0x28] sm:$0xff] %vm227, %v252
    %269 = vst.msk [vmem:[%s2 + $0x30] sm:$0xff] %vm227, %v253
    %270 = vst.msk [vmem:[%s2 + $0x38] sm:$0xff] %vm227, %v254
    %271 = vst.msk [vmem:[%s2 + $0x40] sm:$0xff] %vm227, %v255
    %272 = vst.msk [vmem:[%s2 + $0x48] sm:$0xff] %vm227, %v256
    %273 = vst.msk [vmem:[%s2 + $0x50] sm:$0xff] %vm227, %v257
    %274 = vst.msk [vmem:[%s2 + $0x58] sm:$0xff] %vm227, %v258
    %275 = vst.msk [vmem:[%s2 + $0x60] sm:$0xff] %vm227, %v259
    %276 = vst.msk [vmem:[%s2 + $0x68] sm:$0xff] %vm227, %v260
    %277 = vst.msk [vmem:[%s2 + $0x70] sm:$0xff] %vm227, %v261
    %278 = vst.msk [vmem:[%s2 + $0x78] sm:$0xff] %vm227, %v262
  $region17: #{mamba2_forward.17} parent=0 // pred_fallthru
    _
  // Predicated region
  $region18: #{mamba2_forward.17} parent=0 // pred_check
    _
  $region19: #{mamba2_forward.17} parent=0 // pred_check_branch
    %280 = sbr.rel (0) target = $region21
  $region20: #{mamba2_forward.17} parent=0 // pred_region
    _
  $region21: #{mamba2_forward.17} parent=0 // pred_fallthru
    _
  // Predicated region
  $region22: #{mamba2_forward.17} parent=0 // pred_check
    _
  $region23: #{mamba2_forward.17} parent=0 // pred_check_branch
    %282 = sbr.rel (0) target = $region25
  $region24: #{mamba2_forward.17} parent=0 // pred_region
    _
  $region25: #{mamba2_forward.17} parent=0 // pred_fallthru
    _

</llo_original>
